<compile_context>
chip_gen: v7x
topology: tpu7x:2x2x1
jax: 0.10.0
libtpu: 0.0.40
codegen_flags: <defaults>
</compile_context>

<pallas_src>
import functools

import numpy as np
import jax
import jax.numpy as jnp
from jax.experimental import pallas as pl
from jax.experimental.pallas import tpu as pltpu


# --------------------------------------------------------------------------- #
# Kernel
# --------------------------------------------------------------------------- #
def _up_kernel(x_ref, skip_ref, m_ref, mask_ref, w1_ref, b1_ref, w2_ref, b2_ref,
               o_ref, *, H, W, C_in, C_skip, C_out, nb):
    """Fused per-grid-step body: for each of `nb` images
         upsample (1 matmul) -> concat -> conv3x3+ReLU -> conv3x3+ReLU.

    Shapes inside the kernel (channel-major, spatial flattened into lanes):
      x_ref    : (nb, C_in,  Hi*Wi)
      skip_ref : (nb, C_skip, H*W)
      m_ref    : (Hi*Wi, H*W)        bilinear interpolation matrix (kron, per image)
      mask_ref : (9, H*W)            0/1 border-validity per 3x3 tap (trace-time consts)
      w1_ref   : (9, C_out, C_in+C_skip)   per-tap conv1 weights
      w2_ref   : (9, C_out, C_out)         per-tap conv2 weights
      b*_ref   : (C_out, 1)
      o_ref    : (nb, C_out, H*W)    lane-dense output (H*W multiple of 128)
    """
    HW = H * W
    C_cat = C_in + C_skip

    # Static tap table: (tap index, lane shift, needs-border-mask).
    taps = []
    for kh in range(3):
        for kw in range(3):
            dh, dw = kh - 1, kw - 1
            shift = (-(dh * W + dw)) % HW          # result[p] = x[p + dh*W + dw]
            taps.append((kh * 3 + kw, shift, not (dh == 0 and dw == 0)))

    # Hoist the border masks once (already 0/1 constants), broadcast to the max
    # channel count so one set serves both convs and every image in this step.
    C_big = max(C_cat, C_out)
    masks_all = mask_ref[...]                                         # (9, HW)
    mask_b = {t: jnp.broadcast_to(masks_all[t:t + 1, :], (C_big, HW))
              for (t, _, need) in taps if need}

    def conv3x3_relu(x2d, w_ref, b_ref):
        # x2d: (C, HW). Per-tap accumulation: 9 small MXU matmuls into (C_out, HW).
        c_rows = x2d.shape[0]
        acc = jnp.broadcast_to(b_ref[...], (b_ref.shape[0], HW))      # start from bias
        for t, shift, need in taps:
            shifted = pltpu.roll(x2d, shift=shift, axis=1) if shift else x2d
            if need:
                shifted = shifted * mask_b[t][:c_rows]
            acc = acc + jnp.dot(w_ref[t], shifted,
                                preferred_element_type=jnp.float32)
        return jnp.maximum(acc, 0.0)                                  # (C_out, HW)

    m = m_ref[...]                                                    # (Hi*Wi, HW)
    for n in range(nb):                                               # static unroll
        # Bilinear x2 upsample (align_corners=True) as one MXU matmul.
        up = jnp.dot(x_ref[n], m, preferred_element_type=jnp.float32)  # (C_in, HW)
        # torch.cat([upsampled, skip], dim=1)
        cat = jnp.concatenate([up, skip_ref[n].astype(jnp.float32)], axis=0)
        h1 = conv3x3_relu(cat, w1_ref, b1_ref)
        h2 = conv3x3_relu(h1, w2_ref, b2_ref)
        o_ref[n] = h2.astype(o_ref.dtype)


# --------------------------------------------------------------------------- #
# One-time parameter / constant preparation (hoisted off the forward hot path)
# --------------------------------------------------------------------------- #
def _bilinear_matrix(n_in, n_out):
    """Interpolation matrix (n_out, n_in) for bilinear, align_corners=True."""
    if n_in == 1:
        return np.ones((n_out, 1), np.float32)
    src = np.arange(n_out, dtype=np.float64) * (n_in - 1) / (n_out - 1)
    i0 = np.clip(np.floor(src).astype(np.int64), 0, n_in - 1)
    i1 = np.clip(i0 + 1, 0, n_in - 1)
    frac = src - i0
    M = np.zeros((n_out, n_in), np.float64)
    M[np.arange(n_out), i0] += 1.0 - frac
    M[np.arange(n_out), i1] += frac
    return M.astype(np.float32)


def _border_masks(H, W):
    """(9, H*W) 0/1 validity masks for the 3x3 taps (trace-time numpy constants)."""
    h = np.repeat(np.arange(H), W)
    w = np.tile(np.arange(W), H)
    rows = []
    for kh in range(3):
        for kw in range(3):
            dh, dw = kh - 1, kw - 1
            valid = ((h + dh >= 0) & (h + dh < H) & (w + dw >= 0) & (w + dw < W))
            rows.append(valid.astype(np.float32))
    return np.stack(rows, 0)


def prepare_up_params(w1, b1, w2, b2, in_spatial):
    """Pack PyTorch-layout parameters + precomputed constants for up_forward()."""
    Hi, Wi = in_spatial
    Ho, Wo = 2 * Hi, 2 * Wi
    C_out, C_cat = w1.shape[0], w1.shape[1]

    # Combined bilinear interpolation matrix: M[h*Wi+w, p*Wo+q] = Uh[p,h]*Uw[q,w]
    Uh = _bilinear_matrix(Hi, Ho)                                   # (Ho, Hi)
    Uw = _bilinear_matrix(Wi, Wo)                                   # (Wo, Wi)
    M = np.einsum('ph,qw->hwpq', Uh, Uw).reshape(Hi * Wi, Ho * Wo).astype(np.float32)

    return dict(
        M=jnp.asarray(M),
        masks=jnp.asarray(_border_masks(Ho, Wo)),                   # (9, Ho*Wo)
        w1=jnp.transpose(w1, (2, 3, 0, 1)).reshape(9, C_out, C_cat),
        b1=b1.reshape(C_out, 1).astype(jnp.float32),
        w2=jnp.transpose(w2, (2, 3, 0, 1)).reshape(9, C_out, w2.shape[1]),
        b2=b2.reshape(C_out, 1).astype(jnp.float32),
    )


# --------------------------------------------------------------------------- #
# Forward wrapper
# --------------------------------------------------------------------------- #
def up_forward(x_nchw, skip_nchw, params, *, images_per_step=None):
    """Mirrors Up.forward: upsample(x) -> cat([x, skip], C) -> DoubleConv2d."""
    N, C_in, Hi, Wi = x_nchw.shape
    Ns, C_skip, Ho, Wo = skip_nchw.shape
    assert Ns == N and Ho == 2 * Hi and Wo == 2 * Wi
    C_cat = C_in + C_skip
    C_out = params["w1"].shape[1]
    HW_in, HW_out = Hi * Wi, Ho * Wo

    # Default: fuse the whole batch into one grid step (v5e/v6e have 1 TensorCore,
    # so grid steps are a serial loop with ~0.35us each of pure overhead here).
    nb = N if images_per_step is None else int(images_per_step)
    assert N % nb == 0, "images_per_step must divide the batch"
    grid = (N // nb,)

    # Free, contiguous reshapes (no transposes): NCHW -> (N, C, H*W)
    x_flat = x_nchw.reshape(N, C_in, HW_in)
    skip_flat = skip_nchw.reshape(N, C_skip, HW_out)

    kernel = functools.partial(_up_kernel, H=Ho, W=Wo,
                               C_in=C_in, C_skip=C_skip, C_out=C_out, nb=nb)

    out_flat = pl.pallas_call(
        kernel,
        out_shape=jax.ShapeDtypeStruct((N, C_out, HW_out), jnp.float32),
        grid_spec=pltpu.PrefetchScalarGridSpec(
            num_scalar_prefetch=0,
            grid=grid,
            in_specs=[
                pl.BlockSpec((nb, C_in, HW_in), lambda i: (i, 0, 0)),
                pl.BlockSpec((nb, C_skip, HW_out), lambda i: (i, 0, 0)),
                pl.BlockSpec((HW_in, HW_out), lambda i: (0, 0)),
                pl.BlockSpec((9, HW_out), lambda i: (0, 0)),
                pl.BlockSpec((9, C_out, C_cat), lambda i: (0, 0, 0)),
                pl.BlockSpec((C_out, 1), lambda i: (0, 0)),
                pl.BlockSpec((9, C_out, C_out), lambda i: (0, 0, 0)),
                pl.BlockSpec((C_out, 1), lambda i: (0, 0)),
            ],
            out_specs=pl.BlockSpec((nb, C_out, HW_out), lambda i: (i, 0, 0)),
        ),
        compiler_params=pltpu.CompilerParams(
            dimension_semantics=("parallel",)),
    )(x_flat, skip_flat, params["M"], params["masks"],
      params["w1"], params["b1"], params["w2"], params["b2"])

    # Free contiguous reshape back to NCHW.
    return out_flat.reshape(N, C_out, Ho, Wo)


# --------------------------------------------------------------------------- #
# Pure-JAX reference (numerical sanity check)
# --------------------------------------------------------------------------- #
def _reference(x, skip, w1, b1, w2, b2):
    N, C_in, Hi, Wi = x.shape
    Ho, Wo = 2 * Hi, 2 * Wi
    Uh = jnp.asarray(_bilinear_matrix(Hi, Ho))
    Uw = jnp.asarray(_bilinear_matrix(Wi, Wo))
    hi = jax.lax.Precision.HIGHEST
    up = jnp.einsum('ph,nchw->ncpw', Uh, x, precision=hi)
    up = jnp.einsum('qw,ncpw->ncpq', Uw, up, precision=hi)
    cat = jnp.concatenate([up, skip], axis=1)

    def conv_relu(h, w, b):
        y = jax.lax.conv_general_dilated(
            h, w, window_strides=(1, 1), padding=((1, 1), (1, 1)),
            dimension_numbers=('NCHW', 'OIHW', 'NCHW'), precision=hi)
        return jnp.maximum(y + b.reshape(1, -1, 1, 1), 0.0)

    return conv_relu(conv_relu(cat, w1, b1), w2, b2)


# --------------------------------------------------------------------------- #
if __name__ == "__main__":
    key = jax.random.PRNGKey(0)
    k = jax.random.split(key, 6)

    # Up(in_channels=4, out_channels=8, skip_channels=4)
    N, C_in, C_skip, C_out = 2, 4, 4, 8
    Hi = Wi = 8                                    # skip / output spatial = 16x16
    C_cat = C_in + C_skip

    x = jax.random.normal(k[0], (N, C_in, Hi, Wi), jnp.float32)
    skip = jax.random.normal(k[1], (N, C_skip, 2 * Hi, 2 * Wi), jnp.float32)

    # PyTorch-layout conv parameters.
    w1 = jax.random.normal(k[2], (C_out, C_cat, 3, 3), jnp.float32) * 0.1
    b1 = jax.random.normal(k[3], (C_out,), jnp.float32) * 0.1
    w2 = jax.random.normal(k[4], (C_out, C_out, 3, 3), jnp.float32) * 0.1
    b2 = jax.random.normal(k[5], (C_out,), jnp.float32) * 0.1

    # One-time parameter prep (hoisted off the per-call hot path).
    params = prepare_up_params(w1, b1, w2, b2, in_spatial=(Hi, Wi))

    out = jax.jit(up_forward)(x, skip, params)
    out = jax.block_until_ready(out)
    assert out.shape == (N, C_out, 2 * Hi, 2 * Wi), out.shape
    assert out.dtype == jnp.float32

    ref = jax.block_until_ready(_reference(x, skip, w1, b1, w2, b2))
    err = float(jnp.max(jnp.abs(out - ref)))
    assert err < 1e-2, f"max abs error vs reference: {err}"

    print("KERNEL_OK")
</pallas_src>

<mosaic_0001>
module attributes {stable_mosaic.version = 11 : i64} {
  func.func @_up_kernel(%arg0: i32, %arg1: memref<2x4x64xf32, #tpu.memory_space<vmem>>, %arg2: memref<2x4x256xf32, #tpu.memory_space<vmem>>, %arg3: memref<64x256xf32, #tpu.memory_space<vmem>>, %arg4: memref<9x256xf32, #tpu.memory_space<vmem>>, %arg5: memref<9x8x8xf32, #tpu.memory_space<vmem>>, %arg6: memref<8x1xf32, #tpu.memory_space<vmem>>, %arg7: memref<9x8x8xf32, #tpu.memory_space<vmem>>, %arg8: memref<8x1xf32, #tpu.memory_space<vmem>>, %arg9: memref<2x8x256xf32, #tpu.memory_space<vmem>>) attributes {dimension_semantics = [#tpu.dimension_semantics<parallel>], iteration_bounds = array<i64: 1>, scalar_prefetch = 0 : i64, scratch_operands = 0 : i64, tpu.core_type = #tpu.core_type<tc>, window_params = [{transform_indices = @transform_0, window_bounds = array<i64: 2, 4, 64>}, {transform_indices = @transform_1, window_bounds = array<i64: 2, 4, 256>}, {pipeline_mode = #tpu.pipeline_mode<synchronous>, transform_indices = @transform_2, window_bounds = array<i64: 64, 256>}, {pipeline_mode = #tpu.pipeline_mode<synchronous>, transform_indices = @transform_3, window_bounds = array<i64: 9, 256>}, {pipeline_mode = #tpu.pipeline_mode<synchronous>, transform_indices = @transform_4, window_bounds = array<i64: 9, 8, 8>}, {pipeline_mode = #tpu.pipeline_mode<synchronous>, transform_indices = @transform_5, window_bounds = array<i64: 8, 1>}, {pipeline_mode = #tpu.pipeline_mode<synchronous>, transform_indices = @transform_6, window_bounds = array<i64: 9, 8, 8>}, {pipeline_mode = #tpu.pipeline_mode<synchronous>, transform_indices = @transform_7, window_bounds = array<i64: 8, 1>}, {transform_indices = @transform_8, window_bounds = array<i64: 2, 8, 256>}]} {
    %c0 = arith.constant 0 : index
    %c0_0 = arith.constant 0 : index
    %0 = vector.load %arg4[%c0, %c0_0] : memref<9x256xf32, #tpu.memory_space<vmem>>, vector<9x256xf32>
    %1 = vector.extract_strided_slice %0 {offsets = [0, 0], sizes = [1, 256], strides = [1, 1]} : vector<9x256xf32> to vector<1x256xf32>
    %2 = vector.shape_cast %1 : vector<1x256xf32> to vector<1x256xf32>
    %3 = vector.broadcast %2 : vector<1x256xf32> to vector<8x256xf32>
    %4 = vector.extract_strided_slice %0 {offsets = [1, 0], sizes = [1, 256], strides = [1, 1]} : vector<9x256xf32> to vector<1x256xf32>
    %5 = vector.shape_cast %4 : vector<1x256xf32> to vector<1x256xf32>
    %6 = vector.broadcast %5 : vector<1x256xf32> to vector<8x256xf32>
    %7 = vector.extract_strided_slice %0 {offsets = [2, 0], sizes = [1, 256], strides = [1, 1]} : vector<9x256xf32> to vector<1x256xf32>
    %8 = vector.shape_cast %7 : vector<1x256xf32> to vector<1x256xf32>
    %9 = vector.broadcast %8 : vector<1x256xf32> to vector<8x256xf32>
    %10 = vector.extract_strided_slice %0 {offsets = [3, 0], sizes = [1, 256], strides = [1, 1]} : vector<9x256xf32> to vector<1x256xf32>
    %11 = vector.shape_cast %10 : vector<1x256xf32> to vector<1x256xf32>
    %12 = vector.broadcast %11 : vector<1x256xf32> to vector<8x256xf32>
    %13 = vector.extract_strided_slice %0 {offsets = [5, 0], sizes = [1, 256], strides = [1, 1]} : vector<9x256xf32> to vector<1x256xf32>
    %14 = vector.shape_cast %13 : vector<1x256xf32> to vector<1x256xf32>
    %15 = vector.broadcast %14 : vector<1x256xf32> to vector<8x256xf32>
    %16 = vector.extract_strided_slice %0 {offsets = [6, 0], sizes = [1, 256], strides = [1, 1]} : vector<9x256xf32> to vector<1x256xf32>
    %17 = vector.shape_cast %16 : vector<1x256xf32> to vector<1x256xf32>
    %18 = vector.broadcast %17 : vector<1x256xf32> to vector<8x256xf32>
    %19 = vector.extract_strided_slice %0 {offsets = [7, 0], sizes = [1, 256], strides = [1, 1]} : vector<9x256xf32> to vector<1x256xf32>
    %20 = vector.shape_cast %19 : vector<1x256xf32> to vector<1x256xf32>
    %21 = vector.broadcast %20 : vector<1x256xf32> to vector<8x256xf32>
    %22 = vector.extract_strided_slice %0 {offsets = [8, 0], sizes = [1, 256], strides = [1, 1]} : vector<9x256xf32> to vector<1x256xf32>
    %23 = vector.shape_cast %22 : vector<1x256xf32> to vector<1x256xf32>
    %24 = vector.broadcast %23 : vector<1x256xf32> to vector<8x256xf32>
    %c0_1 = arith.constant 0 : index
    %c0_2 = arith.constant 0 : index
    %25 = vector.load %arg3[%c0_1, %c0_2] : memref<64x256xf32, #tpu.memory_space<vmem>>, vector<64x256xf32>
    %c0_3 = arith.constant 0 : index
    %c0_4 = arith.constant 0 : index
    %c0_5 = arith.constant 0 : index
    %26 = vector.load %arg1[%c0_3, %c0_4, %c0_5] : memref<2x4x64xf32, #tpu.memory_space<vmem>>, vector<1x4x64xf32>
    %27 = vector.shape_cast %26 : vector<1x4x64xf32> to vector<4x64xf32>
    %cst = arith.constant dense<0.000000e+00> : vector<4x256xf32>
    %28 = tpu.matmul %27, %25, %cst {dimension_numbers = #tpu.dot_dimension_numbers<[1], [0], [0], [1], [0, 0, 1, 1], [], []>} : vector<4x64xf32>, vector<64x256xf32>, vector<4x256xf32> -> vector<4x256xf32>
    %c0_6 = arith.constant 0 : index
    %c0_7 = arith.constant 0 : index
    %c0_8 = arith.constant 0 : index
    %29 = vector.load %arg2[%c0_6, %c0_7, %c0_8] : memref<2x4x256xf32, #tpu.memory_space<vmem>>, vector<1x4x256xf32>
    %30 = vector.shape_cast %29 : vector<1x4x256xf32> to vector<4x256xf32>
    %31 = tpu.concatenate %28, %30 in 0 : vector<4x256xf32>, vector<4x256xf32> -> vector<8x256xf32>
    %c0_9 = arith.constant 0 : index
    %c0_10 = arith.constant 0 : index
    %32 = vector.load %arg6[%c0_9, %c0_10] : memref<8x1xf32, #tpu.memory_space<vmem>>, vector<8x1xf32>
    %33 = vector.shape_cast %32 : vector<8x1xf32> to vector<8x1xf32>
    %34 = vector.broadcast %33 : vector<8x1xf32> to vector<8x256xf32>
    %c17_i32 = arith.constant 17 : i32
    %35 = tpu.dynamic_rotate %31 by %c17_i32 dim 1 : vector<8x256xf32>, i32 -> vector<8x256xf32>
    %36 = arith.mulf %35, %3 : vector<8x256xf32>
    %c0_11 = arith.constant 0 : index
    %c0_12 = arith.constant 0 : index
    %c0_13 = arith.constant 0 : index
    %37 = vector.load %arg5[%c0_11, %c0_12, %c0_13] : memref<9x8x8xf32, #tpu.memory_space<vmem>>, vector<1x8x8xf32>
    %38 = vector.shape_cast %37 : vector<1x8x8xf32> to vector<8x8xf32>
    %cst_14 = arith.constant dense<0.000000e+00> : vector<8x256xf32>
    %39 = tpu.matmul %38, %36, %cst_14 {dimension_numbers = #tpu.dot_dimension_numbers<[1], [0], [0], [1], [0, 0, 1, 1], [], []>} : vector<8x8xf32>, vector<8x256xf32>, vector<8x256xf32> -> vector<8x256xf32>
    %40 = arith.addf %34, %39 : vector<8x256xf32>
    %c16_i32 = arith.constant 16 : i32
    %41 = tpu.dynamic_rotate %31 by %c16_i32 dim 1 : vector<8x256xf32>, i32 -> vector<8x256xf32>
    %42 = arith.mulf %41, %6 : vector<8x256xf32>
    %c1 = arith.constant 1 : index
    %c0_15 = arith.constant 0 : index
    %c0_16 = arith.constant 0 : index
    %43 = vector.load %arg5[%c1, %c0_15, %c0_16] : memref<9x8x8xf32, #tpu.memory_space<vmem>>, vector<1x8x8xf32>
    %44 = vector.shape_cast %43 : vector<1x8x8xf32> to vector<8x8xf32>
    %cst_17 = arith.constant dense<0.000000e+00> : vector<8x256xf32>
    %45 = tpu.matmul %44, %42, %cst_17 {dimension_numbers = #tpu.dot_dimension_numbers<[1], [0], [0], [1], [0, 0, 1, 1], [], []>} : vector<8x8xf32>, vector<8x256xf32>, vector<8x256xf32> -> vector<8x256xf32>
    %46 = arith.addf %40, %45 : vector<8x256xf32>
    %c15_i32 = arith.constant 15 : i32
    %47 = tpu.dynamic_rotate %31 by %c15_i32 dim 1 : vector<8x256xf32>, i32 -> vector<8x256xf32>
    %48 = arith.mulf %47, %9 : vector<8x256xf32>
    %c2 = arith.constant 2 : index
    %c0_18 = arith.constant 0 : index
    %c0_19 = arith.constant 0 : index
    %49 = vector.load %arg5[%c2, %c0_18, %c0_19] : memref<9x8x8xf32, #tpu.memory_space<vmem>>, vector<1x8x8xf32>
    %50 = vector.shape_cast %49 : vector<1x8x8xf32> to vector<8x8xf32>
    %cst_20 = arith.constant dense<0.000000e+00> : vector<8x256xf32>
    %51 = tpu.matmul %50, %48, %cst_20 {dimension_numbers = #tpu.dot_dimension_numbers<[1], [0], [0], [1], [0, 0, 1, 1], [], []>} : vector<8x8xf32>, vector<8x256xf32>, vector<8x256xf32> -> vector<8x256xf32>
    %52 = arith.addf %46, %51 : vector<8x256xf32>
    %c1_i32 = arith.constant 1 : i32
    %53 = tpu.dynamic_rotate %31 by %c1_i32 dim 1 : vector<8x256xf32>, i32 -> vector<8x256xf32>
    %54 = arith.mulf %53, %12 : vector<8x256xf32>
    %c3 = arith.constant 3 : index
    %c0_21 = arith.constant 0 : index
    %c0_22 = arith.constant 0 : index
    %55 = vector.load %arg5[%c3, %c0_21, %c0_22] : memref<9x8x8xf32, #tpu.memory_space<vmem>>, vector<1x8x8xf32>
    %56 = vector.shape_cast %55 : vector<1x8x8xf32> to vector<8x8xf32>
    %cst_23 = arith.constant dense<0.000000e+00> : vector<8x256xf32>
    %57 = tpu.matmul %56, %54, %cst_23 {dimension_numbers = #tpu.dot_dimension_numbers<[1], [0], [0], [1], [0, 0, 1, 1], [], []>} : vector<8x8xf32>, vector<8x256xf32>, vector<8x256xf32> -> vector<8x256xf32>
    %58 = arith.addf %52, %57 : vector<8x256xf32>
    %c4 = arith.constant 4 : index
    %c0_24 = arith.constant 0 : index
    %c0_25 = arith.constant 0 : index
    %59 = vector.load %arg5[%c4, %c0_24, %c0_25] : memref<9x8x8xf32, #tpu.memory_space<vmem>>, vector<1x8x8xf32>
    %60 = vector.shape_cast %59 : vector<1x8x8xf32> to vector<8x8xf32>
    %cst_26 = arith.constant dense<0.000000e+00> : vector<8x256xf32>
    %61 = tpu.matmul %60, %31, %cst_26 {dimension_numbers = #tpu.dot_dimension_numbers<[1], [0], [0], [1], [0, 0, 1, 1], [], []>} : vector<8x8xf32>, vector<8x256xf32>, vector<8x256xf32> -> vector<8x256xf32>
    %62 = arith.addf %58, %61 : vector<8x256xf32>
    %c255_i32 = arith.constant 255 : i32
    %63 = tpu.dynamic_rotate %31 by %c255_i32 dim 1 : vector<8x256xf32>, i32 -> vector<8x256xf32>
    %64 = arith.mulf %63, %15 : vector<8x256xf32>
    %c5 = arith.constant 5 : index
    %c0_27 = arith.constant 0 : index
    %c0_28 = arith.constant 0 : index
    %65 = vector.load %arg5[%c5, %c0_27, %c0_28] : memref<9x8x8xf32, #tpu.memory_space<vmem>>, vector<1x8x8xf32>
    %66 = vector.shape_cast %65 : vector<1x8x8xf32> to vector<8x8xf32>
    %cst_29 = arith.constant dense<0.000000e+00> : vector<8x256xf32>
    %67 = tpu.matmul %66, %64, %cst_29 {dimension_numbers = #tpu.dot_dimension_numbers<[1], [0], [0], [1], [0, 0, 1, 1], [], []>} : vector<8x8xf32>, vector<8x256xf32>, vector<8x256xf32> -> vector<8x256xf32>
    %68 = arith.addf %62, %67 : vector<8x256xf32>
    %c241_i32 = arith.constant 241 : i32
    %69 = tpu.dynamic_rotate %31 by %c241_i32 dim 1 : vector<8x256xf32>, i32 -> vector<8x256xf32>
    %70 = arith.mulf %69, %18 : vector<8x256xf32>
    %c6 = arith.constant 6 : index
    %c0_30 = arith.constant 0 : index
    %c0_31 = arith.constant 0 : index
    %71 = vector.load %arg5[%c6, %c0_30, %c0_31] : memref<9x8x8xf32, #tpu.memory_space<vmem>>, vector<1x8x8xf32>
    %72 = vector.shape_cast %71 : vector<1x8x8xf32> to vector<8x8xf32>
    %cst_32 = arith.constant dense<0.000000e+00> : vector<8x256xf32>
    %73 = tpu.matmul %72, %70, %cst_32 {dimension_numbers = #tpu.dot_dimension_numbers<[1], [0], [0], [1], [0, 0, 1, 1], [], []>} : vector<8x8xf32>, vector<8x256xf32>, vector<8x256xf32> -> vector<8x256xf32>
    %74 = arith.addf %68, %73 : vector<8x256xf32>
    %c240_i32 = arith.constant 240 : i32
    %75 = tpu.dynamic_rotate %31 by %c240_i32 dim 1 : vector<8x256xf32>, i32 -> vector<8x256xf32>
    %76 = arith.mulf %75, %21 : vector<8x256xf32>
    %c7 = arith.constant 7 : index
    %c0_33 = arith.constant 0 : index
    %c0_34 = arith.constant 0 : index
    %77 = vector.load %arg5[%c7, %c0_33, %c0_34] : memref<9x8x8xf32, #tpu.memory_space<vmem>>, vector<1x8x8xf32>
    %78 = vector.shape_cast %77 : vector<1x8x8xf32> to vector<8x8xf32>
    %cst_35 = arith.constant dense<0.000000e+00> : vector<8x256xf32>
    %79 = tpu.matmul %78, %76, %cst_35 {dimension_numbers = #tpu.dot_dimension_numbers<[1], [0], [0], [1], [0, 0, 1, 1], [], []>} : vector<8x8xf32>, vector<8x256xf32>, vector<8x256xf32> -> vector<8x256xf32>
    %80 = arith.addf %74, %79 : vector<8x256xf32>
    %c239_i32 = arith.constant 239 : i32
    %81 = tpu.dynamic_rotate %31 by %c239_i32 dim 1 : vector<8x256xf32>, i32 -> vector<8x256xf32>
    %82 = arith.mulf %81, %24 : vector<8x256xf32>
    %c8 = arith.constant 8 : index
    %c0_36 = arith.constant 0 : index
    %c0_37 = arith.constant 0 : index
    %83 = vector.load %arg5[%c8, %c0_36, %c0_37] : memref<9x8x8xf32, #tpu.memory_space<vmem>>, vector<1x8x8xf32>
    %84 = vector.shape_cast %83 : vector<1x8x8xf32> to vector<8x8xf32>
    %cst_38 = arith.constant dense<0.000000e+00> : vector<8x256xf32>
    %85 = tpu.matmul %84, %82, %cst_38 {dimension_numbers = #tpu.dot_dimension_numbers<[1], [0], [0], [1], [0, 0, 1, 1], [], []>} : vector<8x8xf32>, vector<8x256xf32>, vector<8x256xf32> -> vector<8x256xf32>
    %86 = arith.addf %80, %85 : vector<8x256xf32>
    %cst_39 = arith.constant 0.000000e+00 : f32
    %87 = vector.broadcast %cst_39 : f32 to vector<8x256xf32>
    %88 = arith.maximumf %86, %87 : vector<8x256xf32>
    %c0_40 = arith.constant 0 : index
    %c0_41 = arith.constant 0 : index
    %89 = vector.load %arg8[%c0_40, %c0_41] : memref<8x1xf32, #tpu.memory_space<vmem>>, vector<8x1xf32>
    %90 = vector.shape_cast %89 : vector<8x1xf32> to vector<8x1xf32>
    %91 = vector.broadcast %90 : vector<8x1xf32> to vector<8x256xf32>
    %c17_i32_42 = arith.constant 17 : i32
    %92 = tpu.dynamic_rotate %88 by %c17_i32_42 dim 1 : vector<8x256xf32>, i32 -> vector<8x256xf32>
    %93 = arith.mulf %92, %3 : vector<8x256xf32>
    %c0_43 = arith.constant 0 : index
    %c0_44 = arith.constant 0 : index
    %c0_45 = arith.constant 0 : index
    %94 = vector.load %arg7[%c0_43, %c0_44, %c0_45] : memref<9x8x8xf32, #tpu.memory_space<vmem>>, vector<1x8x8xf32>
    %95 = vector.shape_cast %94 : vector<1x8x8xf32> to vector<8x8xf32>
    %cst_46 = arith.constant dense<0.000000e+00> : vector<8x256xf32>
    %96 = tpu.matmul %95, %93, %cst_46 {dimension_numbers = #tpu.dot_dimension_numbers<[1], [0], [0], [1], [0, 0, 1, 1], [], []>} : vector<8x8xf32>, vector<8x256xf32>, vector<8x256xf32> -> vector<8x256xf32>
    %97 = arith.addf %91, %96 : vector<8x256xf32>
    %c16_i32_47 = arith.constant 16 : i32
    %98 = tpu.dynamic_rotate %88 by %c16_i32_47 dim 1 : vector<8x256xf32>, i32 -> vector<8x256xf32>
    %99 = arith.mulf %98, %6 : vector<8x256xf32>
    %c1_48 = arith.constant 1 : index
    %c0_49 = arith.constant 0 : index
    %c0_50 = arith.constant 0 : index
    %100 = vector.load %arg7[%c1_48, %c0_49, %c0_50] : memref<9x8x8xf32, #tpu.memory_space<vmem>>, vector<1x8x8xf32>
    %101 = vector.shape_cast %100 : vector<1x8x8xf32> to vector<8x8xf32>
    %cst_51 = arith.constant dense<0.000000e+00> : vector<8x256xf32>
    %102 = tpu.matmul %101, %99, %cst_51 {dimension_numbers = #tpu.dot_dimension_numbers<[1], [0], [0], [1], [0, 0, 1, 1], [], []>} : vector<8x8xf32>, vector<8x256xf32>, vector<8x256xf32> -> vector<8x256xf32>
    %103 = arith.addf %97, %102 : vector<8x256xf32>
    %c15_i32_52 = arith.constant 15 : i32
    %104 = tpu.dynamic_rotate %88 by %c15_i32_52 dim 1 : vector<8x256xf32>, i32 -> vector<8x256xf32>
    %105 = arith.mulf %104, %9 : vector<8x256xf32>
    %c2_53 = arith.constant 2 : index
    %c0_54 = arith.constant 0 : index
    %c0_55 = arith.constant 0 : index
    %106 = vector.load %arg7[%c2_53, %c0_54, %c0_55] : memref<9x8x8xf32, #tpu.memory_space<vmem>>, vector<1x8x8xf32>
    %107 = vector.shape_cast %106 : vector<1x8x8xf32> to vector<8x8xf32>
    %cst_56 = arith.constant dense<0.000000e+00> : vector<8x256xf32>
    %108 = tpu.matmul %107, %105, %cst_56 {dimension_numbers = #tpu.dot_dimension_numbers<[1], [0], [0], [1], [0, 0, 1, 1], [], []>} : vector<8x8xf32>, vector<8x256xf32>, vector<8x256xf32> -> vector<8x256xf32>
    %109 = arith.addf %103, %108 : vector<8x256xf32>
    %c1_i32_57 = arith.constant 1 : i32
    %110 = tpu.dynamic_rotate %88 by %c1_i32_57 dim 1 : vector<8x256xf32>, i32 -> vector<8x256xf32>
    %111 = arith.mulf %110, %12 : vector<8x256xf32>
    %c3_58 = arith.constant 3 : index
    %c0_59 = arith.constant 0 : index
    %c0_60 = arith.constant 0 : index
    %112 = vector.load %arg7[%c3_58, %c0_59, %c0_60] : memref<9x8x8xf32, #tpu.memory_space<vmem>>, vector<1x8x8xf32>
    %113 = vector.shape_cast %112 : vector<1x8x8xf32> to vector<8x8xf32>
    %cst_61 = arith.constant dense<0.000000e+00> : vector<8x256xf32>
    %114 = tpu.matmul %113, %111, %cst_61 {dimension_numbers = #tpu.dot_dimension_numbers<[1], [0], [0], [1], [0, 0, 1, 1], [], []>} : vector<8x8xf32>, vector<8x256xf32>, vector<8x256xf32> -> vector<8x256xf32>
    %115 = arith.addf %109, %114 : vector<8x256xf32>
    %c4_62 = arith.constant 4 : index
    %c0_63 = arith.constant 0 : index
    %c0_64 = arith.constant 0 : index
    %116 = vector.load %arg7[%c4_62, %c0_63, %c0_64] : memref<9x8x8xf32, #tpu.memory_space<vmem>>, vector<1x8x8xf32>
    %117 = vector.shape_cast %116 : vector<1x8x8xf32> to vector<8x8xf32>
    %cst_65 = arith.constant dense<0.000000e+00> : vector<8x256xf32>
    %118 = tpu.matmul %117, %88, %cst_65 {dimension_numbers = #tpu.dot_dimension_numbers<[1], [0], [0], [1], [0, 0, 1, 1], [], []>} : vector<8x8xf32>, vector<8x256xf32>, vector<8x256xf32> -> vector<8x256xf32>
    %119 = arith.addf %115, %118 : vector<8x256xf32>
    %c255_i32_66 = arith.constant 255 : i32
    %120 = tpu.dynamic_rotate %88 by %c255_i32_66 dim 1 : vector<8x256xf32>, i32 -> vector<8x256xf32>
    %121 = arith.mulf %120, %15 : vector<8x256xf32>
    %c5_67 = arith.constant 5 : index
    %c0_68 = arith.constant 0 : index
    %c0_69 = arith.constant 0 : index
    %122 = vector.load %arg7[%c5_67, %c0_68, %c0_69] : memref<9x8x8xf32, #tpu.memory_space<vmem>>, vector<1x8x8xf32>
    %123 = vector.shape_cast %122 : vector<1x8x8xf32> to vector<8x8xf32>
    %cst_70 = arith.constant dense<0.000000e+00> : vector<8x256xf32>
    %124 = tpu.matmul %123, %121, %cst_70 {dimension_numbers = #tpu.dot_dimension_numbers<[1], [0], [0], [1], [0, 0, 1, 1], [], []>} : vector<8x8xf32>, vector<8x256xf32>, vector<8x256xf32> -> vector<8x256xf32>
    %125 = arith.addf %119, %124 : vector<8x256xf32>
    %c241_i32_71 = arith.constant 241 : i32
    %126 = tpu.dynamic_rotate %88 by %c241_i32_71 dim 1 : vector<8x256xf32>, i32 -> vector<8x256xf32>
    %127 = arith.mulf %126, %18 : vector<8x256xf32>
    %c6_72 = arith.constant 6 : index
    %c0_73 = arith.constant 0 : index
    %c0_74 = arith.constant 0 : index
    %128 = vector.load %arg7[%c6_72, %c0_73, %c0_74] : memref<9x8x8xf32, #tpu.memory_space<vmem>>, vector<1x8x8xf32>
    %129 = vector.shape_cast %128 : vector<1x8x8xf32> to vector<8x8xf32>
    %cst_75 = arith.constant dense<0.000000e+00> : vector<8x256xf32>
    %130 = tpu.matmul %129, %127, %cst_75 {dimension_numbers = #tpu.dot_dimension_numbers<[1], [0], [0], [1], [0, 0, 1, 1], [], []>} : vector<8x8xf32>, vector<8x256xf32>, vector<8x256xf32> -> vector<8x256xf32>
    %131 = arith.addf %125, %130 : vector<8x256xf32>
    %c240_i32_76 = arith.constant 240 : i32
    %132 = tpu.dynamic_rotate %88 by %c240_i32_76 dim 1 : vector<8x256xf32>, i32 -> vector<8x256xf32>
    %133 = arith.mulf %132, %21 : vector<8x256xf32>
    %c7_77 = arith.constant 7 : index
    %c0_78 = arith.constant 0 : index
    %c0_79 = arith.constant 0 : index
    %134 = vector.load %arg7[%c7_77, %c0_78, %c0_79] : memref<9x8x8xf32, #tpu.memory_space<vmem>>, vector<1x8x8xf32>
    %135 = vector.shape_cast %134 : vector<1x8x8xf32> to vector<8x8xf32>
    %cst_80 = arith.constant dense<0.000000e+00> : vector<8x256xf32>
    %136 = tpu.matmul %135, %133, %cst_80 {dimension_numbers = #tpu.dot_dimension_numbers<[1], [0], [0], [1], [0, 0, 1, 1], [], []>} : vector<8x8xf32>, vector<8x256xf32>, vector<8x256xf32> -> vector<8x256xf32>
    %137 = arith.addf %131, %136 : vector<8x256xf32>
    %c239_i32_81 = arith.constant 239 : i32
    %138 = tpu.dynamic_rotate %88 by %c239_i32_81 dim 1 : vector<8x256xf32>, i32 -> vector<8x256xf32>
    %139 = arith.mulf %138, %24 : vector<8x256xf32>
    %c8_82 = arith.constant 8 : index
    %c0_83 = arith.constant 0 : index
    %c0_84 = arith.constant 0 : index
    %140 = vector.load %arg7[%c8_82, %c0_83, %c0_84] : memref<9x8x8xf32, #tpu.memory_space<vmem>>, vector<1x8x8xf32>
    %141 = vector.shape_cast %140 : vector<1x8x8xf32> to vector<8x8xf32>
    %cst_85 = arith.constant dense<0.000000e+00> : vector<8x256xf32>
    %142 = tpu.matmul %141, %139, %cst_85 {dimension_numbers = #tpu.dot_dimension_numbers<[1], [0], [0], [1], [0, 0, 1, 1], [], []>} : vector<8x8xf32>, vector<8x256xf32>, vector<8x256xf32> -> vector<8x256xf32>
    %143 = arith.addf %137, %142 : vector<8x256xf32>
    %cst_86 = arith.constant 0.000000e+00 : f32
    %144 = vector.broadcast %cst_86 : f32 to vector<8x256xf32>
    %145 = arith.maximumf %143, %144 : vector<8x256xf32>
    %c0_87 = arith.constant 0 : index
    %c0_88 = arith.constant 0 : index
    %c0_89 = arith.constant 0 : index
    %146 = vector.load %arg9[%c0_87, %c0_88, %c0_89] : memref<2x8x256xf32, #tpu.memory_space<vmem>>, vector<1x8x256xf32>
    %147 = vector.shape_cast %146 : vector<1x8x256xf32> to vector<8x256xf32>
    %148 = vector.shape_cast %145 : vector<8x256xf32> to vector<1x8x256xf32>
    tpu.vector_store %arg9[%c0_87, %c0_88, %c0_89], %148 {strides = array<i32>} : memref<2x8x256xf32, #tpu.memory_space<vmem>>, vector<1x8x256xf32>,
    %c1_90 = arith.constant 1 : index
    %c0_91 = arith.constant 0 : index
    %c0_92 = arith.constant 0 : index
    %149 = vector.load %arg1[%c1_90, %c0_91, %c0_92] : memref<2x4x64xf32, #tpu.memory_space<vmem>>, vector<1x4x64xf32>
    %150 = vector.shape_cast %149 : vector<1x4x64xf32> to vector<4x64xf32>
    %cst_93 = arith.constant dense<0.000000e+00> : vector<4x256xf32>
    %151 = tpu.matmul %150, %25, %cst_93 {dimension_numbers = #tpu.dot_dimension_numbers<[1], [0], [0], [1], [0, 0, 1, 1], [], []>} : vector<4x64xf32>, vector<64x256xf32>, vector<4x256xf32> -> vector<4x256xf32>
    %c1_94 = arith.constant 1 : index
    %c0_95 = arith.constant 0 : index
    %c0_96 = arith.constant 0 : index
    %152 = vector.load %arg2[%c1_94, %c0_95, %c0_96] : memref<2x4x256xf32, #tpu.memory_space<vmem>>, vector<1x4x256xf32>
    %153 = vector.shape_cast %152 : vector<1x4x256xf32> to vector<4x256xf32>
    %154 = tpu.concatenate %151, %153 in 0 : vector<4x256xf32>, vector<4x256xf32> -> vector<8x256xf32>
    %c0_97 = arith.constant 0 : index
    %c0_98 = arith.constant 0 : index
    %155 = vector.load %arg6[%c0_97, %c0_98] : memref<8x1xf32, #tpu.memory_space<vmem>>, vector<8x1xf32>
    %156 = vector.shape_cast %155 : vector<8x1xf32> to vector<8x1xf32>
    %157 = vector.broadcast %156 : vector<8x1xf32> to vector<8x256xf32>
    %c17_i32_99 = arith.constant 17 : i32
    %158 = tpu.dynamic_rotate %154 by %c17_i32_99 dim 1 : vector<8x256xf32>, i32 -> vector<8x256xf32>
    %159 = arith.mulf %158, %3 : vector<8x256xf32>
    %c0_100 = arith.constant 0 : index
    %c0_101 = arith.constant 0 : index
    %c0_102 = arith.constant 0 : index
    %160 = vector.load %arg5[%c0_100, %c0_101, %c0_102] : memref<9x8x8xf32, #tpu.memory_space<vmem>>, vector<1x8x8xf32>
    %161 = vector.shape_cast %160 : vector<1x8x8xf32> to vector<8x8xf32>
    %cst_103 = arith.constant dense<0.000000e+00> : vector<8x256xf32>
    %162 = tpu.matmul %161, %159, %cst_103 {dimension_numbers = #tpu.dot_dimension_numbers<[1], [0], [0], [1], [0, 0, 1, 1], [], []>} : vector<8x8xf32>, vector<8x256xf32>, vector<8x256xf32> -> vector<8x256xf32>
    %163 = arith.addf %157, %162 : vector<8x256xf32>
    %c16_i32_104 = arith.constant 16 : i32
    %164 = tpu.dynamic_rotate %154 by %c16_i32_104 dim 1 : vector<8x256xf32>, i32 -> vector<8x256xf32>
    %165 = arith.mulf %164, %6 : vector<8x256xf32>
    %c1_105 = arith.constant 1 : index
    %c0_106 = arith.constant 0 : index
    %c0_107 = arith.constant 0 : index
    %166 = vector.load %arg5[%c1_105, %c0_106, %c0_107] : memref<9x8x8xf32, #tpu.memory_space<vmem>>, vector<1x8x8xf32>
    %167 = vector.shape_cast %166 : vector<1x8x8xf32> to vector<8x8xf32>
    %cst_108 = arith.constant dense<0.000000e+00> : vector<8x256xf32>
    %168 = tpu.matmul %167, %165, %cst_108 {dimension_numbers = #tpu.dot_dimension_numbers<[1], [0], [0], [1], [0, 0, 1, 1], [], []>} : vector<8x8xf32>, vector<8x256xf32>, vector<8x256xf32> -> vector<8x256xf32>
    %169 = arith.addf %163, %168 : vector<8x256xf32>
    %c15_i32_109 = arith.constant 15 : i32
    %170 = tpu.dynamic_rotate %154 by %c15_i32_109 dim 1 : vector<8x256xf32>, i32 -> vector<8x256xf32>
    %171 = arith.mulf %170, %9 : vector<8x256xf32>
    %c2_110 = arith.constant 2 : index
    %c0_111 = arith.constant 0 : index
    %c0_112 = arith.constant 0 : index
    %172 = vector.load %arg5[%c2_110, %c0_111, %c0_112] : memref<9x8x8xf32, #tpu.memory_space<vmem>>, vector<1x8x8xf32>
    %173 = vector.shape_cast %172 : vector<1x8x8xf32> to vector<8x8xf32>
    %cst_113 = arith.constant dense<0.000000e+00> : vector<8x256xf32>
    %174 = tpu.matmul %173, %171, %cst_113 {dimension_numbers = #tpu.dot_dimension_numbers<[1], [0], [0], [1], [0, 0, 1, 1], [], []>} : vector<8x8xf32>, vector<8x256xf32>, vector<8x256xf32> -> vector<8x256xf32>
    %175 = arith.addf %169, %174 : vector<8x256xf32>
    %c1_i32_114 = arith.constant 1 : i32
    %176 = tpu.dynamic_rotate %154 by %c1_i32_114 dim 1 : vector<8x256xf32>, i32 -> vector<8x256xf32>
    %177 = arith.mulf %176, %12 : vector<8x256xf32>
    %c3_115 = arith.constant 3 : index
    %c0_116 = arith.constant 0 : index
    %c0_117 = arith.constant 0 : index
    %178 = vector.load %arg5[%c3_115, %c0_116, %c0_117] : memref<9x8x8xf32, #tpu.memory_space<vmem>>, vector<1x8x8xf32>
    %179 = vector.shape_cast %178 : vector<1x8x8xf32> to vector<8x8xf32>
    %cst_118 = arith.constant dense<0.000000e+00> : vector<8x256xf32>
    %180 = tpu.matmul %179, %177, %cst_118 {dimension_numbers = #tpu.dot_dimension_numbers<[1], [0], [0], [1], [0, 0, 1, 1], [], []>} : vector<8x8xf32>, vector<8x256xf32>, vector<8x256xf32> -> vector<8x256xf32>
    %181 = arith.addf %175, %180 : vector<8x256xf32>
    %c4_119 = arith.constant 4 : index
    %c0_120 = arith.constant 0 : index
    %c0_121 = arith.constant 0 : index
    %182 = vector.load %arg5[%c4_119, %c0_120, %c0_121] : memref<9x8x8xf32, #tpu.memory_space<vmem>>, vector<1x8x8xf32>
    %183 = vector.shape_cast %182 : vector<1x8x8xf32> to vector<8x8xf32>
    %cst_122 = arith.constant dense<0.000000e+00> : vector<8x256xf32>
    %184 = tpu.matmul %183, %154, %cst_122 {dimension_numbers = #tpu.dot_dimension_numbers<[1], [0], [0], [1], [0, 0, 1, 1], [], []>} : vector<8x8xf32>, vector<8x256xf32>, vector<8x256xf32> -> vector<8x256xf32>
    %185 = arith.addf %181, %184 : vector<8x256xf32>
    %c255_i32_123 = arith.constant 255 : i32
    %186 = tpu.dynamic_rotate %154 by %c255_i32_123 dim 1 : vector<8x256xf32>, i32 -> vector<8x256xf32>
    %187 = arith.mulf %186, %15 : vector<8x256xf32>
    %c5_124 = arith.constant 5 : index
    %c0_125 = arith.constant 0 : index
    %c0_126 = arith.constant 0 : index
    %188 = vector.load %arg5[%c5_124, %c0_125, %c0_126] : memref<9x8x8xf32, #tpu.memory_space<vmem>>, vector<1x8x8xf32>
    %189 = vector.shape_cast %188 : vector<1x8x8xf32> to vector<8x8xf32>
    %cst_127 = arith.constant dense<0.000000e+00> : vector<8x256xf32>
    %190 = tpu.matmul %189, %187, %cst_127 {dimension_numbers = #tpu.dot_dimension_numbers<[1], [0], [0], [1], [0, 0, 1, 1], [], []>} : vector<8x8xf32>, vector<8x256xf32>, vector<8x256xf32> -> vector<8x256xf32>
    %191 = arith.addf %185, %190 : vector<8x256xf32>
    %c241_i32_128 = arith.constant 241 : i32
    %192 = tpu.dynamic_rotate %154 by %c241_i32_128 dim 1 : vector<8x256xf32>, i32 -> vector<8x256xf32>
    %193 = arith.mulf %192, %18 : vector<8x256xf32>
    %c6_129 = arith.constant 6 : index
    %c0_130 = arith.constant 0 : index
    %c0_131 = arith.constant 0 : index
    %194 = vector.load %arg5[%c6_129, %c0_130, %c0_131] : memref<9x8x8xf32, #tpu.memory_space<vmem>>, vector<1x8x8xf32>
    %195 = vector.shape_cast %194 : vector<1x8x8xf32> to vector<8x8xf32>
    %cst_132 = arith.constant dense<0.000000e+00> : vector<8x256xf32>
    %196 = tpu.matmul %195, %193, %cst_132 {dimension_numbers = #tpu.dot_dimension_numbers<[1], [0], [0], [1], [0, 0, 1, 1], [], []>} : vector<8x8xf32>, vector<8x256xf32>, vector<8x256xf32> -> vector<8x256xf32>
    %197 = arith.addf %191, %196 : vector<8x256xf32>
    %c240_i32_133 = arith.constant 240 : i32
    %198 = tpu.dynamic_rotate %154 by %c240_i32_133 dim 1 : vector<8x256xf32>, i32 -> vector<8x256xf32>
    %199 = arith.mulf %198, %21 : vector<8x256xf32>
    %c7_134 = arith.constant 7 : index
    %c0_135 = arith.constant 0 : index
    %c0_136 = arith.constant 0 : index
    %200 = vector.load %arg5[%c7_134, %c0_135, %c0_136] : memref<9x8x8xf32, #tpu.memory_space<vmem>>, vector<1x8x8xf32>
    %201 = vector.shape_cast %200 : vector<1x8x8xf32> to vector<8x8xf32>
    %cst_137 = arith.constant dense<0.000000e+00> : vector<8x256xf32>
    %202 = tpu.matmul %201, %199, %cst_137 {dimension_numbers = #tpu.dot_dimension_numbers<[1], [0], [0], [1], [0, 0, 1, 1], [], []>} : vector<8x8xf32>, vector<8x256xf32>, vector<8x256xf32> -> vector<8x256xf32>
    %203 = arith.addf %197, %202 : vector<8x256xf32>
    %c239_i32_138 = arith.constant 239 : i32
    %204 = tpu.dynamic_rotate %154 by %c239_i32_138 dim 1 : vector<8x256xf32>, i32 -> vector<8x256xf32>
    %205 = arith.mulf %204, %24 : vector<8x256xf32>
    %c8_139 = arith.constant 8 : index
    %c0_140 = arith.constant 0 : index
    %c0_141 = arith.constant 0 : index
    %206 = vector.load %arg5[%c8_139, %c0_140, %c0_141] : memref<9x8x8xf32, #tpu.memory_space<vmem>>, vector<1x8x8xf32>
    %207 = vector.shape_cast %206 : vector<1x8x8xf32> to vector<8x8xf32>
    %cst_142 = arith.constant dense<0.000000e+00> : vector<8x256xf32>
    %208 = tpu.matmul %207, %205, %cst_142 {dimension_numbers = #tpu.dot_dimension_numbers<[1], [0], [0], [1], [0, 0, 1, 1], [], []>} : vector<8x8xf32>, vector<8x256xf32>, vector<8x256xf32> -> vector<8x256xf32>
    %209 = arith.addf %203, %208 : vector<8x256xf32>
    %cst_143 = arith.constant 0.000000e+00 : f32
    %210 = vector.broadcast %cst_143 : f32 to vector<8x256xf32>
    %211 = arith.maximumf %209, %210 : vector<8x256xf32>
    %c0_144 = arith.constant 0 : index
    %c0_145 = arith.constant 0 : index
    %212 = vector.load %arg8[%c0_144, %c0_145] : memref<8x1xf32, #tpu.memory_space<vmem>>, vector<8x1xf32>
    %213 = vector.shape_cast %212 : vector<8x1xf32> to vector<8x1xf32>
    %214 = vector.broadcast %213 : vector<8x1xf32> to vector<8x256xf32>
    %c17_i32_146 = arith.constant 17 : i32
    %215 = tpu.dynamic_rotate %211 by %c17_i32_146 dim 1 : vector<8x256xf32>, i32 -> vector<8x256xf32>
    %216 = arith.mulf %215, %3 : vector<8x256xf32>
    %c0_147 = arith.constant 0 : index
    %c0_148 = arith.constant 0 : index
    %c0_149 = arith.constant 0 : index
    %217 = vector.load %arg7[%c0_147, %c0_148, %c0_149] : memref<9x8x8xf32, #tpu.memory_space<vmem>>, vector<1x8x8xf32>
    %218 = vector.shape_cast %217 : vector<1x8x8xf32> to vector<8x8xf32>
    %cst_150 = arith.constant dense<0.000000e+00> : vector<8x256xf32>
    %219 = tpu.matmul %218, %216, %cst_150 {dimension_numbers = #tpu.dot_dimension_numbers<[1], [0], [0], [1], [0, 0, 1, 1], [], []>} : vector<8x8xf32>, vector<8x256xf32>, vector<8x256xf32> -> vector<8x256xf32>
    %220 = arith.addf %214, %219 : vector<8x256xf32>
    %c16_i32_151 = arith.constant 16 : i32
    %221 = tpu.dynamic_rotate %211 by %c16_i32_151 dim 1 : vector<8x256xf32>, i32 -> vector<8x256xf32>
    %222 = arith.mulf %221, %6 : vector<8x256xf32>
    %c1_152 = arith.constant 1 : index
    %c0_153 = arith.constant 0 : index
    %c0_154 = arith.constant 0 : index
    %223 = vector.load %arg7[%c1_152, %c0_153, %c0_154] : memref<9x8x8xf32, #tpu.memory_space<vmem>>, vector<1x8x8xf32>
    %224 = vector.shape_cast %223 : vector<1x8x8xf32> to vector<8x8xf32>
    %cst_155 = arith.constant dense<0.000000e+00> : vector<8x256xf32>
    %225 = tpu.matmul %224, %222, %cst_155 {dimension_numbers = #tpu.dot_dimension_numbers<[1], [0], [0], [1], [0, 0, 1, 1], [], []>} : vector<8x8xf32>, vector<8x256xf32>, vector<8x256xf32> -> vector<8x256xf32>
    %226 = arith.addf %220, %225 : vector<8x256xf32>
    %c15_i32_156 = arith.constant 15 : i32
    %227 = tpu.dynamic_rotate %211 by %c15_i32_156 dim 1 : vector<8x256xf32>, i32 -> vector<8x256xf32>
    %228 = arith.mulf %227, %9 : vector<8x256xf32>
    %c2_157 = arith.constant 2 : index
    %c0_158 = arith.constant 0 : index
    %c0_159 = arith.constant 0 : index
    %229 = vector.load %arg7[%c2_157, %c0_158, %c0_159] : memref<9x8x8xf32, #tpu.memory_space<vmem>>, vector<1x8x8xf32>
    %230 = vector.shape_cast %229 : vector<1x8x8xf32> to vector<8x8xf32>
    %cst_160 = arith.constant dense<0.000000e+00> : vector<8x256xf32>
    %231 = tpu.matmul %230, %228, %cst_160 {dimension_numbers = #tpu.dot_dimension_numbers<[1], [0], [0], [1], [0, 0, 1, 1], [], []>} : vector<8x8xf32>, vector<8x256xf32>, vector<8x256xf32> -> vector<8x256xf32>
    %232 = arith.addf %226, %231 : vector<8x256xf32>
    %c1_i32_161 = arith.constant 1 : i32
    %233 = tpu.dynamic_rotate %211 by %c1_i32_161 dim 1 : vector<8x256xf32>, i32 -> vector<8x256xf32>
    %234 = arith.mulf %233, %12 : vector<8x256xf32>
    %c3_162 = arith.constant 3 : index
    %c0_163 = arith.constant 0 : index
    %c0_164 = arith.constant 0 : index
    %235 = vector.load %arg7[%c3_162, %c0_163, %c0_164] : memref<9x8x8xf32, #tpu.memory_space<vmem>>, vector<1x8x8xf32>
    %236 = vector.shape_cast %235 : vector<1x8x8xf32> to vector<8x8xf32>
    %cst_165 = arith.constant dense<0.000000e+00> : vector<8x256xf32>
    %237 = tpu.matmul %236, %234, %cst_165 {dimension_numbers = #tpu.dot_dimension_numbers<[1], [0], [0], [1], [0, 0, 1, 1], [], []>} : vector<8x8xf32>, vector<8x256xf32>, vector<8x256xf32> -> vector<8x256xf32>
    %238 = arith.addf %232, %237 : vector<8x256xf32>
    %c4_166 = arith.constant 4 : index
    %c0_167 = arith.constant 0 : index
    %c0_168 = arith.constant 0 : index
    %239 = vector.load %arg7[%c4_166, %c0_167, %c0_168] : memref<9x8x8xf32, #tpu.memory_space<vmem>>, vector<1x8x8xf32>
    %240 = vector.shape_cast %239 : vector<1x8x8xf32> to vector<8x8xf32>
    %cst_169 = arith.constant dense<0.000000e+00> : vector<8x256xf32>
    %241 = tpu.matmul %240, %211, %cst_169 {dimension_numbers = #tpu.dot_dimension_numbers<[1], [0], [0], [1], [0, 0, 1, 1], [], []>} : vector<8x8xf32>, vector<8x256xf32>, vector<8x256xf32> -> vector<8x256xf32>
    %242 = arith.addf %238, %241 : vector<8x256xf32>
    %c255_i32_170 = arith.constant 255 : i32
    %243 = tpu.dynamic_rotate %211 by %c255_i32_170 dim 1 : vector<8x256xf32>, i32 -> vector<8x256xf32>
    %244 = arith.mulf %243, %15 : vector<8x256xf32>
    %c5_171 = arith.constant 5 : index
    %c0_172 = arith.constant 0 : index
    %c0_173 = arith.constant 0 : index
    %245 = vector.load %arg7[%c5_171, %c0_172, %c0_173] : memref<9x8x8xf32, #tpu.memory_space<vmem>>, vector<1x8x8xf32>
    %246 = vector.shape_cast %245 : vector<1x8x8xf32> to vector<8x8xf32>
    %cst_174 = arith.constant dense<0.000000e+00> : vector<8x256xf32>
    %247 = tpu.matmul %246, %244, %cst_174 {dimension_numbers = #tpu.dot_dimension_numbers<[1], [0], [0], [1], [0, 0, 1, 1], [], []>} : vector<8x8xf32>, vector<8x256xf32>, vector<8x256xf32> -> vector<8x256xf32>
    %248 = arith.addf %242, %247 : vector<8x256xf32>
    %c241_i32_175 = arith.constant 241 : i32
    %249 = tpu.dynamic_rotate %211 by %c241_i32_175 dim 1 : vector<8x256xf32>, i32 -> vector<8x256xf32>
    %250 = arith.mulf %249, %18 : vector<8x256xf32>
    %c6_176 = arith.constant 6 : index
    %c0_177 = arith.constant 0 : index
    %c0_178 = arith.constant 0 : index
    %251 = vector.load %arg7[%c6_176, %c0_177, %c0_178] : memref<9x8x8xf32, #tpu.memory_space<vmem>>, vector<1x8x8xf32>
    %252 = vector.shape_cast %251 : vector<1x8x8xf32> to vector<8x8xf32>
    %cst_179 = arith.constant dense<0.000000e+00> : vector<8x256xf32>
    %253 = tpu.matmul %252, %250, %cst_179 {dimension_numbers = #tpu.dot_dimension_numbers<[1], [0], [0], [1], [0, 0, 1, 1], [], []>} : vector<8x8xf32>, vector<8x256xf32>, vector<8x256xf32> -> vector<8x256xf32>
    %254 = arith.addf %248, %253 : vector<8x256xf32>
    %c240_i32_180 = arith.constant 240 : i32
    %255 = tpu.dynamic_rotate %211 by %c240_i32_180 dim 1 : vector<8x256xf32>, i32 -> vector<8x256xf32>
    %256 = arith.mulf %255, %21 : vector<8x256xf32>
    %c7_181 = arith.constant 7 : index
    %c0_182 = arith.constant 0 : index
    %c0_183 = arith.constant 0 : index
    %257 = vector.load %arg7[%c7_181, %c0_182, %c0_183] : memref<9x8x8xf32, #tpu.memory_space<vmem>>, vector<1x8x8xf32>
    %258 = vector.shape_cast %257 : vector<1x8x8xf32> to vector<8x8xf32>
    %cst_184 = arith.constant dense<0.000000e+00> : vector<8x256xf32>
    %259 = tpu.matmul %258, %256, %cst_184 {dimension_numbers = #tpu.dot_dimension_numbers<[1], [0], [0], [1], [0, 0, 1, 1], [], []>} : vector<8x8xf32>, vector<8x256xf32>, vector<8x256xf32> -> vector<8x256xf32>
    %260 = arith.addf %254, %259 : vector<8x256xf32>
    %c239_i32_185 = arith.constant 239 : i32
    %261 = tpu.dynamic_rotate %211 by %c239_i32_185 dim 1 : vector<8x256xf32>, i32 -> vector<8x256xf32>
    %262 = arith.mulf %261, %24 : vector<8x256xf32>
    %c8_186 = arith.constant 8 : index
    %c0_187 = arith.constant 0 : index
    %c0_188 = arith.constant 0 : index
    %263 = vector.load %arg7[%c8_186, %c0_187, %c0_188] : memref<9x8x8xf32, #tpu.memory_space<vmem>>, vector<1x8x8xf32>
    %264 = vector.shape_cast %263 : vector<1x8x8xf32> to vector<8x8xf32>
    %cst_189 = arith.constant dense<0.000000e+00> : vector<8x256xf32>
    %265 = tpu.matmul %264, %262, %cst_189 {dimension_numbers = #tpu.dot_dimension_numbers<[1], [0], [0], [1], [0, 0, 1, 1], [], []>} : vector<8x8xf32>, vector<8x256xf32>, vector<8x256xf32> -> vector<8x256xf32>
    %266 = arith.addf %260, %265 : vector<8x256xf32>
    %cst_190 = arith.constant 0.000000e+00 : f32
    %267 = vector.broadcast %cst_190 : f32 to vector<8x256xf32>
    %268 = arith.maximumf %266, %267 : vector<8x256xf32>
    %c1_191 = arith.constant 1 : index
    %c0_192 = arith.constant 0 : index
    %c0_193 = arith.constant 0 : index
    %269 = vector.load %arg9[%c1_191, %c0_192, %c0_193] : memref<2x8x256xf32, #tpu.memory_space<vmem>>, vector<1x8x256xf32>
    %270 = vector.shape_cast %269 : vector<1x8x256xf32> to vector<8x256xf32>
    %271 = vector.shape_cast %268 : vector<8x256xf32> to vector<1x8x256xf32>
    tpu.vector_store %arg9[%c1_191, %c0_192, %c0_193], %271 {strides = array<i32>} : memref<2x8x256xf32, #tpu.memory_space<vmem>>, vector<1x8x256xf32>,
    return
  }
  func.func @transform_0(%arg0: i32) -> (i32, i32, i32) {
    %c0_i32 = arith.constant 0 : i32
    %c0_i32_0 = arith.constant 0 : i32
    %c0_i32_1 = arith.constant 0 : i32
    return %arg0, %c0_i32, %c0_i32_0 : i32, i32, i32
  }
  func.func @transform_1(%arg0: i32) -> (i32, i32, i32) {
    %c0_i32 = arith.constant 0 : i32
    %c0_i32_0 = arith.constant 0 : i32
    %c0_i32_1 = arith.constant 0 : i32
    return %arg0, %c0_i32, %c0_i32_0 : i32, i32, i32
  }
  func.func @transform_2(%arg0: i32) -> (i32, i32) {
    %c0_i32 = arith.constant 0 : i32
    %c0_i32_0 = arith.constant 0 : i32
    %c0_i32_1 = arith.constant 0 : i32
    return %c0_i32, %c0_i32_0 : i32, i32
  }
  func.func @transform_3(%arg0: i32) -> (i32, i32) {
    %c0_i32 = arith.constant 0 : i32
    %c0_i32_0 = arith.constant 0 : i32
    %c0_i32_1 = arith.constant 0 : i32
    return %c0_i32, %c0_i32_0 : i32, i32
  }
  func.func @transform_4(%arg0: i32) -> (i32, i32, i32) {
    %c0_i32 = arith.constant 0 : i32
    %c0_i32_0 = arith.constant 0 : i32
    %c0_i32_1 = arith.constant 0 : i32
    %c0_i32_2 = arith.constant 0 : i32
    return %c0_i32, %c0_i32_0, %c0_i32_1 : i32, i32, i32
  }
  func.func @transform_5(%arg0: i32) -> (i32, i32) {
    %c0_i32 = arith.constant 0 : i32
    %c0_i32_0 = arith.constant 0 : i32
    %c0_i32_1 = arith.constant 0 : i32
    return %c0_i32, %c0_i32_0 : i32, i32
  }
  func.func @transform_6(%arg0: i32) -> (i32, i32, i32) {
    %c0_i32 = arith.constant 0 : i32
    %c0_i32_0 = arith.constant 0 : i32
    %c0_i32_1 = arith.constant 0 : i32
    %c0_i32_2 = arith.constant 0 : i32
    return %c0_i32, %c0_i32_0, %c0_i32_1 : i32, i32, i32
  }
  func.func @transform_7(%arg0: i32) -> (i32, i32) {
    %c0_i32 = arith.constant 0 : i32
    %c0_i32_0 = arith.constant 0 : i32
    %c0_i32_1 = arith.constant 0 : i32
    return %c0_i32, %c0_i32_0 : i32, i32
  }
  func.func @transform_8(%arg0: i32) -> (i32, i32, i32) {
    %c0_i32 = arith.constant 0 : i32
    %c0_i32_0 = arith.constant 0 : i32
    %c0_i32_1 = arith.constant 0 : i32
    return %arg0, %c0_i32, %c0_i32_0 : i32, i32, i32
  }
}

</mosaic_0001>

<llo_original>
// kernel: up_forward.1
$region0: #{up_forward.1}
  #allocation0 [shape = 'u32[]', space=smem, size = 0x4, offset = 0x4, fixed_abs, tag = 'smem constant byte address 0x4 - core index']
  #allocation1 [shape = 'u32[144,128]{1,0:T(1,128)}', space=vmem, size = 0x12000, scoped, tag = 'internal scratch']
  %s0 = inlined_call_operand.vmem [shape: f32[2,4,64], index: 0, kind: input, shape index: {}]
  %s1 = inlined_call_operand.vmem [shape: f32[2,4,256], index: 1, kind: input, shape index: {}]
  %s2 = inlined_call_operand.vmem [shape: f32[64,256], index: 2, kind: input, shape index: {}]
  %s3 = inlined_call_operand.vmem [shape: f32[9,256], index: 3, kind: input, shape index: {}]
  %s4 = inlined_call_operand.vmem [shape: f32[9,8,8], index: 4, kind: input, shape index: {}]
  %s5 = inlined_call_operand.vmem [shape: f32[8,1], index: 5, kind: input, shape index: {}]
  %s6 = inlined_call_operand.vmem [shape: f32[9,8,8], index: 6, kind: input, shape index: {}]
  %s7 = inlined_call_operand.vmem [shape: f32[8,1], index: 7, kind: input, shape index: {}]
  %s8 = inlined_call_operand.vmem [shape: f32[2,8,256], index: 8, kind: output, shape index: {}]
  %s9 = sld [smem:[#allocation0]]
  $region42: #{up_forward.1} parent=0
    _
  %s11 = ssub.s32 1, %s9
  %s12 = scalar_select 0, %s11, %s9
  // Predicated region
  $region2: #{up_forward.1} parent=0 // pred_check
    _
  $region3: #{up_forward.1} parent=0 // pred_check_branch
    %14 = sbr.rel (0) target = $region5
  $region4: #{up_forward.1} parent=0 // pred_region
    _
  $region5: #{up_forward.1} parent=0 // pred_fallthru
    _
  // Predicated region
  $region6: #{up_forward.1} parent=0 // pred_check
    _
  $region7: #{up_forward.1} parent=0 // pred_check_branch
    %16 = sbr.rel (0) target = $region9
  $region8: #{up_forward.1} parent=0 // pred_region
    _
  $region9: #{up_forward.1} parent=0 // pred_fallthru
    _
  // Predicated region
  $region10: #{up_forward.1} parent=0 // pred_check
    _
  $region11: #{up_forward.1} parent=0 // pred_check_branch
    %18 = sbr.rel (0) target = $region13
  $region12: #{up_forward.1} parent=0 // pred_region
    _
  $region13: #{up_forward.1} parent=0 // pred_fallthru
    _
  // Predicated region
  $region14: #{up_forward.1} parent=0 // pred_check
    _
  $region15: #{up_forward.1} parent=0 // pred_check_branch
    %20 = sbr.rel (0) target = $region17
  $region16: #{up_forward.1} parent=0 // pred_region
    _
  $region17: #{up_forward.1} parent=0 // pred_fallthru
    _
  // Predicated region
  $region18: #{up_forward.1} parent=0 // pred_check
    _
  $region19: #{up_forward.1} parent=0 // pred_check_branch
    %22 = sbr.rel (0) target = $region21
  $region20: #{up_forward.1} parent=0 // pred_region
    _
  $region21: #{up_forward.1} parent=0 // pred_fallthru
    _
  // Predicated region
  $region22: #{up_forward.1} parent=0 // pred_check
    _
  $region23: #{up_forward.1} parent=0 // pred_check_branch
    %24 = sbr.rel (0) target = $region25
  $region24: #{up_forward.1} parent=0 // pred_region
    _
  $region25: #{up_forward.1} parent=0 // pred_fallthru
    _
  // Predicated region
  $region26: #{up_forward.1} parent=0 // pred_check
    _
  $region27: #{up_forward.1} parent=0 // pred_check_branch
    %26 = sbr.rel (0) target = $region29
  $region28: #{up_forward.1} parent=0 // pred_region
    _
  $region29: #{up_forward.1} parent=0 // pred_fallthru
    _
  // Predicated region
  $region30: #{up_forward.1} parent=0 // pred_check
    _
  $region31: #{up_forward.1} parent=0 // pred_check_branch
    %28 = sbr.rel (0) target = $region33
  $region32: #{up_forward.1} parent=0 // pred_region
    _
  $region33: #{up_forward.1} parent=0 // pred_fallthru
    _
  %v29 = vld [vmem:[%s3] sm:$0xff]
  %v30 = vld [vmem:[%s3 + $0x8] sm:$0xff]
  %v31 = vld [vmem:[%s3 + $0x10] sm:$0x1]
  %v32 = vld [vmem:[%s3 + $0x18] sm:$0x1]
  %v33 = vlaneseq
  %v34 = vshrl.u32 %v33, 7
  %v35 = vsub.s32 0, %v34
  %v36 = vrot.slane %v29, %v35
  %v37 = vlaneseq
  %v38 = vshrl.u32 %v37, 7
  %v39 = vsub.s32 0, %v38
  %v40 = vrot.slane %v30, %v39
  %v41 = vlaneseq
  %v42 = vshrl.u32 %v41, 7
  %v43 = vsub.s32 1, %v42
  %v44 = vrot.slane %v29, %v43
  %v45 = vlaneseq
  %v46 = vshrl.u32 %v45, 7
  %v47 = vsub.s32 1, %v46
  %v48 = vrot.slane %v30, %v47
  %v49 = vlaneseq
  %v50 = vshrl.u32 %v49, 7
  %v51 = vsub.s32 2, %v50
  %v52 = vrot.slane %v29, %v51
  %v53 = vlaneseq
  %v54 = vshrl.u32 %v53, 7
  %v55 = vsub.s32 2, %v54
  %v56 = vrot.slane %v30, %v55
  %v57 = vlaneseq
  %v58 = vshrl.u32 %v57, 7
  %v59 = vsub.s32 3, %v58
  %v60 = vrot.slane %v29, %v59
  %v61 = vlaneseq
  %v62 = vshrl.u32 %v61, 7
  %v63 = vsub.s32 3, %v62
  %v64 = vrot.slane %v30, %v63
  %v65 = vlaneseq
  %v66 = vshrl.u32 %v65, 7
  %v67 = vsub.s32 5, %v66
  %v68 = vrot.slane %v29, %v67
  %v69 = vlaneseq
  %v70 = vshrl.u32 %v69, 7
  %v71 = vsub.s32 5, %v70
  %v72 = vrot.slane %v30, %v71
  %v73 = vlaneseq
  %v74 = vshrl.u32 %v73, 7
  %v75 = vsub.s32 6, %v74
  %v76 = vrot.slane %v29, %v75
  %v77 = vlaneseq
  %v78 = vshrl.u32 %v77, 7
  %v79 = vsub.s32 6, %v78
  %v80 = vrot.slane %v30, %v79
  %v81 = vlaneseq
  %v82 = vshrl.u32 %v81, 7
  %v83 = vsub.s32 7, %v82
  %v84 = vrot.slane %v29, %v83
  %v85 = vlaneseq
  %v86 = vshrl.u32 %v85, 7
  %v87 = vsub.s32 7, %v86
  %v88 = vrot.slane %v30, %v87
  %v89 = vlaneseq
  %v90 = vshrl.u32 %v89, 7
  %v91 = vsub.s32 0, %v90
  %v92 = vrot.slane %v31, %v91
  %v93 = vlaneseq
  %v94 = vshrl.u32 %v93, 7
  %v95 = vsub.s32 0, %v94
  %v96 = vrot.slane %v32, %v95
  %v97 = vld [vmem:[%s2] sm:$0xff]
  %v98 = vld [vmem:[%s2 + $0x8] sm:$0xff]
  %v99 = vld [vmem:[%s2 + $0x10] sm:$0xff]
  %v100 = vld [vmem:[%s2 + $0x18] sm:$0xff]
  %v101 = vld [vmem:[%s2 + $0x20] sm:$0xff]
  %v102 = vld [vmem:[%s2 + $0x28] sm:$0xff]
  %v103 = vld [vmem:[%s2 + $0x30] sm:$0xff]
  %v104 = vld [vmem:[%s2 + $0x38] sm:$0xff]
  %v105 = vld [vmem:[%s2 + $0x40] sm:$0xff]
  %v106 = vld [vmem:[%s2 + $0x48] sm:$0xff]
  %v107 = vld [vmem:[%s2 + $0x50] sm:$0xff]
  %v108 = vld [vmem:[%s2 + $0x58] sm:$0xff]
  %v109 = vld [vmem:[%s2 + $0x60] sm:$0xff]
  %v110 = vld [vmem:[%s2 + $0x68] sm:$0xff]
  %v111 = vld [vmem:[%s2 + $0x70] sm:$0xff]
  %v112 = vld [vmem:[%s2 + $0x78] sm:$0xff]
  %v113 = vld [vmem:[%s0] sm:$0xf]
  %vm114 = vcmask 523264
  %v116 = vsel %vm114, %v113, 0
  %118 = vmatprep.subr.mxu0 %v98
  %119 = vmatpush1.msra.mxu0 %v97
  %120 = vmatprep.subr.mxu0 %v100
  %121 = vmatpush1.msra.mxu0 %v99
  %122 = vmatprep.subr.mxu0 %v102
  %123 = vmatpush1.msra.mxu0 %v101
  %124 = vmatprep.subr.mxu0 %v104
  %125 = vmatpush1.msra.mxu0 %v103
  %126 = vmatprep.subr.mxu0 %v106
  %127 = vmatpush1.msra.mxu0 %v105
  %128 = vmatprep.subr.mxu0 %v108
  %129 = vmatpush1.msra.mxu0 %v107
  %130 = vmatprep.subr.mxu0 %v110
  %131 = vmatpush1.msra.mxu0 %v109
  %132 = vmatprep.subr.mxu0 %v112
  %133 = vmatpush1.msra.mxu0 %v111
  %134 = vmatprep.subr.mxu0 0.0
  %135 = vmatpush1.msra.mxu0 0.0
  %136 = vmatprep.subr.mxu0 0.0
  %137 = vmatpush1.msra.mxu0 0.0
  %138 = vmatprep.subr.mxu0 0.0
  %139 = vmatpush1.msra.mxu0 0.0
  %140 = vmatprep.subr.mxu0 0.0
  %141 = vmatpush1.msra.mxu0 0.0
  %142 = vmatprep.subr.mxu0 0.0
  %143 = vmatpush1.msra.mxu0 0.0
  %144 = vmatprep.subr.mxu0 0.0
  %145 = vmatpush1.msra.mxu0 0.0
  %146 = vmatprep.subr.mxu0 0.0
  %147 = vmatpush1.msra.mxu0 0.0
  %148 = vmatprep.subr.mxu0 0.0
  %149 = vmatpush1.msra.mxu0 0.0
  %150 = vmatprep.subr.mxu0 0.0
  %151 = vmatpush1.msra.mxu0 0.0
  %152 = vmatprep.subr.mxu0 0.0
  %153 = vmatpush1.msra.mxu0 0.0
  %154 = vmatprep.subr.mxu0 0.0
  %155 = vmatpush1.msra.mxu0 0.0
  %156 = vmatprep.subr.mxu0 0.0
  %157 = vmatpush1.msra.mxu0 0.0
  %158 = vmatprep.subr.mxu0 0.0
  %159 = vmatpush1.msra.mxu0 0.0
  %160 = vmatprep.subr.mxu0 0.0
  %161 = vmatpush1.msra.mxu0 0.0
  %162 = vmatprep.subr.mxu0 0.0
  %163 = vmatpush1.msra.mxu0 0.0
  %164 = vmatprep.subr.mxu0 0.0
  %165 = vmatpush1.msra.mxu0 0.0
  %166 = vmatprep.subr.mxu0 0.0
  %167 = vmatpush1.msra.mxu0 0.0
  %168 = vmatprep.subr.mxu0 0.0
  %169 = vmatpush1.msra.mxu0 0.0
  %170 = vmatprep.subr.mxu0 0.0
  %171 = vmatpush1.msra.mxu0 0.0
  %172 = vmatprep.subr.mxu0 0.0
  %173 = vmatpush1.msra.mxu0 0.0
  %174 = vmatprep.subr.mxu0 0.0
  %175 = vmatpush1.msra.mxu0 0.0
  %176 = vmatprep.subr.mxu0 0.0
  %177 = vmatpush1.msra.mxu0 0.0
  %178 = vmatprep.subr.mxu0 0.0
  %179 = vmatpush1.msra.mxu0 0.0
  %180 = vmatprep.subr.mxu0 0.0
  %181 = vmatpush1.msra.mxu0 0.0
  %182 = vmatprep.mubr.f32.mxu0 0.0
  %183 = vmatmul.mubr.f32.gmra.mrb[0].mxu0 %v116
  %v184 = vpop.f32.mrb[0].mxu0
  %v185 = vadd.f32 0.0, %v184
  %v186 = vpop.f32.mrb[0].mxu0
  %v187 = vadd.f32 0.0, %v186
  %188 = vdwg.mxu0
  %v189 = vld [vmem:[%s1] sm:$0xff]
  %v191 = vcombine.low %v189, %v189
  %vm193 = vcmask 1043456
  %v194 = vsel %vm193, %v185, %v191
  %v195 = vsel %vm193, %v187, %v189
  %v196 = vld [vmem:[%s5] sm:$0xff]
  %198 = vset.pattern.permute.xlu0 0
  %199 = vperm.xlu0 %198, %v196
  %v200 = vpop.permute.xlu0 %199
  %202 = vrot.lane.b32.xlu0 %v194, 17
  %v203 = vpop.permute.xlu0 %202
  %204 = vrot.lane.b32.xlu0 %v195, 17
  %v205 = vpop.permute.xlu0 %204
  %v206 = vlaneseq
  %v207 = vand.u32 %v206, 127
  %vm208 = vcmp.lt.s32.totalorder %v207, 17
  %v209 = vsel %vm208, %v203, %v205
  %v210 = vsel %vm208, %v205, %v203
  %v211 = vmul.f32 %v210, %v36
  %v212 = vmul.f32 %v209, %v40
  %v213 = vld [vmem:[%s4] sm:$0xff]
  %vm214 = vcmask 64512
  %v216 = vsel %vm214, %v213, 0
  %218 = vmatprep.subr.mxu0 %v212
  %219 = vmatpush1.msra.mxu0 %v211
  %220 = vmatprep.subr.mxu0 0.0
  %221 = vmatpush1.msra.mxu0 0.0
  %222 = vmatprep.subr.mxu0 0.0
  %223 = vmatpush1.msra.mxu0 0.0
  %224 = vmatprep.subr.mxu0 0.0
  %225 = vmatpush1.msra.mxu0 0.0
  %226 = vmatprep.subr.mxu0 0.0
  %227 = vmatpush1.msra.mxu0 0.0
  %228 = vmatprep.subr.mxu0 0.0
  %229 = vmatpush1.msra.mxu0 0.0
  %230 = vmatprep.subr.mxu0 0.0
  %231 = vmatpush1.msra.mxu0 0.0
  %232 = vmatprep.subr.mxu0 0.0
  %233 = vmatpush1.msra.mxu0 0.0
  %234 = vmatprep.subr.mxu0 0.0
  %235 = vmatpush1.msra.mxu0 0.0
  %236 = vmatprep.subr.mxu0 0.0
  %237 = vmatpush1.msra.mxu0 0.0
  %238 = vmatprep.subr.mxu0 0.0
  %239 = vmatpush1.msra.mxu0 0.0
  %240 = vmatprep.subr.mxu0 0.0
  %241 = vmatpush1.msra.mxu0 0.0
  %242 = vmatprep.subr.mxu0 0.0
  %243 = vmatpush1.msra.mxu0 0.0
  %244 = vmatprep.subr.mxu0 0.0
  %245 = vmatpush1.msra.mxu0 0.0
  %246 = vmatprep.subr.mxu0 0.0
  %247 = vmatpush1.msra.mxu0 0.0
  %248 = vmatprep.subr.mxu0 0.0
  %249 = vmatpush1.msra.mxu0 0.0
  %250 = vmatprep.subr.mxu0 0.0
  %251 = vmatpush1.msra.mxu0 0.0
  %252 = vmatprep.subr.mxu0 0.0
  %253 = vmatpush1.msra.mxu0 0.0
  %254 = vmatprep.subr.mxu0 0.0
  %255 = vmatpush1.msra.mxu0 0.0
  %256 = vmatprep.subr.mxu0 0.0
  %257 = vmatpush1.msra.mxu0 0.0
  %258 = vmatprep.subr.mxu0 0.0
  %259 = vmatpush1.msra.mxu0 0.0
  %260 = vmatprep.subr.mxu0 0.0
  %261 = vmatpush1.msra.mxu0 0.0
  %262 = vmatprep.subr.mxu0 0.0
  %263 = vmatpush1.msra.mxu0 0.0
  %264 = vmatprep.subr.mxu0 0.0
  %265 = vmatpush1.msra.mxu0 0.0
  %266 = vmatprep.subr.mxu0 0.0
  %267 = vmatpush1.msra.mxu0 0.0
  %268 = vmatprep.subr.mxu0 0.0
  %269 = vmatpush1.msra.mxu0 0.0
  %270 = vmatprep.subr.mxu0 0.0
  %271 = vmatpush1.msra.mxu0 0.0
  %272 = vmatprep.subr.mxu0 0.0
  %273 = vmatpush1.msra.mxu0 0.0
  %274 = vmatprep.subr.mxu0 0.0
  %275 = vmatpush1.msra.mxu0 0.0
  %276 = vmatprep.subr.mxu0 0.0
  %277 = vmatpush1.msra.mxu0 0.0
  %278 = vmatprep.subr.mxu0 0.0
  %279 = vmatpush1.msra.mxu0 0.0
  %280 = vmatprep.subr.mxu0 0.0
  %281 = vmatpush1.msra.mxu0 0.0
  %282 = vmatprep.mubr.f32.mxu0 0.0
  %283 = vmatmul.mubr.f32.gmra.mrb[0].mxu0 %v216
  %v284 = vpop.f32.mrb[0].mxu0
  %v285 = vadd.f32 0.0, %v284
  %v286 = vpop.f32.mrb[0].mxu0
  %v287 = vadd.f32 0.0, %v286
  %288 = vdwg.mxu0
  %v289 = vadd.f32 %v200, %v285
  %v290 = vadd.f32 %v200, %v287
  %291 = vrot.lane.b32.xlu0 %v194, 16
  %v292 = vpop.permute.xlu0 %291
  %293 = vrot.lane.b32.xlu0 %v195, 16
  %v294 = vpop.permute.xlu0 %293
  %vm295 = vcmp.lt.s32.totalorder %v207, 16
  %v296 = vsel %vm295, %v292, %v294
  %v297 = vsel %vm295, %v294, %v292
  %v298 = vmul.f32 %v297, %v44
  %v299 = vmul.f32 %v296, %v48
  %s300 = scalar_lea.vmem %s4, 8
  %v301 = vld [vmem:[%s300] sm:$0xff]
  %v303 = vsel %vm214, %v301, 0
  %305 = vmatprep.subr.mxu0 %v299
  %306 = vmatpush1.msra.mxu0 %v298
  %307 = vmatprep.subr.mxu0 0.0
  %308 = vmatpush1.msra.mxu0 0.0
  %309 = vmatprep.subr.mxu0 0.0
  %310 = vmatpush1.msra.mxu0 0.0
  %311 = vmatprep.subr.mxu0 0.0
  %312 = vmatpush1.msra.mxu0 0.0
  %313 = vmatprep.subr.mxu0 0.0
  %314 = vmatpush1.msra.mxu0 0.0
  %315 = vmatprep.subr.mxu0 0.0
  %316 = vmatpush1.msra.mxu0 0.0
  %317 = vmatprep.subr.mxu0 0.0
  %318 = vmatpush1.msra.mxu0 0.0
  %319 = vmatprep.subr.mxu0 0.0
  %320 = vmatpush1.msra.mxu0 0.0
  %321 = vmatprep.subr.mxu0 0.0
  %322 = vmatpush1.msra.mxu0 0.0
  %323 = vmatprep.subr.mxu0 0.0
  %324 = vmatpush1.msra.mxu0 0.0
  %325 = vmatprep.subr.mxu0 0.0
  %326 = vmatpush1.msra.mxu0 0.0
  %327 = vmatprep.subr.mxu0 0.0
  %328 = vmatpush1.msra.mxu0 0.0
  %329 = vmatprep.subr.mxu0 0.0
  %330 = vmatpush1.msra.mxu0 0.0
  %331 = vmatprep.subr.mxu0 0.0
  %332 = vmatpush1.msra.mxu0 0.0
  %333 = vmatprep.subr.mxu0 0.0
  %334 = vmatpush1.msra.mxu0 0.0
  %335 = vmatprep.subr.mxu0 0.0
  %336 = vmatpush1.msra.mxu0 0.0
  %337 = vmatprep.subr.mxu0 0.0
  %338 = vmatpush1.msra.mxu0 0.0
  %339 = vmatprep.subr.mxu0 0.0
  %340 = vmatpush1.msra.mxu0 0.0
  %341 = vmatprep.subr.mxu0 0.0
  %342 = vmatpush1.msra.mxu0 0.0
  %343 = vmatprep.subr.mxu0 0.0
  %344 = vmatpush1.msra.mxu0 0.0
  %345 = vmatprep.subr.mxu0 0.0
  %346 = vmatpush1.msra.mxu0 0.0
  %347 = vmatprep.subr.mxu0 0.0
  %348 = vmatpush1.msra.mxu0 0.0
  %349 = vmatprep.subr.mxu0 0.0
  %350 = vmatpush1.msra.mxu0 0.0
  %351 = vmatprep.subr.mxu0 0.0
  %352 = vmatpush1.msra.mxu0 0.0
  %353 = vmatprep.subr.mxu0 0.0
  %354 = vmatpush1.msra.mxu0 0.0
  %355 = vmatprep.subr.mxu0 0.0
  %356 = vmatpush1.msra.mxu0 0.0
  %357 = vmatprep.subr.mxu0 0.0
  %358 = vmatpush1.msra.mxu0 0.0
  %359 = vmatprep.subr.mxu0 0.0
  %360 = vmatpush1.msra.mxu0 0.0
  %361 = vmatprep.subr.mxu0 0.0
  %362 = vmatpush1.msra.mxu0 0.0
  %363 = vmatprep.subr.mxu0 0.0
  %364 = vmatpush1.msra.mxu0 0.0
  %365 = vmatprep.subr.mxu0 0.0
  %366 = vmatpush1.msra.mxu0 0.0
  %367 = vmatprep.subr.mxu0 0.0
  %368 = vmatpush1.msra.mxu0 0.0
  %369 = vmatprep.mubr.f32.mxu0 0.0
  %370 = vmatmul.mubr.f32.gmra.mrb[0].mxu0 %v303
  %v371 = vpop.f32.mrb[0].mxu0
  %v372 = vadd.f32 0.0, %v371
  %v373 = vpop.f32.mrb[0].mxu0
  %v374 = vadd.f32 0.0, %v373
  %375 = vdwg.mxu0
  %v376 = vadd.f32 %v289, %v372
  %v377 = vadd.f32 %v290, %v374
  %378 = vrot.lane.b32.xlu0 %v194, 15
  %v379 = vpop.permute.xlu0 %378
  %380 = vrot.lane.b32.xlu0 %v195, 15
  %v381 = vpop.permute.xlu0 %380
  %vm382 = vcmp.lt.s32.totalorder %v207, 15
  %v383 = vsel %vm382, %v379, %v381
  %v384 = vsel %vm382, %v381, %v379
  %v385 = vmul.f32 %v384, %v52
  %v386 = vmul.f32 %v383, %v56
  %s387 = scalar_lea.vmem %s4, 16
  %v388 = vld [vmem:[%s387] sm:$0xff]
  %v390 = vsel %vm214, %v388, 0
  %392 = vmatprep.subr.mxu0 %v386
  %393 = vmatpush1.msra.mxu0 %v385
  %394 = vmatprep.subr.mxu0 0.0
  %395 = vmatpush1.msra.mxu0 0.0
  %396 = vmatprep.subr.mxu0 0.0
  %397 = vmatpush1.msra.mxu0 0.0
  %398 = vmatprep.subr.mxu0 0.0
  %399 = vmatpush1.msra.mxu0 0.0
  %400 = vmatprep.subr.mxu0 0.0
  %401 = vmatpush1.msra.mxu0 0.0
  %402 = vmatprep.subr.mxu0 0.0
  %403 = vmatpush1.msra.mxu0 0.0
  %404 = vmatprep.subr.mxu0 0.0
  %405 = vmatpush1.msra.mxu0 0.0
  %406 = vmatprep.subr.mxu0 0.0
  %407 = vmatpush1.msra.mxu0 0.0
  %408 = vmatprep.subr.mxu0 0.0
  %409 = vmatpush1.msra.mxu0 0.0
  %410 = vmatprep.subr.mxu0 0.0
  %411 = vmatpush1.msra.mxu0 0.0
  %412 = vmatprep.subr.mxu0 0.0
  %413 = vmatpush1.msra.mxu0 0.0
  %414 = vmatprep.subr.mxu0 0.0
  %415 = vmatpush1.msra.mxu0 0.0
  %416 = vmatprep.subr.mxu0 0.0
  %417 = vmatpush1.msra.mxu0 0.0
  %418 = vmatprep.subr.mxu0 0.0
  %419 = vmatpush1.msra.mxu0 0.0
  %420 = vmatprep.subr.mxu0 0.0
  %421 = vmatpush1.msra.mxu0 0.0
  %422 = vmatprep.subr.mxu0 0.0
  %423 = vmatpush1.msra.mxu0 0.0
  %424 = vmatprep.subr.mxu0 0.0
  %425 = vmatpush1.msra.mxu0 0.0
  %426 = vmatprep.subr.mxu0 0.0
  %427 = vmatpush1.msra.mxu0 0.0
  %428 = vmatprep.subr.mxu0 0.0
  %429 = vmatpush1.msra.mxu0 0.0
  %430 = vmatprep.subr.mxu0 0.0
  %431 = vmatpush1.msra.mxu0 0.0
  %432 = vmatprep.subr.mxu0 0.0
  %433 = vmatpush1.msra.mxu0 0.0
  %434 = vmatprep.subr.mxu0 0.0
  %435 = vmatpush1.msra.mxu0 0.0
  %436 = vmatprep.subr.mxu0 0.0
  %437 = vmatpush1.msra.mxu0 0.0
  %438 = vmatprep.subr.mxu0 0.0
  %439 = vmatpush1.msra.mxu0 0.0
  %440 = vmatprep.subr.mxu0 0.0
  %441 = vmatpush1.msra.mxu0 0.0
  %442 = vmatprep.subr.mxu0 0.0
  %443 = vmatpush1.msra.mxu0 0.0
  %444 = vmatprep.subr.mxu0 0.0
  %445 = vmatpush1.msra.mxu0 0.0
  %446 = vmatprep.subr.mxu0 0.0
  %447 = vmatpush1.msra.mxu0 0.0
  %448 = vmatprep.subr.mxu0 0.0
  %449 = vmatpush1.msra.mxu0 0.0
  %450 = vmatprep.subr.mxu0 0.0
  %451 = vmatpush1.msra.mxu0 0.0
  %452 = vmatprep.subr.mxu0 0.0
  %453 = vmatpush1.msra.mxu0 0.0
  %454 = vmatprep.subr.mxu0 0.0
  %455 = vmatpush1.msra.mxu0 0.0
  %456 = vmatprep.mubr.f32.mxu0 0.0
  %457 = vmatmul.mubr.f32.gmra.mrb[0].mxu0 %v390
  %v458 = vpop.f32.mrb[0].mxu0
  %v459 = vadd.f32 0.0, %v458
  %v460 = vpop.f32.mrb[0].mxu0
  %v461 = vadd.f32 0.0, %v460
  %462 = vdwg.mxu0
  %v463 = vadd.f32 %v376, %v459
  %v464 = vadd.f32 %v377, %v461
  %465 = vrot.lane.b32.xlu0 %v194, 1
  %v466 = vpop.permute.xlu0 %465
  %467 = vrot.lane.b32.xlu0 %v195, 1
  %v468 = vpop.permute.xlu0 %467
  %vm469 = vcmp.lt.s32.totalorder %v207, 1
  %v470 = vsel %vm469, %v466, %v468
  %v471 = vsel %vm469, %v468, %v466
  %v472 = vmul.f32 %v471, %v60
  %v473 = vmul.f32 %v470, %v64
  %s474 = scalar_lea.vmem %s4, 24
  %v475 = vld [vmem:[%s474] sm:$0xff]
  %v477 = vsel %vm214, %v475, 0
  %479 = vmatprep.subr.mxu0 %v473
  %480 = vmatpush1.msra.mxu0 %v472
  %481 = vmatprep.subr.mxu0 0.0
  %482 = vmatpush1.msra.mxu0 0.0
  %483 = vmatprep.subr.mxu0 0.0
  %484 = vmatpush1.msra.mxu0 0.0
  %485 = vmatprep.subr.mxu0 0.0
  %486 = vmatpush1.msra.mxu0 0.0
  %487 = vmatprep.subr.mxu0 0.0
  %488 = vmatpush1.msra.mxu0 0.0
  %489 = vmatprep.subr.mxu0 0.0
  %490 = vmatpush1.msra.mxu0 0.0
  %491 = vmatprep.subr.mxu0 0.0
  %492 = vmatpush1.msra.mxu0 0.0
  %493 = vmatprep.subr.mxu0 0.0
  %494 = vmatpush1.msra.mxu0 0.0
  %495 = vmatprep.subr.mxu0 0.0
  %496 = vmatpush1.msra.mxu0 0.0
  %497 = vmatprep.subr.mxu0 0.0
  %498 = vmatpush1.msra.mxu0 0.0
  %499 = vmatprep.subr.mxu0 0.0
  %500 = vmatpush1.msra.mxu0 0.0
  %501 = vmatprep.subr.mxu0 0.0
  %502 = vmatpush1.msra.mxu0 0.0
  %503 = vmatprep.subr.mxu0 0.0
  %504 = vmatpush1.msra.mxu0 0.0
  %505 = vmatprep.subr.mxu0 0.0
  %506 = vmatpush1.msra.mxu0 0.0
  %507 = vmatprep.subr.mxu0 0.0
  %508 = vmatpush1.msra.mxu0 0.0
  %509 = vmatprep.subr.mxu0 0.0
  %510 = vmatpush1.msra.mxu0 0.0
  %511 = vmatprep.subr.mxu0 0.0
  %512 = vmatpush1.msra.mxu0 0.0
  %513 = vmatprep.subr.mxu0 0.0
  %514 = vmatpush1.msra.mxu0 0.0
  %515 = vmatprep.subr.mxu0 0.0
  %516 = vmatpush1.msra.mxu0 0.0
  %517 = vmatprep.subr.mxu0 0.0
  %518 = vmatpush1.msra.mxu0 0.0
  %519 = vmatprep.subr.mxu0 0.0
  %520 = vmatpush1.msra.mxu0 0.0
  %521 = vmatprep.subr.mxu0 0.0
  %522 = vmatpush1.msra.mxu0 0.0
  %523 = vmatprep.subr.mxu0 0.0
  %524 = vmatpush1.msra.mxu0 0.0
  %525 = vmatprep.subr.mxu0 0.0
  %526 = vmatpush1.msra.mxu0 0.0
  %527 = vmatprep.subr.mxu0 0.0
  %528 = vmatpush1.msra.mxu0 0.0
  %529 = vmatprep.subr.mxu0 0.0
  %530 = vmatpush1.msra.mxu0 0.0
  %531 = vmatprep.subr.mxu0 0.0
  %532 = vmatpush1.msra.mxu0 0.0
  %533 = vmatprep.subr.mxu0 0.0
  %534 = vmatpush1.msra.mxu0 0.0
  %535 = vmatprep.subr.mxu0 0.0
  %536 = vmatpush1.msra.mxu0 0.0
  %537 = vmatprep.subr.mxu0 0.0
  %538 = vmatpush1.msra.mxu0 0.0
  %539 = vmatprep.subr.mxu0 0.0
  %540 = vmatpush1.msra.mxu0 0.0
  %541 = vmatprep.subr.mxu0 0.0
  %542 = vmatpush1.msra.mxu0 0.0
  %543 = vmatprep.mubr.f32.mxu0 0.0
  %544 = vmatmul.mubr.f32.gmra.mrb[0].mxu0 %v477
  %v545 = vpop.f32.mrb[0].mxu0
  %v546 = vadd.f32 0.0, %v545
  %v547 = vpop.f32.mrb[0].mxu0
  %v548 = vadd.f32 0.0, %v547
  %549 = vdwg.mxu0
  %v550 = vadd.f32 %v463, %v546
  %v551 = vadd.f32 %v464, %v548
  %s552 = scalar_lea.vmem %s4, 32
  %v553 = vld [vmem:[%s552] sm:$0xff]
  %v555 = vsel %vm214, %v553, 0
  %557 = vmatprep.subr.mxu0 %v195
  %558 = vmatpush1.msra.mxu0 %v194
  %559 = vmatprep.subr.mxu0 0.0
  %560 = vmatpush1.msra.mxu0 0.0
  %561 = vmatprep.subr.mxu0 0.0
  %562 = vmatpush1.msra.mxu0 0.0
  %563 = vmatprep.subr.mxu0 0.0
  %564 = vmatpush1.msra.mxu0 0.0
  %565 = vmatprep.subr.mxu0 0.0
  %566 = vmatpush1.msra.mxu0 0.0
  %567 = vmatprep.subr.mxu0 0.0
  %568 = vmatpush1.msra.mxu0 0.0
  %569 = vmatprep.subr.mxu0 0.0
  %570 = vmatpush1.msra.mxu0 0.0
  %571 = vmatprep.subr.mxu0 0.0
  %572 = vmatpush1.msra.mxu0 0.0
  %573 = vmatprep.subr.mxu0 0.0
  %574 = vmatpush1.msra.mxu0 0.0
  %575 = vmatprep.subr.mxu0 0.0
  %576 = vmatpush1.msra.mxu0 0.0
  %577 = vmatprep.subr.mxu0 0.0
  %578 = vmatpush1.msra.mxu0 0.0
  %579 = vmatprep.subr.mxu0 0.0
  %580 = vmatpush1.msra.mxu0 0.0
  %581 = vmatprep.subr.mxu0 0.0
  %582 = vmatpush1.msra.mxu0 0.0
  %583 = vmatprep.subr.mxu0 0.0
  %584 = vmatpush1.msra.mxu0 0.0
  %585 = vmatprep.subr.mxu0 0.0
  %586 = vmatpush1.msra.mxu0 0.0
  %587 = vmatprep.subr.mxu0 0.0
  %588 = vmatpush1.msra.mxu0 0.0
  %589 = vmatprep.subr.mxu0 0.0
  %590 = vmatpush1.msra.mxu0 0.0
  %591 = vmatprep.subr.mxu0 0.0
  %592 = vmatpush1.msra.mxu0 0.0
  %593 = vmatprep.subr.mxu0 0.0
  %594 = vmatpush1.msra.mxu0 0.0
  %595 = vmatprep.subr.mxu0 0.0
  %596 = vmatpush1.msra.mxu0 0.0
  %597 = vmatprep.subr.mxu0 0.0
  %598 = vmatpush1.msra.mxu0 0.0
  %599 = vmatprep.subr.mxu0 0.0
  %600 = vmatpush1.msra.mxu0 0.0
  %601 = vmatprep.subr.mxu0 0.0
  %602 = vmatpush1.msra.mxu0 0.0
  %603 = vmatprep.subr.mxu0 0.0
  %604 = vmatpush1.msra.mxu0 0.0
  %605 = vmatprep.subr.mxu0 0.0
  %606 = vmatpush1.msra.mxu0 0.0
  %607 = vmatprep.subr.mxu0 0.0
  %608 = vmatpush1.msra.mxu0 0.0
  %609 = vmatprep.subr.mxu0 0.0
  %610 = vmatpush1.msra.mxu0 0.0
  %611 = vmatprep.subr.mxu0 0.0
  %612 = vmatpush1.msra.mxu0 0.0
  %613 = vmatprep.subr.mxu0 0.0
  %614 = vmatpush1.msra.mxu0 0.0
  %615 = vmatprep.subr.mxu0 0.0
  %616 = vmatpush1.msra.mxu0 0.0
  %617 = vmatprep.subr.mxu0 0.0
  %618 = vmatpush1.msra.mxu0 0.0
  %619 = vmatprep.subr.mxu0 0.0
  %620 = vmatpush1.msra.mxu0 0.0
  %621 = vmatprep.mubr.f32.mxu0 0.0
  %622 = vmatmul.mubr.f32.gmra.mrb[0].mxu0 %v555
  %v623 = vpop.f32.mrb[0].mxu0
  %v624 = vadd.f32 0.0, %v623
  %v625 = vpop.f32.mrb[0].mxu0
  %v626 = vadd.f32 0.0, %v625
  %627 = vdwg.mxu0
  %v628 = vadd.f32 %v550, %v624
  %v629 = vadd.f32 %v551, %v626
  %630 = vrot.lane.b32.xlu0 %v194, 127
  %v631 = vpop.permute.xlu0 %630
  %632 = vrot.lane.b32.xlu0 %v195, 127
  %v633 = vpop.permute.xlu0 %632
  %vm634 = vcmp.lt.s32.totalorder %v207, 127
  %v635 = vsel %vm634, %v631, %v633
  %v636 = vsel %vm634, %v633, %v631
  %v637 = vmul.f32 %v635, %v68
  %v638 = vmul.f32 %v636, %v72
  %s639 = scalar_lea.vmem %s4, 40
  %v640 = vld [vmem:[%s639] sm:$0xff]
  %v642 = vsel %vm214, %v640, 0
  %644 = vmatprep.subr.mxu0 %v638
  %645 = vmatpush1.msra.mxu0 %v637
  %646 = vmatprep.subr.mxu0 0.0
  %647 = vmatpush1.msra.mxu0 0.0
  %648 = vmatprep.subr.mxu0 0.0
  %649 = vmatpush1.msra.mxu0 0.0
  %650 = vmatprep.subr.mxu0 0.0
  %651 = vmatpush1.msra.mxu0 0.0
  %652 = vmatprep.subr.mxu0 0.0
  %653 = vmatpush1.msra.mxu0 0.0
  %654 = vmatprep.subr.mxu0 0.0
  %655 = vmatpush1.msra.mxu0 0.0
  %656 = vmatprep.subr.mxu0 0.0
  %657 = vmatpush1.msra.mxu0 0.0
  %658 = vmatprep.subr.mxu0 0.0
  %659 = vmatpush1.msra.mxu0 0.0
  %660 = vmatprep.subr.mxu0 0.0
  %661 = vmatpush1.msra.mxu0 0.0
  %662 = vmatprep.subr.mxu0 0.0
  %663 = vmatpush1.msra.mxu0 0.0
  %664 = vmatprep.subr.mxu0 0.0
  %665 = vmatpush1.msra.mxu0 0.0
  %666 = vmatprep.subr.mxu0 0.0
  %667 = vmatpush1.msra.mxu0 0.0
  %668 = vmatprep.subr.mxu0 0.0
  %669 = vmatpush1.msra.mxu0 0.0
  %670 = vmatprep.subr.mxu0 0.0
  %671 = vmatpush1.msra.mxu0 0.0
  %672 = vmatprep.subr.mxu0 0.0
  %673 = vmatpush1.msra.mxu0 0.0
  %674 = vmatprep.subr.mxu0 0.0
  %675 = vmatpush1.msra.mxu0 0.0
  %676 = vmatprep.subr.mxu0 0.0
  %677 = vmatpush1.msra.mxu0 0.0
  %678 = vmatprep.subr.mxu0 0.0
  %679 = vmatpush1.msra.mxu0 0.0
  %680 = vmatprep.subr.mxu0 0.0
  %681 = vmatpush1.msra.mxu0 0.0
  %682 = vmatprep.subr.mxu0 0.0
  %683 = vmatpush1.msra.mxu0 0.0
  %684 = vmatprep.subr.mxu0 0.0
  %685 = vmatpush1.msra.mxu0 0.0
  %686 = vmatprep.subr.mxu0 0.0
  %687 = vmatpush1.msra.mxu0 0.0
  %688 = vmatprep.subr.mxu0 0.0
  %689 = vmatpush1.msra.mxu0 0.0
  %690 = vmatprep.subr.mxu0 0.0
  %691 = vmatpush1.msra.mxu0 0.0
  %692 = vmatprep.subr.mxu0 0.0
  %693 = vmatpush1.msra.mxu0 0.0
  %694 = vmatprep.subr.mxu0 0.0
  %695 = vmatpush1.msra.mxu0 0.0
  %696 = vmatprep.subr.mxu0 0.0
  %697 = vmatpush1.msra.mxu0 0.0
  %698 = vmatprep.subr.mxu0 0.0
  %699 = vmatpush1.msra.mxu0 0.0
  %700 = vmatprep.subr.mxu0 0.0
  %701 = vmatpush1.msra.mxu0 0.0
  %702 = vmatprep.subr.mxu0 0.0
  %703 = vmatpush1.msra.mxu0 0.0
  %704 = vmatprep.subr.mxu0 0.0
  %705 = vmatpush1.msra.mxu0 0.0
  %706 = vmatprep.subr.mxu0 0.0
  %707 = vmatpush1.msra.mxu0 0.0
  %708 = vmatprep.mubr.f32.mxu0 0.0
  %709 = vmatmul.mubr.f32.gmra.mrb[0].mxu0 %v642
  %v710 = vpop.f32.mrb[0].mxu0
  %v711 = vadd.f32 0.0, %v710
  %v712 = vpop.f32.mrb[0].mxu0
  %v713 = vadd.f32 0.0, %v712
  %714 = vdwg.mxu0
  %v715 = vadd.f32 %v628, %v711
  %v716 = vadd.f32 %v629, %v713
  %717 = vrot.lane.b32.xlu0 %v194, 113
  %v718 = vpop.permute.xlu0 %717
  %719 = vrot.lane.b32.xlu0 %v195, 113
  %v720 = vpop.permute.xlu0 %719
  %vm721 = vcmp.lt.s32.totalorder %v207, 113
  %v722 = vsel %vm721, %v718, %v720
  %v723 = vsel %vm721, %v720, %v718
  %v724 = vmul.f32 %v722, %v76
  %v725 = vmul.f32 %v723, %v80
  %s726 = scalar_lea.vmem %s4, 48
  %v727 = vld [vmem:[%s726] sm:$0xff]
  %v729 = vsel %vm214, %v727, 0
  %731 = vmatprep.subr.mxu0 %v725
  %732 = vmatpush1.msra.mxu0 %v724
  %733 = vmatprep.subr.mxu0 0.0
  %734 = vmatpush1.msra.mxu0 0.0
  %735 = vmatprep.subr.mxu0 0.0
  %736 = vmatpush1.msra.mxu0 0.0
  %737 = vmatprep.subr.mxu0 0.0
  %738 = vmatpush1.msra.mxu0 0.0
  %739 = vmatprep.subr.mxu0 0.0
  %740 = vmatpush1.msra.mxu0 0.0
  %741 = vmatprep.subr.mxu0 0.0
  %742 = vmatpush1.msra.mxu0 0.0
  %743 = vmatprep.subr.mxu0 0.0
  %744 = vmatpush1.msra.mxu0 0.0
  %745 = vmatprep.subr.mxu0 0.0
  %746 = vmatpush1.msra.mxu0 0.0
  %747 = vmatprep.subr.mxu0 0.0
  %748 = vmatpush1.msra.mxu0 0.0
  %749 = vmatprep.subr.mxu0 0.0
  %750 = vmatpush1.msra.mxu0 0.0
  %751 = vmatprep.subr.mxu0 0.0
  %752 = vmatpush1.msra.mxu0 0.0
  %753 = vmatprep.subr.mxu0 0.0
  %754 = vmatpush1.msra.mxu0 0.0
  %755 = vmatprep.subr.mxu0 0.0
  %756 = vmatpush1.msra.mxu0 0.0
  %757 = vmatprep.subr.mxu0 0.0
  %758 = vmatpush1.msra.mxu0 0.0
  %759 = vmatprep.subr.mxu0 0.0
  %760 = vmatpush1.msra.mxu0 0.0
  %761 = vmatprep.subr.mxu0 0.0
  %762 = vmatpush1.msra.mxu0 0.0
  %763 = vmatprep.subr.mxu0 0.0
  %764 = vmatpush1.msra.mxu0 0.0
  %765 = vmatprep.subr.mxu0 0.0
  %766 = vmatpush1.msra.mxu0 0.0
  %767 = vmatprep.subr.mxu0 0.0
  %768 = vmatpush1.msra.mxu0 0.0
  %769 = vmatprep.subr.mxu0 0.0
  %770 = vmatpush1.msra.mxu0 0.0
  %771 = vmatprep.subr.mxu0 0.0
  %772 = vmatpush1.msra.mxu0 0.0
  %773 = vmatprep.subr.mxu0 0.0
  %774 = vmatpush1.msra.mxu0 0.0
  %775 = vmatprep.subr.mxu0 0.0
  %776 = vmatpush1.msra.mxu0 0.0
  %777 = vmatprep.subr.mxu0 0.0
  %778 = vmatpush1.msra.mxu0 0.0
  %779 = vmatprep.subr.mxu0 0.0
  %780 = vmatpush1.msra.mxu0 0.0
  %781 = vmatprep.subr.mxu0 0.0
  %782 = vmatpush1.msra.mxu0 0.0
  %783 = vmatprep.subr.mxu0 0.0
  %784 = vmatpush1.msra.mxu0 0.0
  %785 = vmatprep.subr.mxu0 0.0
  %786 = vmatpush1.msra.mxu0 0.0
  %787 = vmatprep.subr.mxu0 0.0
  %788 = vmatpush1.msra.mxu0 0.0
  %789 = vmatprep.subr.mxu0 0.0
  %790 = vmatpush1.msra.mxu0 0.0
  %791 = vmatprep.subr.mxu0 0.0
  %792 = vmatpush1.msra.mxu0 0.0
  %793 = vmatprep.subr.mxu0 0.0
  %794 = vmatpush1.msra.mxu0 0.0
  %795 = vmatprep.mubr.f32.mxu0 0.0
  %796 = vmatmul.mubr.f32.gmra.mrb[0].mxu0 %v729
  %v797 = vpop.f32.mrb[0].mxu0
  %v798 = vadd.f32 0.0, %v797
  %v799 = vpop.f32.mrb[0].mxu0
  %v800 = vadd.f32 0.0, %v799
  %801 = vdwg.mxu0
  %v802 = vadd.f32 %v715, %v798
  %v803 = vadd.f32 %v716, %v800
  %804 = vrot.lane.b32.xlu0 %v194, 112
  %v805 = vpop.permute.xlu0 %804
  %806 = vrot.lane.b32.xlu0 %v195, 112
  %v807 = vpop.permute.xlu0 %806
  %vm808 = vcmp.lt.s32.totalorder %v207, 112
  %v809 = vsel %vm808, %v805, %v807
  %v810 = vsel %vm808, %v807, %v805
  %v811 = vmul.f32 %v809, %v84
  %v812 = vmul.f32 %v810, %v88
  %s813 = scalar_lea.vmem %s4, 56
  %v814 = vld [vmem:[%s813] sm:$0xff]
  %v816 = vsel %vm214, %v814, 0
  %818 = vmatprep.subr.mxu0 %v812
  %819 = vmatpush1.msra.mxu0 %v811
  %820 = vmatprep.subr.mxu0 0.0
  %821 = vmatpush1.msra.mxu0 0.0
  %822 = vmatprep.subr.mxu0 0.0
  %823 = vmatpush1.msra.mxu0 0.0
  %824 = vmatprep.subr.mxu0 0.0
  %825 = vmatpush1.msra.mxu0 0.0
  %826 = vmatprep.subr.mxu0 0.0
  %827 = vmatpush1.msra.mxu0 0.0
  %828 = vmatprep.subr.mxu0 0.0
  %829 = vmatpush1.msra.mxu0 0.0
  %830 = vmatprep.subr.mxu0 0.0
  %831 = vmatpush1.msra.mxu0 0.0
  %832 = vmatprep.subr.mxu0 0.0
  %833 = vmatpush1.msra.mxu0 0.0
  %834 = vmatprep.subr.mxu0 0.0
  %835 = vmatpush1.msra.mxu0 0.0
  %836 = vmatprep.subr.mxu0 0.0
  %837 = vmatpush1.msra.mxu0 0.0
  %838 = vmatprep.subr.mxu0 0.0
  %839 = vmatpush1.msra.mxu0 0.0
  %840 = vmatprep.subr.mxu0 0.0
  %841 = vmatpush1.msra.mxu0 0.0
  %842 = vmatprep.subr.mxu0 0.0
  %843 = vmatpush1.msra.mxu0 0.0
  %844 = vmatprep.subr.mxu0 0.0
  %845 = vmatpush1.msra.mxu0 0.0
  %846 = vmatprep.subr.mxu0 0.0
  %847 = vmatpush1.msra.mxu0 0.0
  %848 = vmatprep.subr.mxu0 0.0
  %849 = vmatpush1.msra.mxu0 0.0
  %850 = vmatprep.subr.mxu0 0.0
  %851 = vmatpush1.msra.mxu0 0.0
  %852 = vmatprep.subr.mxu0 0.0
  %853 = vmatpush1.msra.mxu0 0.0
  %854 = vmatprep.subr.mxu0 0.0
  %855 = vmatpush1.msra.mxu0 0.0
  %856 = vmatprep.subr.mxu0 0.0
  %857 = vmatpush1.msra.mxu0 0.0
  %858 = vmatprep.subr.mxu0 0.0
  %859 = vmatpush1.msra.mxu0 0.0
  %860 = vmatprep.subr.mxu0 0.0
  %861 = vmatpush1.msra.mxu0 0.0
  %862 = vmatprep.subr.mxu0 0.0
  %863 = vmatpush1.msra.mxu0 0.0
  %864 = vmatprep.subr.mxu0 0.0
  %865 = vmatpush1.msra.mxu0 0.0
  %866 = vmatprep.subr.mxu0 0.0
  %867 = vmatpush1.msra.mxu0 0.0
  %868 = vmatprep.subr.mxu0 0.0
  %869 = vmatpush1.msra.mxu0 0.0
  %870 = vmatprep.subr.mxu0 0.0
  %871 = vmatpush1.msra.mxu0 0.0
  %872 = vmatprep.subr.mxu0 0.0
  %873 = vmatpush1.msra.mxu0 0.0
  %874 = vmatprep.subr.mxu0 0.0
  %875 = vmatpush1.msra.mxu0 0.0
  %876 = vmatprep.subr.mxu0 0.0
  %877 = vmatpush1.msra.mxu0 0.0
  %878 = vmatprep.subr.mxu0 0.0
  %879 = vmatpush1.msra.mxu0 0.0
  %880 = vmatprep.subr.mxu0 0.0
  %881 = vmatpush1.msra.mxu0 0.0
  %882 = vmatprep.mubr.f32.mxu0 0.0
  %883 = vmatmul.mubr.f32.gmra.mrb[0].mxu0 %v816
  %v884 = vpop.f32.mrb[0].mxu0
  %v885 = vadd.f32 0.0, %v884
  %v886 = vpop.f32.mrb[0].mxu0
  %v887 = vadd.f32 0.0, %v886
  %888 = vdwg.mxu0
  %v889 = vadd.f32 %v802, %v885
  %v890 = vadd.f32 %v803, %v887
  %891 = vrot.lane.b32.xlu0 %v194, 111
  %v892 = vpop.permute.xlu0 %891
  %893 = vrot.lane.b32.xlu0 %v195, 111
  %v894 = vpop.permute.xlu0 %893
  %vm895 = vcmp.lt.s32.totalorder %v207, 111
  %v896 = vsel %vm895, %v892, %v894
  %v897 = vsel %vm895, %v894, %v892
  %v898 = vmul.f32 %v896, %v92
  %v899 = vmul.f32 %v897, %v96
  %s900 = scalar_lea.vmem %s4, 64
  %v901 = vld [vmem:[%s900] sm:$0xff]
  %v903 = vsel %vm214, %v901, 0
  %905 = vmatprep.subr.mxu0 %v899
  %906 = vmatpush1.msra.mxu0 %v898
  %907 = vmatprep.subr.mxu0 0.0
  %908 = vmatpush1.msra.mxu0 0.0
  %909 = vmatprep.subr.mxu0 0.0
  %910 = vmatpush1.msra.mxu0 0.0
  %911 = vmatprep.subr.mxu0 0.0
  %912 = vmatpush1.msra.mxu0 0.0
  %913 = vmatprep.subr.mxu0 0.0
  %914 = vmatpush1.msra.mxu0 0.0
  %915 = vmatprep.subr.mxu0 0.0
  %916 = vmatpush1.msra.mxu0 0.0
  %917 = vmatprep.subr.mxu0 0.0
  %918 = vmatpush1.msra.mxu0 0.0
  %919 = vmatprep.subr.mxu0 0.0
  %920 = vmatpush1.msra.mxu0 0.0
  %921 = vmatprep.subr.mxu0 0.0
  %922 = vmatpush1.msra.mxu0 0.0
  %923 = vmatprep.subr.mxu0 0.0
  %924 = vmatpush1.msra.mxu0 0.0
  %925 = vmatprep.subr.mxu0 0.0
  %926 = vmatpush1.msra.mxu0 0.0
  %927 = vmatprep.subr.mxu0 0.0
  %928 = vmatpush1.msra.mxu0 0.0
  %929 = vmatprep.subr.mxu0 0.0
  %930 = vmatpush1.msra.mxu0 0.0
  %931 = vmatprep.subr.mxu0 0.0
  %932 = vmatpush1.msra.mxu0 0.0
  %933 = vmatprep.subr.mxu0 0.0
  %934 = vmatpush1.msra.mxu0 0.0
  %935 = vmatprep.subr.mxu0 0.0
  %936 = vmatpush1.msra.mxu0 0.0
  %937 = vmatprep.subr.mxu0 0.0
  %938 = vmatpush1.msra.mxu0 0.0
  %939 = vmatprep.subr.mxu0 0.0
  %940 = vmatpush1.msra.mxu0 0.0
  %941 = vmatprep.subr.mxu0 0.0
  %942 = vmatpush1.msra.mxu0 0.0
  %943 = vmatprep.subr.mxu0 0.0
  %944 = vmatpush1.msra.mxu0 0.0
  %945 = vmatprep.subr.mxu0 0.0
  %946 = vmatpush1.msra.mxu0 0.0
  %947 = vmatprep.subr.mxu0 0.0
  %948 = vmatpush1.msra.mxu0 0.0
  %949 = vmatprep.subr.mxu0 0.0
  %950 = vmatpush1.msra.mxu0 0.0
  %951 = vmatprep.subr.mxu0 0.0
  %952 = vmatpush1.msra.mxu0 0.0
  %953 = vmatprep.subr.mxu0 0.0
  %954 = vmatpush1.msra.mxu0 0.0
  %955 = vmatprep.subr.mxu0 0.0
  %956 = vmatpush1.msra.mxu0 0.0
  %957 = vmatprep.subr.mxu0 0.0
  %958 = vmatpush1.msra.mxu0 0.0
  %959 = vmatprep.subr.mxu0 0.0
  %960 = vmatpush1.msra.mxu0 0.0
  %961 = vmatprep.subr.mxu0 0.0
  %962 = vmatpush1.msra.mxu0 0.0
  %963 = vmatprep.subr.mxu0 0.0
  %964 = vmatpush1.msra.mxu0 0.0
  %965 = vmatprep.subr.mxu0 0.0
  %966 = vmatpush1.msra.mxu0 0.0
  %967 = vmatprep.subr.mxu0 0.0
  %968 = vmatpush1.msra.mxu0 0.0
  %969 = vmatprep.mubr.f32.mxu0 0.0
  %970 = vmatmul.mubr.f32.gmra.mrb[0].mxu0 %v903
  %v971 = vpop.f32.mrb[0].mxu0
  %v972 = vadd.f32 0.0, %v971
  %v973 = vpop.f32.mrb[0].mxu0
  %v974 = vadd.f32 0.0, %v973
  %975 = vdwg.mxu0
  %v976 = vadd.f32 %v889, %v972
  %v977 = vadd.f32 %v890, %v974
  %v978 = vmax.f32 %v976, 0.0
  %v979 = vmax.f32 %v977, 0.0
  %v980 = vld [vmem:[%s7] sm:$0xff]
  %982 = vset.pattern.permute.xlu0 0
  %983 = vperm.xlu0 %982, %v980
  %v984 = vpop.permute.xlu0 %983
  %986 = vrot.lane.b32.xlu0 %v978, 17
  %v987 = vpop.permute.xlu0 %986
  %988 = vrot.lane.b32.xlu0 %v979, 17
  %v989 = vpop.permute.xlu0 %988
  %v990 = vsel %vm208, %v987, %v989
  %v991 = vsel %vm208, %v989, %v987
  %v992 = vmul.f32 %v991, %v36
  %v993 = vmul.f32 %v990, %v40
  %v994 = vld [vmem:[%s6] sm:$0xff]
  %v996 = vsel %vm214, %v994, 0
  %998 = vmatprep.subr.mxu0 %v993
  %999 = vmatpush1.msra.mxu0 %v992
  %1000 = vmatprep.subr.mxu0 0.0
  %1001 = vmatpush1.msra.mxu0 0.0
  %1002 = vmatprep.subr.mxu0 0.0
  %1003 = vmatpush1.msra.mxu0 0.0
  %1004 = vmatprep.subr.mxu0 0.0
  %1005 = vmatpush1.msra.mxu0 0.0
  %1006 = vmatprep.subr.mxu0 0.0
  %1007 = vmatpush1.msra.mxu0 0.0
  %1008 = vmatprep.subr.mxu0 0.0
  %1009 = vmatpush1.msra.mxu0 0.0
  %1010 = vmatprep.subr.mxu0 0.0
  %1011 = vmatpush1.msra.mxu0 0.0
  %1012 = vmatprep.subr.mxu0 0.0
  %1013 = vmatpush1.msra.mxu0 0.0
  %1014 = vmatprep.subr.mxu0 0.0
  %1015 = vmatpush1.msra.mxu0 0.0
  %1016 = vmatprep.subr.mxu0 0.0
  %1017 = vmatpush1.msra.mxu0 0.0
  %1018 = vmatprep.subr.mxu0 0.0
  %1019 = vmatpush1.msra.mxu0 0.0
  %1020 = vmatprep.subr.mxu0 0.0
  %1021 = vmatpush1.msra.mxu0 0.0
  %1022 = vmatprep.subr.mxu0 0.0
  %1023 = vmatpush1.msra.mxu0 0.0
  %1024 = vmatprep.subr.mxu0 0.0
  %1025 = vmatpush1.msra.mxu0 0.0
  %1026 = vmatprep.subr.mxu0 0.0
  %1027 = vmatpush1.msra.mxu0 0.0
  %1028 = vmatprep.subr.mxu0 0.0
  %1029 = vmatpush1.msra.mxu0 0.0
  %1030 = vmatprep.subr.mxu0 0.0
  %1031 = vmatpush1.msra.mxu0 0.0
  %1032 = vmatprep.subr.mxu0 0.0
  %1033 = vmatpush1.msra.mxu0 0.0
  %1034 = vmatprep.subr.mxu0 0.0
  %1035 = vmatpush1.msra.mxu0 0.0
  %1036 = vmatprep.subr.mxu0 0.0
  %1037 = vmatpush1.msra.mxu0 0.0
  %1038 = vmatprep.subr.mxu0 0.0
  %1039 = vmatpush1.msra.mxu0 0.0
  %1040 = vmatprep.subr.mxu0 0.0
  %1041 = vmatpush1.msra.mxu0 0.0
  %1042 = vmatprep.subr.mxu0 0.0
  %1043 = vmatpush1.msra.mxu0 0.0
  %1044 = vmatprep.subr.mxu0 0.0
  %1045 = vmatpush1.msra.mxu0 0.0
  %1046 = vmatprep.subr.mxu0 0.0
  %1047 = vmatpush1.msra.mxu0 0.0
  %1048 = vmatprep.subr.mxu0 0.0
  %1049 = vmatpush1.msra.mxu0 0.0
  %1050 = vmatprep.subr.mxu0 0.0
  %1051 = vmatpush1.msra.mxu0 0.0
  %1052 = vmatprep.subr.mxu0 0.0
  %1053 = vmatpush1.msra.mxu0 0.0
  %1054 = vmatprep.subr.mxu0 0.0
  %1055 = vmatpush1.msra.mxu0 0.0
  %1056 = vmatprep.subr.mxu0 0.0
  %1057 = vmatpush1.msra.mxu0 0.0
  %1058 = vmatprep.subr.mxu0 0.0
  %1059 = vmatpush1.msra.mxu0 0.0
  %1060 = vmatprep.subr.mxu0 0.0
  %1061 = vmatpush1.msra.mxu0 0.0
  %1062 = vmatprep.mubr.f32.mxu0 0.0
  %1063 = vmatmul.mubr.f32.gmra.mrb[0].mxu0 %v996
  %v1064 = vpop.f32.mrb[0].mxu0
  %v1065 = vadd.f32 0.0, %v1064
  %v1066 = vpop.f32.mrb[0].mxu0
  %v1067 = vadd.f32 0.0, %v1066
  %1068 = vdwg.mxu0
  %v1069 = vadd.f32 %v984, %v1065
  %v1070 = vadd.f32 %v984, %v1067
  %1071 = vrot.lane.b32.xlu0 %v978, 16
  %v1072 = vpop.permute.xlu0 %1071
  %1073 = vrot.lane.b32.xlu0 %v979, 16
  %v1074 = vpop.permute.xlu0 %1073
  %v1075 = vsel %vm295, %v1072, %v1074
  %v1076 = vsel %vm295, %v1074, %v1072
  %v1077 = vmul.f32 %v1076, %v44
  %v1078 = vmul.f32 %v1075, %v48
  %s1079 = scalar_lea.vmem %s6, 8
  %v1080 = vld [vmem:[%s1079] sm:$0xff]
  %v1082 = vsel %vm214, %v1080, 0
  %1084 = vmatprep.subr.mxu0 %v1078
  %1085 = vmatpush1.msra.mxu0 %v1077
  %1086 = vmatprep.subr.mxu0 0.0
  %1087 = vmatpush1.msra.mxu0 0.0
  %1088 = vmatprep.subr.mxu0 0.0
  %1089 = vmatpush1.msra.mxu0 0.0
  %1090 = vmatprep.subr.mxu0 0.0
  %1091 = vmatpush1.msra.mxu0 0.0
  %1092 = vmatprep.subr.mxu0 0.0
  %1093 = vmatpush1.msra.mxu0 0.0
  %1094 = vmatprep.subr.mxu0 0.0
  %1095 = vmatpush1.msra.mxu0 0.0
  %1096 = vmatprep.subr.mxu0 0.0
  %1097 = vmatpush1.msra.mxu0 0.0
  %1098 = vmatprep.subr.mxu0 0.0
  %1099 = vmatpush1.msra.mxu0 0.0
  %1100 = vmatprep.subr.mxu0 0.0
  %1101 = vmatpush1.msra.mxu0 0.0
  %1102 = vmatprep.subr.mxu0 0.0
  %1103 = vmatpush1.msra.mxu0 0.0
  %1104 = vmatprep.subr.mxu0 0.0
  %1105 = vmatpush1.msra.mxu0 0.0
  %1106 = vmatprep.subr.mxu0 0.0
  %1107 = vmatpush1.msra.mxu0 0.0
  %1108 = vmatprep.subr.mxu0 0.0
  %1109 = vmatpush1.msra.mxu0 0.0
  %1110 = vmatprep.subr.mxu0 0.0
  %1111 = vmatpush1.msra.mxu0 0.0
  %1112 = vmatprep.subr.mxu0 0.0
  %1113 = vmatpush1.msra.mxu0 0.0
  %1114 = vmatprep.subr.mxu0 0.0
  %1115 = vmatpush1.msra.mxu0 0.0
  %1116 = vmatprep.subr.mxu0 0.0
  %1117 = vmatpush1.msra.mxu0 0.0
  %1118 = vmatprep.subr.mxu0 0.0
  %1119 = vmatpush1.msra.mxu0 0.0
  %1120 = vmatprep.subr.mxu0 0.0
  %1121 = vmatpush1.msra.mxu0 0.0
  %1122 = vmatprep.subr.mxu0 0.0
  %1123 = vmatpush1.msra.mxu0 0.0
  %1124 = vmatprep.subr.mxu0 0.0
  %1125 = vmatpush1.msra.mxu0 0.0
  %1126 = vmatprep.subr.mxu0 0.0
  %1127 = vmatpush1.msra.mxu0 0.0
  %1128 = vmatprep.subr.mxu0 0.0
  %1129 = vmatpush1.msra.mxu0 0.0
  %1130 = vmatprep.subr.mxu0 0.0
  %1131 = vmatpush1.msra.mxu0 0.0
  %1132 = vmatprep.subr.mxu0 0.0
  %1133 = vmatpush1.msra.mxu0 0.0
  %1134 = vmatprep.subr.mxu0 0.0
  %1135 = vmatpush1.msra.mxu0 0.0
  %1136 = vmatprep.subr.mxu0 0.0
  %1137 = vmatpush1.msra.mxu0 0.0
  %1138 = vmatprep.subr.mxu0 0.0
  %1139 = vmatpush1.msra.mxu0 0.0
  %1140 = vmatprep.subr.mxu0 0.0
  %1141 = vmatpush1.msra.mxu0 0.0
  %1142 = vmatprep.subr.mxu0 0.0
  %1143 = vmatpush1.msra.mxu0 0.0
  %1144 = vmatprep.subr.mxu0 0.0
  %1145 = vmatpush1.msra.mxu0 0.0
  %1146 = vmatprep.subr.mxu0 0.0
  %1147 = vmatpush1.msra.mxu0 0.0
  %1148 = vmatprep.mubr.f32.mxu0 0.0
  %1149 = vmatmul.mubr.f32.gmra.mrb[0].mxu0 %v1082
  %v1150 = vpop.f32.mrb[0].mxu0
  %v1151 = vadd.f32 0.0, %v1150
  %v1152 = vpop.f32.mrb[0].mxu0
  %v1153 = vadd.f32 0.0, %v1152
  %1154 = vdwg.mxu0
  %v1155 = vadd.f32 %v1069, %v1151
  %v1156 = vadd.f32 %v1070, %v1153
  %1157 = vrot.lane.b32.xlu0 %v978, 15
  %v1158 = vpop.permute.xlu0 %1157
  %1159 = vrot.lane.b32.xlu0 %v979, 15
  %v1160 = vpop.permute.xlu0 %1159
  %v1161 = vsel %vm382, %v1158, %v1160
  %v1162 = vsel %vm382, %v1160, %v1158
  %v1163 = vmul.f32 %v1162, %v52
  %v1164 = vmul.f32 %v1161, %v56
  %s1165 = scalar_lea.vmem %s6, 16
  %v1166 = vld [vmem:[%s1165] sm:$0xff]
  %v1168 = vsel %vm214, %v1166, 0
  %1170 = vmatprep.subr.mxu0 %v1164
  %1171 = vmatpush1.msra.mxu0 %v1163
  %1172 = vmatprep.subr.mxu0 0.0
  %1173 = vmatpush1.msra.mxu0 0.0
  %1174 = vmatprep.subr.mxu0 0.0
  %1175 = vmatpush1.msra.mxu0 0.0
  %1176 = vmatprep.subr.mxu0 0.0
  %1177 = vmatpush1.msra.mxu0 0.0
  %1178 = vmatprep.subr.mxu0 0.0
  %1179 = vmatpush1.msra.mxu0 0.0
  %1180 = vmatprep.subr.mxu0 0.0
  %1181 = vmatpush1.msra.mxu0 0.0
  %1182 = vmatprep.subr.mxu0 0.0
  %1183 = vmatpush1.msra.mxu0 0.0
  %1184 = vmatprep.subr.mxu0 0.0
  %1185 = vmatpush1.msra.mxu0 0.0
  %1186 = vmatprep.subr.mxu0 0.0
  %1187 = vmatpush1.msra.mxu0 0.0
  %1188 = vmatprep.subr.mxu0 0.0
  %1189 = vmatpush1.msra.mxu0 0.0
  %1190 = vmatprep.subr.mxu0 0.0
  %1191 = vmatpush1.msra.mxu0 0.0
  %1192 = vmatprep.subr.mxu0 0.0
  %1193 = vmatpush1.msra.mxu0 0.0
  %1194 = vmatprep.subr.mxu0 0.0
  %1195 = vmatpush1.msra.mxu0 0.0
  %1196 = vmatprep.subr.mxu0 0.0
  %1197 = vmatpush1.msra.mxu0 0.0
  %1198 = vmatprep.subr.mxu0 0.0
  %1199 = vmatpush1.msra.mxu0 0.0
  %1200 = vmatprep.subr.mxu0 0.0
  %1201 = vmatpush1.msra.mxu0 0.0
  %1202 = vmatprep.subr.mxu0 0.0
  %1203 = vmatpush1.msra.mxu0 0.0
  %1204 = vmatprep.subr.mxu0 0.0
  %1205 = vmatpush1.msra.mxu0 0.0
  %1206 = vmatprep.subr.mxu0 0.0
  %1207 = vmatpush1.msra.mxu0 0.0
  %1208 = vmatprep.subr.mxu0 0.0
  %1209 = vmatpush1.msra.mxu0 0.0
  %1210 = vmatprep.subr.mxu0 0.0
  %1211 = vmatpush1.msra.mxu0 0.0
  %1212 = vmatprep.subr.mxu0 0.0
  %1213 = vmatpush1.msra.mxu0 0.0
  %1214 = vmatprep.subr.mxu0 0.0
  %1215 = vmatpush1.msra.mxu0 0.0
  %1216 = vmatprep.subr.mxu0 0.0
  %1217 = vmatpush1.msra.mxu0 0.0
  %1218 = vmatprep.subr.mxu0 0.0
  %1219 = vmatpush1.msra.mxu0 0.0
  %1220 = vmatprep.subr.mxu0 0.0
  %1221 = vmatpush1.msra.mxu0 0.0
  %1222 = vmatprep.subr.mxu0 0.0
  %1223 = vmatpush1.msra.mxu0 0.0
  %1224 = vmatprep.subr.mxu0 0.0
  %1225 = vmatpush1.msra.mxu0 0.0
  %1226 = vmatprep.subr.mxu0 0.0
  %1227 = vmatpush1.msra.mxu0 0.0
  %1228 = vmatprep.subr.mxu0 0.0
  %1229 = vmatpush1.msra.mxu0 0.0
  %1230 = vmatprep.subr.mxu0 0.0
  %1231 = vmatpush1.msra.mxu0 0.0
  %1232 = vmatprep.subr.mxu0 0.0
  %1233 = vmatpush1.msra.mxu0 0.0
  %1234 = vmatprep.mubr.f32.mxu0 0.0
  %1235 = vmatmul.mubr.f32.gmra.mrb[0].mxu0 %v1168
  %v1236 = vpop.f32.mrb[0].mxu0
  %v1237 = vadd.f32 0.0, %v1236
  %v1238 = vpop.f32.mrb[0].mxu0
  %v1239 = vadd.f32 0.0, %v1238
  %1240 = vdwg.mxu0
  %v1241 = vadd.f32 %v1155, %v1237
  %v1242 = vadd.f32 %v1156, %v1239
  %1243 = vrot.lane.b32.xlu0 %v978, 1
  %v1244 = vpop.permute.xlu0 %1243
  %1245 = vrot.lane.b32.xlu0 %v979, 1
  %v1246 = vpop.permute.xlu0 %1245
  %v1247 = vsel %vm469, %v1244, %v1246
  %v1248 = vsel %vm469, %v1246, %v1244
  %v1249 = vmul.f32 %v1248, %v60
  %v1250 = vmul.f32 %v1247, %v64
  %s1251 = scalar_lea.vmem %s6, 24
  %v1252 = vld [vmem:[%s1251] sm:$0xff]
  %v1254 = vsel %vm214, %v1252, 0
  %1256 = vmatprep.subr.mxu0 %v1250
  %1257 = vmatpush1.msra.mxu0 %v1249
  %1258 = vmatprep.subr.mxu0 0.0
  %1259 = vmatpush1.msra.mxu0 0.0
  %1260 = vmatprep.subr.mxu0 0.0
  %1261 = vmatpush1.msra.mxu0 0.0
  %1262 = vmatprep.subr.mxu0 0.0
  %1263 = vmatpush1.msra.mxu0 0.0
  %1264 = vmatprep.subr.mxu0 0.0
  %1265 = vmatpush1.msra.mxu0 0.0
  %1266 = vmatprep.subr.mxu0 0.0
  %1267 = vmatpush1.msra.mxu0 0.0
  %1268 = vmatprep.subr.mxu0 0.0
  %1269 = vmatpush1.msra.mxu0 0.0
  %1270 = vmatprep.subr.mxu0 0.0
  %1271 = vmatpush1.msra.mxu0 0.0
  %1272 = vmatprep.subr.mxu0 0.0
  %1273 = vmatpush1.msra.mxu0 0.0
  %1274 = vmatprep.subr.mxu0 0.0
  %1275 = vmatpush1.msra.mxu0 0.0
  %1276 = vmatprep.subr.mxu0 0.0
  %1277 = vmatpush1.msra.mxu0 0.0
  %1278 = vmatprep.subr.mxu0 0.0
  %1279 = vmatpush1.msra.mxu0 0.0
  %1280 = vmatprep.subr.mxu0 0.0
  %1281 = vmatpush1.msra.mxu0 0.0
  %1282 = vmatprep.subr.mxu0 0.0
  %1283 = vmatpush1.msra.mxu0 0.0
  %1284 = vmatprep.subr.mxu0 0.0
  %1285 = vmatpush1.msra.mxu0 0.0
  %1286 = vmatprep.subr.mxu0 0.0
  %1287 = vmatpush1.msra.mxu0 0.0
  %1288 = vmatprep.subr.mxu0 0.0
  %1289 = vmatpush1.msra.mxu0 0.0
  %1290 = vmatprep.subr.mxu0 0.0
  %1291 = vmatpush1.msra.mxu0 0.0
  %1292 = vmatprep.subr.mxu0 0.0
  %1293 = vmatpush1.msra.mxu0 0.0
  %1294 = vmatprep.subr.mxu0 0.0
  %1295 = vmatpush1.msra.mxu0 0.0
  %1296 = vmatprep.subr.mxu0 0.0
  %1297 = vmatpush1.msra.mxu0 0.0
  %1298 = vmatprep.subr.mxu0 0.0
  %1299 = vmatpush1.msra.mxu0 0.0
  %1300 = vmatprep.subr.mxu0 0.0
  %1301 = vmatpush1.msra.mxu0 0.0
  %1302 = vmatprep.subr.mxu0 0.0
  %1303 = vmatpush1.msra.mxu0 0.0
  %1304 = vmatprep.subr.mxu0 0.0
  %1305 = vmatpush1.msra.mxu0 0.0
  %1306 = vmatprep.subr.mxu0 0.0
  %1307 = vmatpush1.msra.mxu0 0.0
  %1308 = vmatprep.subr.mxu0 0.0
  %1309 = vmatpush1.msra.mxu0 0.0
  %1310 = vmatprep.subr.mxu0 0.0
  %1311 = vmatpush1.msra.mxu0 0.0
  %1312 = vmatprep.subr.mxu0 0.0
  %1313 = vmatpush1.msra.mxu0 0.0
  %1314 = vmatprep.subr.mxu0 0.0
  %1315 = vmatpush1.msra.mxu0 0.0
  %1316 = vmatprep.subr.mxu0 0.0
  %1317 = vmatpush1.msra.mxu0 0.0
  %1318 = vmatprep.subr.mxu0 0.0
  %1319 = vmatpush1.msra.mxu0 0.0
  %1320 = vmatprep.mubr.f32.mxu0 0.0
  %1321 = vmatmul.mubr.f32.gmra.mrb[0].mxu0 %v1254
  %v1322 = vpop.f32.mrb[0].mxu0
  %v1323 = vadd.f32 0.0, %v1322
  %v1324 = vpop.f32.mrb[0].mxu0
  %v1325 = vadd.f32 0.0, %v1324
  %1326 = vdwg.mxu0
  %v1327 = vadd.f32 %v1241, %v1323
  %v1328 = vadd.f32 %v1242, %v1325
  %s1329 = scalar_lea.vmem %s6, 32
  %v1330 = vld [vmem:[%s1329] sm:$0xff]
  %v1332 = vsel %vm214, %v1330, 0
  %1334 = vmatprep.subr.mxu0 %v979
  %1335 = vmatpush1.msra.mxu0 %v978
  %1336 = vmatprep.subr.mxu0 0.0
  %1337 = vmatpush1.msra.mxu0 0.0
  %1338 = vmatprep.subr.mxu0 0.0
  %1339 = vmatpush1.msra.mxu0 0.0
  %1340 = vmatprep.subr.mxu0 0.0
  %1341 = vmatpush1.msra.mxu0 0.0
  %1342 = vmatprep.subr.mxu0 0.0
  %1343 = vmatpush1.msra.mxu0 0.0
  %1344 = vmatprep.subr.mxu0 0.0
  %1345 = vmatpush1.msra.mxu0 0.0
  %1346 = vmatprep.subr.mxu0 0.0
  %1347 = vmatpush1.msra.mxu0 0.0
  %1348 = vmatprep.subr.mxu0 0.0
  %1349 = vmatpush1.msra.mxu0 0.0
  %1350 = vmatprep.subr.mxu0 0.0
  %1351 = vmatpush1.msra.mxu0 0.0
  %1352 = vmatprep.subr.mxu0 0.0
  %1353 = vmatpush1.msra.mxu0 0.0
  %1354 = vmatprep.subr.mxu0 0.0
  %1355 = vmatpush1.msra.mxu0 0.0
  %1356 = vmatprep.subr.mxu0 0.0
  %1357 = vmatpush1.msra.mxu0 0.0
  %1358 = vmatprep.subr.mxu0 0.0
  %1359 = vmatpush1.msra.mxu0 0.0
  %1360 = vmatprep.subr.mxu0 0.0
  %1361 = vmatpush1.msra.mxu0 0.0
  %1362 = vmatprep.subr.mxu0 0.0
  %1363 = vmatpush1.msra.mxu0 0.0
  %1364 = vmatprep.subr.mxu0 0.0
  %1365 = vmatpush1.msra.mxu0 0.0
  %1366 = vmatprep.subr.mxu0 0.0
  %1367 = vmatpush1.msra.mxu0 0.0
  %1368 = vmatprep.subr.mxu0 0.0
  %1369 = vmatpush1.msra.mxu0 0.0
  %1370 = vmatprep.subr.mxu0 0.0
  %1371 = vmatpush1.msra.mxu0 0.0
  %1372 = vmatprep.subr.mxu0 0.0
  %1373 = vmatpush1.msra.mxu0 0.0
  %1374 = vmatprep.subr.mxu0 0.0
  %1375 = vmatpush1.msra.mxu0 0.0
  %1376 = vmatprep.subr.mxu0 0.0
  %1377 = vmatpush1.msra.mxu0 0.0
  %1378 = vmatprep.subr.mxu0 0.0
  %1379 = vmatpush1.msra.mxu0 0.0
  %1380 = vmatprep.subr.mxu0 0.0
  %1381 = vmatpush1.msra.mxu0 0.0
  %1382 = vmatprep.subr.mxu0 0.0
  %1383 = vmatpush1.msra.mxu0 0.0
  %1384 = vmatprep.subr.mxu0 0.0
  %1385 = vmatpush1.msra.mxu0 0.0
  %1386 = vmatprep.subr.mxu0 0.0
  %1387 = vmatpush1.msra.mxu0 0.0
  %1388 = vmatprep.subr.mxu0 0.0
  %1389 = vmatpush1.msra.mxu0 0.0
  %1390 = vmatprep.subr.mxu0 0.0
  %1391 = vmatpush1.msra.mxu0 0.0
  %1392 = vmatprep.subr.mxu0 0.0
  %1393 = vmatpush1.msra.mxu0 0.0
  %1394 = vmatprep.subr.mxu0 0.0
  %1395 = vmatpush1.msra.mxu0 0.0
  %1396 = vmatprep.subr.mxu0 0.0
  %1397 = vmatpush1.msra.mxu0 0.0
  %1398 = vmatprep.mubr.f32.mxu0 0.0
  %1399 = vmatmul.mubr.f32.gmra.mrb[0].mxu0 %v1332
  %v1400 = vpop.f32.mrb[0].mxu0
  %v1401 = vadd.f32 0.0, %v1400
  %v1402 = vpop.f32.mrb[0].mxu0
  %v1403 = vadd.f32 0.0, %v1402
  %1404 = vdwg.mxu0
  %v1405 = vadd.f32 %v1327, %v1401
  %v1406 = vadd.f32 %v1328, %v1403
  %1407 = vrot.lane.b32.xlu0 %v978, 127
  %v1408 = vpop.permute.xlu0 %1407
  %1409 = vrot.lane.b32.xlu0 %v979, 127
  %v1410 = vpop.permute.xlu0 %1409
  %v1411 = vsel %vm634, %v1408, %v1410
  %v1412 = vsel %vm634, %v1410, %v1408
  %v1413 = vmul.f32 %v1411, %v68
  %v1414 = vmul.f32 %v1412, %v72
  %s1415 = scalar_lea.vmem %s6, 40
  %v1416 = vld [vmem:[%s1415] sm:$0xff]
  %v1418 = vsel %vm214, %v1416, 0
  %1420 = vmatprep.subr.mxu0 %v1414
  %1421 = vmatpush1.msra.mxu0 %v1413
  %1422 = vmatprep.subr.mxu0 0.0
  %1423 = vmatpush1.msra.mxu0 0.0
  %1424 = vmatprep.subr.mxu0 0.0
  %1425 = vmatpush1.msra.mxu0 0.0
  %1426 = vmatprep.subr.mxu0 0.0
  %1427 = vmatpush1.msra.mxu0 0.0
  %1428 = vmatprep.subr.mxu0 0.0
  %1429 = vmatpush1.msra.mxu0 0.0
  %1430 = vmatprep.subr.mxu0 0.0
  %1431 = vmatpush1.msra.mxu0 0.0
  %1432 = vmatprep.subr.mxu0 0.0
  %1433 = vmatpush1.msra.mxu0 0.0
  %1434 = vmatprep.subr.mxu0 0.0
  %1435 = vmatpush1.msra.mxu0 0.0
  %1436 = vmatprep.subr.mxu0 0.0
  %1437 = vmatpush1.msra.mxu0 0.0
  %1438 = vmatprep.subr.mxu0 0.0
  %1439 = vmatpush1.msra.mxu0 0.0
  %1440 = vmatprep.subr.mxu0 0.0
  %1441 = vmatpush1.msra.mxu0 0.0
  %1442 = vmatprep.subr.mxu0 0.0
  %1443 = vmatpush1.msra.mxu0 0.0
  %1444 = vmatprep.subr.mxu0 0.0
  %1445 = vmatpush1.msra.mxu0 0.0
  %1446 = vmatprep.subr.mxu0 0.0
  %1447 = vmatpush1.msra.mxu0 0.0
  %1448 = vmatprep.subr.mxu0 0.0
  %1449 = vmatpush1.msra.mxu0 0.0
  %1450 = vmatprep.subr.mxu0 0.0
  %1451 = vmatpush1.msra.mxu0 0.0
  %1452 = vmatprep.subr.mxu0 0.0
  %1453 = vmatpush1.msra.mxu0 0.0
  %1454 = vmatprep.subr.mxu0 0.0
  %1455 = vmatpush1.msra.mxu0 0.0
  %1456 = vmatprep.subr.mxu0 0.0
  %1457 = vmatpush1.msra.mxu0 0.0
  %1458 = vmatprep.subr.mxu0 0.0
  %1459 = vmatpush1.msra.mxu0 0.0
  %1460 = vmatprep.subr.mxu0 0.0
  %1461 = vmatpush1.msra.mxu0 0.0
  %1462 = vmatprep.subr.mxu0 0.0
  %1463 = vmatpush1.msra.mxu0 0.0
  %1464 = vmatprep.subr.mxu0 0.0
  %1465 = vmatpush1.msra.mxu0 0.0
  %1466 = vmatprep.subr.mxu0 0.0
  %1467 = vmatpush1.msra.mxu0 0.0
  %1468 = vmatprep.subr.mxu0 0.0
  %1469 = vmatpush1.msra.mxu0 0.0
  %1470 = vmatprep.subr.mxu0 0.0
  %1471 = vmatpush1.msra.mxu0 0.0
  %1472 = vmatprep.subr.mxu0 0.0
  %1473 = vmatpush1.msra.mxu0 0.0
  %1474 = vmatprep.subr.mxu0 0.0
  %1475 = vmatpush1.msra.mxu0 0.0
  %1476 = vmatprep.subr.mxu0 0.0
  %1477 = vmatpush1.msra.mxu0 0.0
  %1478 = vmatprep.subr.mxu0 0.0
  %1479 = vmatpush1.msra.mxu0 0.0
  %1480 = vmatprep.subr.mxu0 0.0
  %1481 = vmatpush1.msra.mxu0 0.0
  %1482 = vmatprep.subr.mxu0 0.0
  %1483 = vmatpush1.msra.mxu0 0.0
  %1484 = vmatprep.mubr.f32.mxu0 0.0
  %1485 = vmatmul.mubr.f32.gmra.mrb[0].mxu0 %v1418
  %v1486 = vpop.f32.mrb[0].mxu0
  %v1487 = vadd.f32 0.0, %v1486
  %v1488 = vpop.f32.mrb[0].mxu0
  %v1489 = vadd.f32 0.0, %v1488
  %1490 = vdwg.mxu0
  %v1491 = vadd.f32 %v1405, %v1487
  %v1492 = vadd.f32 %v1406, %v1489
  %1493 = vrot.lane.b32.xlu0 %v978, 113
  %v1494 = vpop.permute.xlu0 %1493
  %1495 = vrot.lane.b32.xlu0 %v979, 113
  %v1496 = vpop.permute.xlu0 %1495
  %v1497 = vsel %vm721, %v1494, %v1496
  %v1498 = vsel %vm721, %v1496, %v1494
  %v1499 = vmul.f32 %v1497, %v76
  %v1500 = vmul.f32 %v1498, %v80
  %s1501 = scalar_lea.vmem %s6, 48
  %v1502 = vld [vmem:[%s1501] sm:$0xff]
  %v1504 = vsel %vm214, %v1502, 0
  %1506 = vmatprep.subr.mxu0 %v1500
  %1507 = vmatpush1.msra.mxu0 %v1499
  %1508 = vmatprep.subr.mxu0 0.0
  %1509 = vmatpush1.msra.mxu0 0.0
  %1510 = vmatprep.subr.mxu0 0.0
  %1511 = vmatpush1.msra.mxu0 0.0
  %1512 = vmatprep.subr.mxu0 0.0
  %1513 = vmatpush1.msra.mxu0 0.0
  %1514 = vmatprep.subr.mxu0 0.0
  %1515 = vmatpush1.msra.mxu0 0.0
  %1516 = vmatprep.subr.mxu0 0.0
  %1517 = vmatpush1.msra.mxu0 0.0
  %1518 = vmatprep.subr.mxu0 0.0
  %1519 = vmatpush1.msra.mxu0 0.0
  %1520 = vmatprep.subr.mxu0 0.0
  %1521 = vmatpush1.msra.mxu0 0.0
  %1522 = vmatprep.subr.mxu0 0.0
  %1523 = vmatpush1.msra.mxu0 0.0
  %1524 = vmatprep.subr.mxu0 0.0
  %1525 = vmatpush1.msra.mxu0 0.0
  %1526 = vmatprep.subr.mxu0 0.0
  %1527 = vmatpush1.msra.mxu0 0.0
  %1528 = vmatprep.subr.mxu0 0.0
  %1529 = vmatpush1.msra.mxu0 0.0
  %1530 = vmatprep.subr.mxu0 0.0
  %1531 = vmatpush1.msra.mxu0 0.0
  %1532 = vmatprep.subr.mxu0 0.0
  %1533 = vmatpush1.msra.mxu0 0.0
  %1534 = vmatprep.subr.mxu0 0.0
  %1535 = vmatpush1.msra.mxu0 0.0
  %1536 = vmatprep.subr.mxu0 0.0
  %1537 = vmatpush1.msra.mxu0 0.0
  %1538 = vmatprep.subr.mxu0 0.0
  %1539 = vmatpush1.msra.mxu0 0.0
  %1540 = vmatprep.subr.mxu0 0.0
  %1541 = vmatpush1.msra.mxu0 0.0
  %1542 = vmatprep.subr.mxu0 0.0
  %1543 = vmatpush1.msra.mxu0 0.0
  %1544 = vmatprep.subr.mxu0 0.0
  %1545 = vmatpush1.msra.mxu0 0.0
  %1546 = vmatprep.subr.mxu0 0.0
  %1547 = vmatpush1.msra.mxu0 0.0
  %1548 = vmatprep.subr.mxu0 0.0
  %1549 = vmatpush1.msra.mxu0 0.0
  %1550 = vmatprep.subr.mxu0 0.0
  %1551 = vmatpush1.msra.mxu0 0.0
  %1552 = vmatprep.subr.mxu0 0.0
  %1553 = vmatpush1.msra.mxu0 0.0
  %1554 = vmatprep.subr.mxu0 0.0
  %1555 = vmatpush1.msra.mxu0 0.0
  %1556 = vmatprep.subr.mxu0 0.0
  %1557 = vmatpush1.msra.mxu0 0.0
  %1558 = vmatprep.subr.mxu0 0.0
  %1559 = vmatpush1.msra.mxu0 0.0
  %1560 = vmatprep.subr.mxu0 0.0
  %1561 = vmatpush1.msra.mxu0 0.0
  %1562 = vmatprep.subr.mxu0 0.0
  %1563 = vmatpush1.msra.mxu0 0.0
  %1564 = vmatprep.subr.mxu0 0.0
  %1565 = vmatpush1.msra.mxu0 0.0
  %1566 = vmatprep.subr.mxu0 0.0
  %1567 = vmatpush1.msra.mxu0 0.0
  %1568 = vmatprep.subr.mxu0 0.0
  %1569 = vmatpush1.msra.mxu0 0.0
  %1570 = vmatprep.mubr.f32.mxu0 0.0
  %1571 = vmatmul.mubr.f32.gmra.mrb[0].mxu0 %v1504
  %v1572 = vpop.f32.mrb[0].mxu0
  %v1573 = vadd.f32 0.0, %v1572
  %v1574 = vpop.f32.mrb[0].mxu0
  %v1575 = vadd.f32 0.0, %v1574
  %1576 = vdwg.mxu0
  %v1577 = vadd.f32 %v1491, %v1573
  %v1578 = vadd.f32 %v1492, %v1575
  %1579 = vrot.lane.b32.xlu0 %v978, 112
  %v1580 = vpop.permute.xlu0 %1579
  %1581 = vrot.lane.b32.xlu0 %v979, 112
  %v1582 = vpop.permute.xlu0 %1581
  %v1583 = vsel %vm808, %v1580, %v1582
  %v1584 = vsel %vm808, %v1582, %v1580
  %v1585 = vmul.f32 %v1583, %v84
  %v1586 = vmul.f32 %v1584, %v88
  %s1587 = scalar_lea.vmem %s6, 56
  %v1588 = vld [vmem:[%s1587] sm:$0xff]
  %v1590 = vsel %vm214, %v1588, 0
  %1592 = vmatprep.subr.mxu0 %v1586
  %1593 = vmatpush1.msra.mxu0 %v1585
  %1594 = vmatprep.subr.mxu0 0.0
  %1595 = vmatpush1.msra.mxu0 0.0
  %1596 = vmatprep.subr.mxu0 0.0
  %1597 = vmatpush1.msra.mxu0 0.0
  %1598 = vmatprep.subr.mxu0 0.0
  %1599 = vmatpush1.msra.mxu0 0.0
  %1600 = vmatprep.subr.mxu0 0.0
  %1601 = vmatpush1.msra.mxu0 0.0
  %1602 = vmatprep.subr.mxu0 0.0
  %1603 = vmatpush1.msra.mxu0 0.0
  %1604 = vmatprep.subr.mxu0 0.0
  %1605 = vmatpush1.msra.mxu0 0.0
  %1606 = vmatprep.subr.mxu0 0.0
  %1607 = vmatpush1.msra.mxu0 0.0
  %1608 = vmatprep.subr.mxu0 0.0
  %1609 = vmatpush1.msra.mxu0 0.0
  %1610 = vmatprep.subr.mxu0 0.0
  %1611 = vmatpush1.msra.mxu0 0.0
  %1612 = vmatprep.subr.mxu0 0.0
  %1613 = vmatpush1.msra.mxu0 0.0
  %1614 = vmatprep.subr.mxu0 0.0
  %1615 = vmatpush1.msra.mxu0 0.0
  %1616 = vmatprep.subr.mxu0 0.0
  %1617 = vmatpush1.msra.mxu0 0.0
  %1618 = vmatprep.subr.mxu0 0.0
  %1619 = vmatpush1.msra.mxu0 0.0
  %1620 = vmatprep.subr.mxu0 0.0
  %1621 = vmatpush1.msra.mxu0 0.0
  %1622 = vmatprep.subr.mxu0 0.0
  %1623 = vmatpush1.msra.mxu0 0.0
  %1624 = vmatprep.subr.mxu0 0.0
  %1625 = vmatpush1.msra.mxu0 0.0
  %1626 = vmatprep.subr.mxu0 0.0
  %1627 = vmatpush1.msra.mxu0 0.0
  %1628 = vmatprep.subr.mxu0 0.0
  %1629 = vmatpush1.msra.mxu0 0.0
  %1630 = vmatprep.subr.mxu0 0.0
  %1631 = vmatpush1.msra.mxu0 0.0
  %1632 = vmatprep.subr.mxu0 0.0
  %1633 = vmatpush1.msra.mxu0 0.0
  %1634 = vmatprep.subr.mxu0 0.0
  %1635 = vmatpush1.msra.mxu0 0.0
  %1636 = vmatprep.subr.mxu0 0.0
  %1637 = vmatpush1.msra.mxu0 0.0
  %1638 = vmatprep.subr.mxu0 0.0
  %1639 = vmatpush1.msra.mxu0 0.0
  %1640 = vmatprep.subr.mxu0 0.0
  %1641 = vmatpush1.msra.mxu0 0.0
  %1642 = vmatprep.subr.mxu0 0.0
  %1643 = vmatpush1.msra.mxu0 0.0
  %1644 = vmatprep.subr.mxu0 0.0
  %1645 = vmatpush1.msra.mxu0 0.0
  %1646 = vmatprep.subr.mxu0 0.0
  %1647 = vmatpush1.msra.mxu0 0.0
  %1648 = vmatprep.subr.mxu0 0.0
  %1649 = vmatpush1.msra.mxu0 0.0
  %1650 = vmatprep.subr.mxu0 0.0
  %1651 = vmatpush1.msra.mxu0 0.0
  %1652 = vmatprep.subr.mxu0 0.0
  %1653 = vmatpush1.msra.mxu0 0.0
  %1654 = vmatprep.subr.mxu0 0.0
  %1655 = vmatpush1.msra.mxu0 0.0
  %1656 = vmatprep.mubr.f32.mxu0 0.0
  %1657 = vmatmul.mubr.f32.gmra.mrb[0].mxu0 %v1590
  %v1658 = vpop.f32.mrb[0].mxu0
  %v1659 = vadd.f32 0.0, %v1658
  %v1660 = vpop.f32.mrb[0].mxu0
  %v1661 = vadd.f32 0.0, %v1660
  %1662 = vdwg.mxu0
  %v1663 = vadd.f32 %v1577, %v1659
  %v1664 = vadd.f32 %v1578, %v1661
  %1665 = vrot.lane.b32.xlu0 %v978, 111
  %v1666 = vpop.permute.xlu0 %1665
  %1667 = vrot.lane.b32.xlu0 %v979, 111
  %v1668 = vpop.permute.xlu0 %1667
  %v1669 = vsel %vm895, %v1666, %v1668
  %v1670 = vsel %vm895, %v1668, %v1666
  %v1671 = vmul.f32 %v1669, %v92
  %v1672 = vmul.f32 %v1670, %v96
  %s1673 = scalar_lea.vmem %s6, 64
  %v1674 = vld [vmem:[%s1673] sm:$0xff]
  %v1676 = vsel %vm214, %v1674, 0
  %1678 = vmatprep.subr.mxu0 %v1672
  %1679 = vmatpush1.msra.mxu0 %v1671
  %1680 = vmatprep.subr.mxu0 0.0
  %1681 = vmatpush1.msra.mxu0 0.0
  %1682 = vmatprep.subr.mxu0 0.0
  %1683 = vmatpush1.msra.mxu0 0.0
  %1684 = vmatprep.subr.mxu0 0.0
  %1685 = vmatpush1.msra.mxu0 0.0
  %1686 = vmatprep.subr.mxu0 0.0
  %1687 = vmatpush1.msra.mxu0 0.0
  %1688 = vmatprep.subr.mxu0 0.0
  %1689 = vmatpush1.msra.mxu0 0.0
  %1690 = vmatprep.subr.mxu0 0.0
  %1691 = vmatpush1.msra.mxu0 0.0
  %1692 = vmatprep.subr.mxu0 0.0
  %1693 = vmatpush1.msra.mxu0 0.0
  %1694 = vmatprep.subr.mxu0 0.0
  %1695 = vmatpush1.msra.mxu0 0.0
  %1696 = vmatprep.subr.mxu0 0.0
  %1697 = vmatpush1.msra.mxu0 0.0
  %1698 = vmatprep.subr.mxu0 0.0
  %1699 = vmatpush1.msra.mxu0 0.0
  %1700 = vmatprep.subr.mxu0 0.0
  %1701 = vmatpush1.msra.mxu0 0.0
  %1702 = vmatprep.subr.mxu0 0.0
  %1703 = vmatpush1.msra.mxu0 0.0
  %1704 = vmatprep.subr.mxu0 0.0
  %1705 = vmatpush1.msra.mxu0 0.0
  %1706 = vmatprep.subr.mxu0 0.0
  %1707 = vmatpush1.msra.mxu0 0.0
  %1708 = vmatprep.subr.mxu0 0.0
  %1709 = vmatpush1.msra.mxu0 0.0
  %1710 = vmatprep.subr.mxu0 0.0
  %1711 = vmatpush1.msra.mxu0 0.0
  %1712 = vmatprep.subr.mxu0 0.0
  %1713 = vmatpush1.msra.mxu0 0.0
  %1714 = vmatprep.subr.mxu0 0.0
  %1715 = vmatpush1.msra.mxu0 0.0
  %1716 = vmatprep.subr.mxu0 0.0
  %1717 = vmatpush1.msra.mxu0 0.0
  %1718 = vmatprep.subr.mxu0 0.0
  %1719 = vmatpush1.msra.mxu0 0.0
  %1720 = vmatprep.subr.mxu0 0.0
  %1721 = vmatpush1.msra.mxu0 0.0
  %1722 = vmatprep.subr.mxu0 0.0
  %1723 = vmatpush1.msra.mxu0 0.0
  %1724 = vmatprep.subr.mxu0 0.0
  %1725 = vmatpush1.msra.mxu0 0.0
  %1726 = vmatprep.subr.mxu0 0.0
  %1727 = vmatpush1.msra.mxu0 0.0
  %1728 = vmatprep.subr.mxu0 0.0
  %1729 = vmatpush1.msra.mxu0 0.0
  %1730 = vmatprep.subr.mxu0 0.0
  %1731 = vmatpush1.msra.mxu0 0.0
  %1732 = vmatprep.subr.mxu0 0.0
  %1733 = vmatpush1.msra.mxu0 0.0
  %1734 = vmatprep.subr.mxu0 0.0
  %1735 = vmatpush1.msra.mxu0 0.0
  %1736 = vmatprep.subr.mxu0 0.0
  %1737 = vmatpush1.msra.mxu0 0.0
  %1738 = vmatprep.subr.mxu0 0.0
  %1739 = vmatpush1.msra.mxu0 0.0
  %1740 = vmatprep.subr.mxu0 0.0
  %1741 = vmatpush1.msra.mxu0 0.0
  %1742 = vmatprep.mubr.f32.mxu0 0.0
  %1743 = vmatmul.mubr.f32.gmra.mrb[0].mxu0 %v1676
  %v1744 = vpop.f32.mrb[0].mxu0
  %v1745 = vadd.f32 0.0, %v1744
  %v1746 = vpop.f32.mrb[0].mxu0
  %v1747 = vadd.f32 0.0, %v1746
  %1748 = vdwg.mxu0
  %v1749 = vadd.f32 %v1663, %v1745
  %v1750 = vadd.f32 %v1664, %v1747
  %v1751 = vmax.f32 %v1749, 0.0
  %v1752 = vmax.f32 %v1750, 0.0
  %1753 = vst [vmem:[%s8] sm:$0xff] %v1751
  %1754 = vst [vmem:[%s8 + $0x8] sm:$0xff] %v1752
  %s1755 = scalar_lea.vmem %s0, 4
  %v1756 = vld [vmem:[%s1755] sm:$0xf]
  %v1758 = vsel %vm114, %v1756, 0
  %1760 = vmatprep.subr.mxu0 %v98
  %1761 = vmatpush1.msra.mxu0 %v97
  %1762 = vmatprep.subr.mxu0 %v100
  %1763 = vmatpush1.msra.mxu0 %v99
  %1764 = vmatprep.subr.mxu0 %v102
  %1765 = vmatpush1.msra.mxu0 %v101
  %1766 = vmatprep.subr.mxu0 %v104
  %1767 = vmatpush1.msra.mxu0 %v103
  %1768 = vmatprep.subr.mxu0 %v106
  %1769 = vmatpush1.msra.mxu0 %v105
  %1770 = vmatprep.subr.mxu0 %v108
  %1771 = vmatpush1.msra.mxu0 %v107
  %1772 = vmatprep.subr.mxu0 %v110
  %1773 = vmatpush1.msra.mxu0 %v109
  %1774 = vmatprep.subr.mxu0 %v112
  %1775 = vmatpush1.msra.mxu0 %v111
  %1776 = vmatprep.subr.mxu0 0.0
  %1777 = vmatpush1.msra.mxu0 0.0
  %1778 = vmatprep.subr.mxu0 0.0
  %1779 = vmatpush1.msra.mxu0 0.0
  %1780 = vmatprep.subr.mxu0 0.0
  %1781 = vmatpush1.msra.mxu0 0.0
  %1782 = vmatprep.subr.mxu0 0.0
  %1783 = vmatpush1.msra.mxu0 0.0
  %1784 = vmatprep.subr.mxu0 0.0
  %1785 = vmatpush1.msra.mxu0 0.0
  %1786 = vmatprep.subr.mxu0 0.0
  %1787 = vmatpush1.msra.mxu0 0.0
  %1788 = vmatprep.subr.mxu0 0.0
  %1789 = vmatpush1.msra.mxu0 0.0
  %1790 = vmatprep.subr.mxu0 0.0
  %1791 = vmatpush1.msra.mxu0 0.0
  %1792 = vmatprep.subr.mxu0 0.0
  %1793 = vmatpush1.msra.mxu0 0.0
  %1794 = vmatprep.subr.mxu0 0.0
  %1795 = vmatpush1.msra.mxu0 0.0
  %1796 = vmatprep.subr.mxu0 0.0
  %1797 = vmatpush1.msra.mxu0 0.0
  %1798 = vmatprep.subr.mxu0 0.0
  %1799 = vmatpush1.msra.mxu0 0.0
  %1800 = vmatprep.subr.mxu0 0.0
  %1801 = vmatpush1.msra.mxu0 0.0
  %1802 = vmatprep.subr.mxu0 0.0
  %1803 = vmatpush1.msra.mxu0 0.0
  %1804 = vmatprep.subr.mxu0 0.0
  %1805 = vmatpush1.msra.mxu0 0.0
  %1806 = vmatprep.subr.mxu0 0.0
  %1807 = vmatpush1.msra.mxu0 0.0
  %1808 = vmatprep.subr.mxu0 0.0
  %1809 = vmatpush1.msra.mxu0 0.0
  %1810 = vmatprep.subr.mxu0 0.0
  %1811 = vmatpush1.msra.mxu0 0.0
  %1812 = vmatprep.subr.mxu0 0.0
  %1813 = vmatpush1.msra.mxu0 0.0
  %1814 = vmatprep.subr.mxu0 0.0
  %1815 = vmatpush1.msra.mxu0 0.0
  %1816 = vmatprep.subr.mxu0 0.0
  %1817 = vmatpush1.msra.mxu0 0.0
  %1818 = vmatprep.subr.mxu0 0.0
  %1819 = vmatpush1.msra.mxu0 0.0
  %1820 = vmatprep.subr.mxu0 0.0
  %1821 = vmatpush1.msra.mxu0 0.0
  %1822 = vmatprep.subr.mxu0 0.0
  %1823 = vmatpush1.msra.mxu0 0.0
  %1824 = vmatprep.mubr.f32.mxu0 0.0
  %1825 = vmatmul.mubr.f32.gmra.mrb[0].mxu0 %v1758
  %v1826 = vpop.f32.mrb[0].mxu0
  %v1827 = vadd.f32 0.0, %v1826
  %v1828 = vpop.f32.mrb[0].mxu0
  %v1829 = vadd.f32 0.0, %v1828
  %1830 = vdwg.mxu0
  %s1831 = scalar_lea.vmem %s1, 8
  %v1832 = vld [vmem:[%s1831] sm:$0xff]
  %v1834 = vcombine.low %v1832, %v1832
  %v1836 = vsel %vm193, %v1827, %v1834
  %v1837 = vsel %vm193, %v1829, %v1832
  %v1838 = vld [vmem:[%s5] sm:$0xff]
  %1840 = vset.pattern.permute.xlu0 0
  %1841 = vperm.xlu0 %1840, %v1838
  %v1842 = vpop.permute.xlu0 %1841
  %1844 = vrot.lane.b32.xlu0 %v1836, 17
  %v1845 = vpop.permute.xlu0 %1844
  %1846 = vrot.lane.b32.xlu0 %v1837, 17
  %v1847 = vpop.permute.xlu0 %1846
  %v1848 = vsel %vm208, %v1845, %v1847
  %v1849 = vsel %vm208, %v1847, %v1845
  %v1850 = vmul.f32 %v1849, %v36
  %v1851 = vmul.f32 %v1848, %v40
  %v1852 = vld [vmem:[%s4] sm:$0xff]
  %v1854 = vsel %vm214, %v1852, 0
  %1856 = vmatprep.subr.mxu0 %v1851
  %1857 = vmatpush1.msra.mxu0 %v1850
  %1858 = vmatprep.subr.mxu0 0.0
  %1859 = vmatpush1.msra.mxu0 0.0
  %1860 = vmatprep.subr.mxu0 0.0
  %1861 = vmatpush1.msra.mxu0 0.0
  %1862 = vmatprep.subr.mxu0 0.0
  %1863 = vmatpush1.msra.mxu0 0.0
  %1864 = vmatprep.subr.mxu0 0.0
  %1865 = vmatpush1.msra.mxu0 0.0
  %1866 = vmatprep.subr.mxu0 0.0
  %1867 = vmatpush1.msra.mxu0 0.0
  %1868 = vmatprep.subr.mxu0 0.0
  %1869 = vmatpush1.msra.mxu0 0.0
  %1870 = vmatprep.subr.mxu0 0.0
  %1871 = vmatpush1.msra.mxu0 0.0
  %1872 = vmatprep.subr.mxu0 0.0
  %1873 = vmatpush1.msra.mxu0 0.0
  %1874 = vmatprep.subr.mxu0 0.0
  %1875 = vmatpush1.msra.mxu0 0.0
  %1876 = vmatprep.subr.mxu0 0.0
  %1877 = vmatpush1.msra.mxu0 0.0
  %1878 = vmatprep.subr.mxu0 0.0
  %1879 = vmatpush1.msra.mxu0 0.0
  %1880 = vmatprep.subr.mxu0 0.0
  %1881 = vmatpush1.msra.mxu0 0.0
  %1882 = vmatprep.subr.mxu0 0.0
  %1883 = vmatpush1.msra.mxu0 0.0
  %1884 = vmatprep.subr.mxu0 0.0
  %1885 = vmatpush1.msra.mxu0 0.0
  %1886 = vmatprep.subr.mxu0 0.0
  %1887 = vmatpush1.msra.mxu0 0.0
  %1888 = vmatprep.subr.mxu0 0.0
  %1889 = vmatpush1.msra.mxu0 0.0
  %1890 = vmatprep.subr.mxu0 0.0
  %1891 = vmatpush1.msra.mxu0 0.0
  %1892 = vmatprep.subr.mxu0 0.0
  %1893 = vmatpush1.msra.mxu0 0.0
  %1894 = vmatprep.subr.mxu0 0.0
  %1895 = vmatpush1.msra.mxu0 0.0
  %1896 = vmatprep.subr.mxu0 0.0
  %1897 = vmatpush1.msra.mxu0 0.0
  %1898 = vmatprep.subr.mxu0 0.0
  %1899 = vmatpush1.msra.mxu0 0.0
  %1900 = vmatprep.subr.mxu0 0.0
  %1901 = vmatpush1.msra.mxu0 0.0
  %1902 = vmatprep.subr.mxu0 0.0
  %1903 = vmatpush1.msra.mxu0 0.0
  %1904 = vmatprep.subr.mxu0 0.0
  %1905 = vmatpush1.msra.mxu0 0.0
  %1906 = vmatprep.subr.mxu0 0.0
  %1907 = vmatpush1.msra.mxu0 0.0
  %1908 = vmatprep.subr.mxu0 0.0
  %1909 = vmatpush1.msra.mxu0 0.0
  %1910 = vmatprep.subr.mxu0 0.0
  %1911 = vmatpush1.msra.mxu0 0.0
  %1912 = vmatprep.subr.mxu0 0.0
  %1913 = vmatpush1.msra.mxu0 0.0
  %1914 = vmatprep.subr.mxu0 0.0
  %1915 = vmatpush1.msra.mxu0 0.0
  %1916 = vmatprep.subr.mxu0 0.0
  %1917 = vmatpush1.msra.mxu0 0.0
  %1918 = vmatprep.subr.mxu0 0.0
  %1919 = vmatpush1.msra.mxu0 0.0
  %1920 = vmatprep.mubr.f32.mxu0 0.0
  %1921 = vmatmul.mubr.f32.gmra.mrb[0].mxu0 %v1854
  %v1922 = vpop.f32.mrb[0].mxu0
  %v1923 = vadd.f32 0.0, %v1922
  %v1924 = vpop.f32.mrb[0].mxu0
  %v1925 = vadd.f32 0.0, %v1924
  %1926 = vdwg.mxu0
  %v1927 = vadd.f32 %v1842, %v1923
  %v1928 = vadd.f32 %v1842, %v1925
  %1929 = vrot.lane.b32.xlu0 %v1836, 16
  %v1930 = vpop.permute.xlu0 %1929
  %1931 = vrot.lane.b32.xlu0 %v1837, 16
  %v1932 = vpop.permute.xlu0 %1931
  %v1933 = vsel %vm295, %v1930, %v1932
  %v1934 = vsel %vm295, %v1932, %v1930
  %v1935 = vmul.f32 %v1934, %v44
  %v1936 = vmul.f32 %v1933, %v48
  %v1937 = vld [vmem:[%s300] sm:$0xff]
  %v1939 = vsel %vm214, %v1937, 0
  %1941 = vmatprep.subr.mxu0 %v1936
  %1942 = vmatpush1.msra.mxu0 %v1935
  %1943 = vmatprep.subr.mxu0 0.0
  %1944 = vmatpush1.msra.mxu0 0.0
  %1945 = vmatprep.subr.mxu0 0.0
  %1946 = vmatpush1.msra.mxu0 0.0
  %1947 = vmatprep.subr.mxu0 0.0
  %1948 = vmatpush1.msra.mxu0 0.0
  %1949 = vmatprep.subr.mxu0 0.0
  %1950 = vmatpush1.msra.mxu0 0.0
  %1951 = vmatprep.subr.mxu0 0.0
  %1952 = vmatpush1.msra.mxu0 0.0
  %1953 = vmatprep.subr.mxu0 0.0
  %1954 = vmatpush1.msra.mxu0 0.0
  %1955 = vmatprep.subr.mxu0 0.0
  %1956 = vmatpush1.msra.mxu0 0.0
  %1957 = vmatprep.subr.mxu0 0.0
  %1958 = vmatpush1.msra.mxu0 0.0
  %1959 = vmatprep.subr.mxu0 0.0
  %1960 = vmatpush1.msra.mxu0 0.0
  %1961 = vmatprep.subr.mxu0 0.0
  %1962 = vmatpush1.msra.mxu0 0.0
  %1963 = vmatprep.subr.mxu0 0.0
  %1964 = vmatpush1.msra.mxu0 0.0
  %1965 = vmatprep.subr.mxu0 0.0
  %1966 = vmatpush1.msra.mxu0 0.0
  %1967 = vmatprep.subr.mxu0 0.0
  %1968 = vmatpush1.msra.mxu0 0.0
  %1969 = vmatprep.subr.mxu0 0.0
  %1970 = vmatpush1.msra.mxu0 0.0
  %1971 = vmatprep.subr.mxu0 0.0
  %1972 = vmatpush1.msra.mxu0 0.0
  %1973 = vmatprep.subr.mxu0 0.0
  %1974 = vmatpush1.msra.mxu0 0.0
  %1975 = vmatprep.subr.mxu0 0.0
  %1976 = vmatpush1.msra.mxu0 0.0
  %1977 = vmatprep.subr.mxu0 0.0
  %1978 = vmatpush1.msra.mxu0 0.0
  %1979 = vmatprep.subr.mxu0 0.0
  %1980 = vmatpush1.msra.mxu0 0.0
  %1981 = vmatprep.subr.mxu0 0.0
  %1982 = vmatpush1.msra.mxu0 0.0
  %1983 = vmatprep.subr.mxu0 0.0
  %1984 = vmatpush1.msra.mxu0 0.0
  %1985 = vmatprep.subr.mxu0 0.0
  %1986 = vmatpush1.msra.mxu0 0.0
  %1987 = vmatprep.subr.mxu0 0.0
  %1988 = vmatpush1.msra.mxu0 0.0
  %1989 = vmatprep.subr.mxu0 0.0
  %1990 = vmatpush1.msra.mxu0 0.0
  %1991 = vmatprep.subr.mxu0 0.0
  %1992 = vmatpush1.msra.mxu0 0.0
  %1993 = vmatprep.subr.mxu0 0.0
  %1994 = vmatpush1.msra.mxu0 0.0
  %1995 = vmatprep.subr.mxu0 0.0
  %1996 = vmatpush1.msra.mxu0 0.0
  %1997 = vmatprep.subr.mxu0 0.0
  %1998 = vmatpush1.msra.mxu0 0.0
  %1999 = vmatprep.subr.mxu0 0.0
  %2000 = vmatpush1.msra.mxu0 0.0
  %2001 = vmatprep.subr.mxu0 0.0
  %2002 = vmatpush1.msra.mxu0 0.0
  %2003 = vmatprep.subr.mxu0 0.0
  %2004 = vmatpush1.msra.mxu0 0.0
  %2005 = vmatprep.mubr.f32.mxu0 0.0
  %2006 = vmatmul.mubr.f32.gmra.mrb[0].mxu0 %v1939
  %v2007 = vpop.f32.mrb[0].mxu0
  %v2008 = vadd.f32 0.0, %v2007
  %v2009 = vpop.f32.mrb[0].mxu0
  %v2010 = vadd.f32 0.0, %v2009
  %2011 = vdwg.mxu0
  %v2012 = vadd.f32 %v1927, %v2008
  %v2013 = vadd.f32 %v1928, %v2010
  %2014 = vrot.lane.b32.xlu0 %v1836, 15
  %v2015 = vpop.permute.xlu0 %2014
  %2016 = vrot.lane.b32.xlu0 %v1837, 15
  %v2017 = vpop.permute.xlu0 %2016
  %v2018 = vsel %vm382, %v2015, %v2017
  %v2019 = vsel %vm382, %v2017, %v2015
  %v2020 = vmul.f32 %v2019, %v52
  %v2021 = vmul.f32 %v2018, %v56
  %v2022 = vld [vmem:[%s387] sm:$0xff]
  %v2024 = vsel %vm214, %v2022, 0
  %2026 = vmatprep.subr.mxu0 %v2021
  %2027 = vmatpush1.msra.mxu0 %v2020
  %2028 = vmatprep.subr.mxu0 0.0
  %2029 = vmatpush1.msra.mxu0 0.0
  %2030 = vmatprep.subr.mxu0 0.0
  %2031 = vmatpush1.msra.mxu0 0.0
  %2032 = vmatprep.subr.mxu0 0.0
  %2033 = vmatpush1.msra.mxu0 0.0
  %2034 = vmatprep.subr.mxu0 0.0
  %2035 = vmatpush1.msra.mxu0 0.0
  %2036 = vmatprep.subr.mxu0 0.0
  %2037 = vmatpush1.msra.mxu0 0.0
  %2038 = vmatprep.subr.mxu0 0.0
  %2039 = vmatpush1.msra.mxu0 0.0
  %2040 = vmatprep.subr.mxu0 0.0
  %2041 = vmatpush1.msra.mxu0 0.0
  %2042 = vmatprep.subr.mxu0 0.0
  %2043 = vmatpush1.msra.mxu0 0.0
  %2044 = vmatprep.subr.mxu0 0.0
  %2045 = vmatpush1.msra.mxu0 0.0
  %2046 = vmatprep.subr.mxu0 0.0
  %2047 = vmatpush1.msra.mxu0 0.0
  %2048 = vmatprep.subr.mxu0 0.0
  %2049 = vmatpush1.msra.mxu0 0.0
  %2050 = vmatprep.subr.mxu0 0.0
  %2051 = vmatpush1.msra.mxu0 0.0
  %2052 = vmatprep.subr.mxu0 0.0
  %2053 = vmatpush1.msra.mxu0 0.0
  %2054 = vmatprep.subr.mxu0 0.0
  %2055 = vmatpush1.msra.mxu0 0.0
  %2056 = vmatprep.subr.mxu0 0.0
  %2057 = vmatpush1.msra.mxu0 0.0
  %2058 = vmatprep.subr.mxu0 0.0
  %2059 = vmatpush1.msra.mxu0 0.0
  %2060 = vmatprep.subr.mxu0 0.0
  %2061 = vmatpush1.msra.mxu0 0.0
  %2062 = vmatprep.subr.mxu0 0.0
  %2063 = vmatpush1.msra.mxu0 0.0
  %2064 = vmatprep.subr.mxu0 0.0
  %2065 = vmatpush1.msra.mxu0 0.0
  %2066 = vmatprep.subr.mxu0 0.0
  %2067 = vmatpush1.msra.mxu0 0.0
  %2068 = vmatprep.subr.mxu0 0.0
  %2069 = vmatpush1.msra.mxu0 0.0
  %2070 = vmatprep.subr.mxu0 0.0
  %2071 = vmatpush1.msra.mxu0 0.0
  %2072 = vmatprep.subr.mxu0 0.0
  %2073 = vmatpush1.msra.mxu0 0.0
  %2074 = vmatprep.subr.mxu0 0.0
  %2075 = vmatpush1.msra.mxu0 0.0
  %2076 = vmatprep.subr.mxu0 0.0
  %2077 = vmatpush1.msra.mxu0 0.0
  %2078 = vmatprep.subr.mxu0 0.0
  %2079 = vmatpush1.msra.mxu0 0.0
  %2080 = vmatprep.subr.mxu0 0.0
  %2081 = vmatpush1.msra.mxu0 0.0
  %2082 = vmatprep.subr.mxu0 0.0
  %2083 = vmatpush1.msra.mxu0 0.0
  %2084 = vmatprep.subr.mxu0 0.0
  %2085 = vmatpush1.msra.mxu0 0.0
  %2086 = vmatprep.subr.mxu0 0.0
  %2087 = vmatpush1.msra.mxu0 0.0
  %2088 = vmatprep.subr.mxu0 0.0
  %2089 = vmatpush1.msra.mxu0 0.0
  %2090 = vmatprep.mubr.f32.mxu0 0.0
  %2091 = vmatmul.mubr.f32.gmra.mrb[0].mxu0 %v2024
  %v2092 = vpop.f32.mrb[0].mxu0
  %v2093 = vadd.f32 0.0, %v2092
  %v2094 = vpop.f32.mrb[0].mxu0
  %v2095 = vadd.f32 0.0, %v2094
  %2096 = vdwg.mxu0
  %v2097 = vadd.f32 %v2012, %v2093
  %v2098 = vadd.f32 %v2013, %v2095
  %2099 = vrot.lane.b32.xlu0 %v1836, 1
  %v2100 = vpop.permute.xlu0 %2099
  %2101 = vrot.lane.b32.xlu0 %v1837, 1
  %v2102 = vpop.permute.xlu0 %2101
  %v2103 = vsel %vm469, %v2100, %v2102
  %v2104 = vsel %vm469, %v2102, %v2100
  %v2105 = vmul.f32 %v2104, %v60
  %v2106 = vmul.f32 %v2103, %v64
  %v2107 = vld [vmem:[%s474] sm:$0xff]
  %v2109 = vsel %vm214, %v2107, 0
  %2111 = vmatprep.subr.mxu0 %v2106
  %2112 = vmatpush1.msra.mxu0 %v2105
  %2113 = vmatprep.subr.mxu0 0.0
  %2114 = vmatpush1.msra.mxu0 0.0
  %2115 = vmatprep.subr.mxu0 0.0
  %2116 = vmatpush1.msra.mxu0 0.0
  %2117 = vmatprep.subr.mxu0 0.0
  %2118 = vmatpush1.msra.mxu0 0.0
  %2119 = vmatprep.subr.mxu0 0.0
  %2120 = vmatpush1.msra.mxu0 0.0
  %2121 = vmatprep.subr.mxu0 0.0
  %2122 = vmatpush1.msra.mxu0 0.0
  %2123 = vmatprep.subr.mxu0 0.0
  %2124 = vmatpush1.msra.mxu0 0.0
  %2125 = vmatprep.subr.mxu0 0.0
  %2126 = vmatpush1.msra.mxu0 0.0
  %2127 = vmatprep.subr.mxu0 0.0
  %2128 = vmatpush1.msra.mxu0 0.0
  %2129 = vmatprep.subr.mxu0 0.0
  %2130 = vmatpush1.msra.mxu0 0.0
  %2131 = vmatprep.subr.mxu0 0.0
  %2132 = vmatpush1.msra.mxu0 0.0
  %2133 = vmatprep.subr.mxu0 0.0
  %2134 = vmatpush1.msra.mxu0 0.0
  %2135 = vmatprep.subr.mxu0 0.0
  %2136 = vmatpush1.msra.mxu0 0.0
  %2137 = vmatprep.subr.mxu0 0.0
  %2138 = vmatpush1.msra.mxu0 0.0
  %2139 = vmatprep.subr.mxu0 0.0
  %2140 = vmatpush1.msra.mxu0 0.0
  %2141 = vmatprep.subr.mxu0 0.0
  %2142 = vmatpush1.msra.mxu0 0.0
  %2143 = vmatprep.subr.mxu0 0.0
  %2144 = vmatpush1.msra.mxu0 0.0
  %2145 = vmatprep.subr.mxu0 0.0
  %2146 = vmatpush1.msra.mxu0 0.0
  %2147 = vmatprep.subr.mxu0 0.0
  %2148 = vmatpush1.msra.mxu0 0.0
  %2149 = vmatprep.subr.mxu0 0.0
  %2150 = vmatpush1.msra.mxu0 0.0
  %2151 = vmatprep.subr.mxu0 0.0
  %2152 = vmatpush1.msra.mxu0 0.0
  %2153 = vmatprep.subr.mxu0 0.0
  %2154 = vmatpush1.msra.mxu0 0.0
  %2155 = vmatprep.subr.mxu0 0.0
  %2156 = vmatpush1.msra.mxu0 0.0
  %2157 = vmatprep.subr.mxu0 0.0
  %2158 = vmatpush1.msra.mxu0 0.0
  %2159 = vmatprep.subr.mxu0 0.0
  %2160 = vmatpush1.msra.mxu0 0.0
  %2161 = vmatprep.subr.mxu0 0.0
  %2162 = vmatpush1.msra.mxu0 0.0
  %2163 = vmatprep.subr.mxu0 0.0
  %2164 = vmatpush1.msra.mxu0 0.0
  %2165 = vmatprep.subr.mxu0 0.0
  %2166 = vmatpush1.msra.mxu0 0.0
  %2167 = vmatprep.subr.mxu0 0.0
  %2168 = vmatpush1.msra.mxu0 0.0
  %2169 = vmatprep.subr.mxu0 0.0
  %2170 = vmatpush1.msra.mxu0 0.0
  %2171 = vmatprep.subr.mxu0 0.0
  %2172 = vmatpush1.msra.mxu0 0.0
  %2173 = vmatprep.subr.mxu0 0.0
  %2174 = vmatpush1.msra.mxu0 0.0
  %2175 = vmatprep.mubr.f32.mxu0 0.0
  %2176 = vmatmul.mubr.f32.gmra.mrb[0].mxu0 %v2109
  %v2177 = vpop.f32.mrb[0].mxu0
  %v2178 = vadd.f32 0.0, %v2177
  %v2179 = vpop.f32.mrb[0].mxu0
  %v2180 = vadd.f32 0.0, %v2179
  %2181 = vdwg.mxu0
  %v2182 = vadd.f32 %v2097, %v2178
  %v2183 = vadd.f32 %v2098, %v2180
  %v2184 = vld [vmem:[%s552] sm:$0xff]
  %v2186 = vsel %vm214, %v2184, 0
  %2188 = vmatprep.subr.mxu0 %v1837
  %2189 = vmatpush1.msra.mxu0 %v1836
  %2190 = vmatprep.subr.mxu0 0.0
  %2191 = vmatpush1.msra.mxu0 0.0
  %2192 = vmatprep.subr.mxu0 0.0
  %2193 = vmatpush1.msra.mxu0 0.0
  %2194 = vmatprep.subr.mxu0 0.0
  %2195 = vmatpush1.msra.mxu0 0.0
  %2196 = vmatprep.subr.mxu0 0.0
  %2197 = vmatpush1.msra.mxu0 0.0
  %2198 = vmatprep.subr.mxu0 0.0
  %2199 = vmatpush1.msra.mxu0 0.0
  %2200 = vmatprep.subr.mxu0 0.0
  %2201 = vmatpush1.msra.mxu0 0.0
  %2202 = vmatprep.subr.mxu0 0.0
  %2203 = vmatpush1.msra.mxu0 0.0
  %2204 = vmatprep.subr.mxu0 0.0
  %2205 = vmatpush1.msra.mxu0 0.0
  %2206 = vmatprep.subr.mxu0 0.0
  %2207 = vmatpush1.msra.mxu0 0.0
  %2208 = vmatprep.subr.mxu0 0.0
  %2209 = vmatpush1.msra.mxu0 0.0
  %2210 = vmatprep.subr.mxu0 0.0
  %2211 = vmatpush1.msra.mxu0 0.0
  %2212 = vmatprep.subr.mxu0 0.0
  %2213 = vmatpush1.msra.mxu0 0.0
  %2214 = vmatprep.subr.mxu0 0.0
  %2215 = vmatpush1.msra.mxu0 0.0
  %2216 = vmatprep.subr.mxu0 0.0
  %2217 = vmatpush1.msra.mxu0 0.0
  %2218 = vmatprep.subr.mxu0 0.0
  %2219 = vmatpush1.msra.mxu0 0.0
  %2220 = vmatprep.subr.mxu0 0.0
  %2221 = vmatpush1.msra.mxu0 0.0
  %2222 = vmatprep.subr.mxu0 0.0
  %2223 = vmatpush1.msra.mxu0 0.0
  %2224 = vmatprep.subr.mxu0 0.0
  %2225 = vmatpush1.msra.mxu0 0.0
  %2226 = vmatprep.subr.mxu0 0.0
  %2227 = vmatpush1.msra.mxu0 0.0
  %2228 = vmatprep.subr.mxu0 0.0
  %2229 = vmatpush1.msra.mxu0 0.0
  %2230 = vmatprep.subr.mxu0 0.0
  %2231 = vmatpush1.msra.mxu0 0.0
  %2232 = vmatprep.subr.mxu0 0.0
  %2233 = vmatpush1.msra.mxu0 0.0
  %2234 = vmatprep.subr.mxu0 0.0
  %2235 = vmatpush1.msra.mxu0 0.0
  %2236 = vmatprep.subr.mxu0 0.0
  %2237 = vmatpush1.msra.mxu0 0.0
  %2238 = vmatprep.subr.mxu0 0.0
  %2239 = vmatpush1.msra.mxu0 0.0
  %2240 = vmatprep.subr.mxu0 0.0
  %2241 = vmatpush1.msra.mxu0 0.0
  %2242 = vmatprep.subr.mxu0 0.0
  %2243 = vmatpush1.msra.mxu0 0.0
  %2244 = vmatprep.subr.mxu0 0.0
  %2245 = vmatpush1.msra.mxu0 0.0
  %2246 = vmatprep.subr.mxu0 0.0
  %2247 = vmatpush1.msra.mxu0 0.0
  %2248 = vmatprep.subr.mxu0 0.0
  %2249 = vmatpush1.msra.mxu0 0.0
  %2250 = vmatprep.subr.mxu0 0.0
  %2251 = vmatpush1.msra.mxu0 0.0
  %2252 = vmatprep.mubr.f32.mxu0 0.0
  %2253 = vmatmul.mubr.f32.gmra.mrb[0].mxu0 %v2186
  %v2254 = vpop.f32.mrb[0].mxu0
  %v2255 = vadd.f32 0.0, %v2254
  %v2256 = vpop.f32.mrb[0].mxu0
  %v2257 = vadd.f32 0.0, %v2256
  %2258 = vdwg.mxu0
  %v2259 = vadd.f32 %v2182, %v2255
  %v2260 = vadd.f32 %v2183, %v2257
  %2261 = vrot.lane.b32.xlu0 %v1836, 127
  %v2262 = vpop.permute.xlu0 %2261
  %2263 = vrot.lane.b32.xlu0 %v1837, 127
  %v2264 = vpop.permute.xlu0 %2263
  %v2265 = vsel %vm634, %v2262, %v2264
  %v2266 = vsel %vm634, %v2264, %v2262
  %v2267 = vmul.f32 %v2265, %v68
  %v2268 = vmul.f32 %v2266, %v72
  %v2269 = vld [vmem:[%s639] sm:$0xff]
  %v2271 = vsel %vm214, %v2269, 0
  %2273 = vmatprep.subr.mxu0 %v2268
  %2274 = vmatpush1.msra.mxu0 %v2267
  %2275 = vmatprep.subr.mxu0 0.0
  %2276 = vmatpush1.msra.mxu0 0.0
  %2277 = vmatprep.subr.mxu0 0.0
  %2278 = vmatpush1.msra.mxu0 0.0
  %2279 = vmatprep.subr.mxu0 0.0
  %2280 = vmatpush1.msra.mxu0 0.0
  %2281 = vmatprep.subr.mxu0 0.0
  %2282 = vmatpush1.msra.mxu0 0.0
  %2283 = vmatprep.subr.mxu0 0.0
  %2284 = vmatpush1.msra.mxu0 0.0
  %2285 = vmatprep.subr.mxu0 0.0
  %2286 = vmatpush1.msra.mxu0 0.0
  %2287 = vmatprep.subr.mxu0 0.0
  %2288 = vmatpush1.msra.mxu0 0.0
  %2289 = vmatprep.subr.mxu0 0.0
  %2290 = vmatpush1.msra.mxu0 0.0
  %2291 = vmatprep.subr.mxu0 0.0
  %2292 = vmatpush1.msra.mxu0 0.0
  %2293 = vmatprep.subr.mxu0 0.0
  %2294 = vmatpush1.msra.mxu0 0.0
  %2295 = vmatprep.subr.mxu0 0.0
  %2296 = vmatpush1.msra.mxu0 0.0
  %2297 = vmatprep.subr.mxu0 0.0
  %2298 = vmatpush1.msra.mxu0 0.0
  %2299 = vmatprep.subr.mxu0 0.0
  %2300 = vmatpush1.msra.mxu0 0.0
  %2301 = vmatprep.subr.mxu0 0.0
  %2302 = vmatpush1.msra.mxu0 0.0
  %2303 = vmatprep.subr.mxu0 0.0
  %2304 = vmatpush1.msra.mxu0 0.0
  %2305 = vmatprep.subr.mxu0 0.0
  %2306 = vmatpush1.msra.mxu0 0.0
  %2307 = vmatprep.subr.mxu0 0.0
  %2308 = vmatpush1.msra.mxu0 0.0
  %2309 = vmatprep.subr.mxu0 0.0
  %2310 = vmatpush1.msra.mxu0 0.0
  %2311 = vmatprep.subr.mxu0 0.0
  %2312 = vmatpush1.msra.mxu0 0.0
  %2313 = vmatprep.subr.mxu0 0.0
  %2314 = vmatpush1.msra.mxu0 0.0
  %2315 = vmatprep.subr.mxu0 0.0
  %2316 = vmatpush1.msra.mxu0 0.0
  %2317 = vmatprep.subr.mxu0 0.0
  %2318 = vmatpush1.msra.mxu0 0.0
  %2319 = vmatprep.subr.mxu0 0.0
  %2320 = vmatpush1.msra.mxu0 0.0
  %2321 = vmatprep.subr.mxu0 0.0
  %2322 = vmatpush1.msra.mxu0 0.0
  %2323 = vmatprep.subr.mxu0 0.0
  %2324 = vmatpush1.msra.mxu0 0.0
  %2325 = vmatprep.subr.mxu0 0.0
  %2326 = vmatpush1.msra.mxu0 0.0
  %2327 = vmatprep.subr.mxu0 0.0
  %2328 = vmatpush1.msra.mxu0 0.0
  %2329 = vmatprep.subr.mxu0 0.0
  %2330 = vmatpush1.msra.mxu0 0.0
  %2331 = vmatprep.subr.mxu0 0.0
  %2332 = vmatpush1.msra.mxu0 0.0
  %2333 = vmatprep.subr.mxu0 0.0
  %2334 = vmatpush1.msra.mxu0 0.0
  %2335 = vmatprep.subr.mxu0 0.0
  %2336 = vmatpush1.msra.mxu0 0.0
  %2337 = vmatprep.mubr.f32.mxu0 0.0
  %2338 = vmatmul.mubr.f32.gmra.mrb[0].mxu0 %v2271
  %v2339 = vpop.f32.mrb[0].mxu0
  %v2340 = vadd.f32 0.0, %v2339
  %v2341 = vpop.f32.mrb[0].mxu0
  %v2342 = vadd.f32 0.0, %v2341
  %2343 = vdwg.mxu0
  %v2344 = vadd.f32 %v2259, %v2340
  %v2345 = vadd.f32 %v2260, %v2342
  %2346 = vrot.lane.b32.xlu0 %v1836, 113
  %v2347 = vpop.permute.xlu0 %2346
  %2348 = vrot.lane.b32.xlu0 %v1837, 113
  %v2349 = vpop.permute.xlu0 %2348
  %v2350 = vsel %vm721, %v2347, %v2349
  %v2351 = vsel %vm721, %v2349, %v2347
  %v2352 = vmul.f32 %v2350, %v76
  %v2353 = vmul.f32 %v2351, %v80
  %v2354 = vld [vmem:[%s726] sm:$0xff]
  %v2356 = vsel %vm214, %v2354, 0
  %2358 = vmatprep.subr.mxu0 %v2353
  %2359 = vmatpush1.msra.mxu0 %v2352
  %2360 = vmatprep.subr.mxu0 0.0
  %2361 = vmatpush1.msra.mxu0 0.0
  %2362 = vmatprep.subr.mxu0 0.0
  %2363 = vmatpush1.msra.mxu0 0.0
  %2364 = vmatprep.subr.mxu0 0.0
  %2365 = vmatpush1.msra.mxu0 0.0
  %2366 = vmatprep.subr.mxu0 0.0
  %2367 = vmatpush1.msra.mxu0 0.0
  %2368 = vmatprep.subr.mxu0 0.0
  %2369 = vmatpush1.msra.mxu0 0.0
  %2370 = vmatprep.subr.mxu0 0.0
  %2371 = vmatpush1.msra.mxu0 0.0
  %2372 = vmatprep.subr.mxu0 0.0
  %2373 = vmatpush1.msra.mxu0 0.0
  %2374 = vmatprep.subr.mxu0 0.0
  %2375 = vmatpush1.msra.mxu0 0.0
  %2376 = vmatprep.subr.mxu0 0.0
  %2377 = vmatpush1.msra.mxu0 0.0
  %2378 = vmatprep.subr.mxu0 0.0
  %2379 = vmatpush1.msra.mxu0 0.0
  %2380 = vmatprep.subr.mxu0 0.0
  %2381 = vmatpush1.msra.mxu0 0.0
  %2382 = vmatprep.subr.mxu0 0.0
  %2383 = vmatpush1.msra.mxu0 0.0
  %2384 = vmatprep.subr.mxu0 0.0
  %2385 = vmatpush1.msra.mxu0 0.0
  %2386 = vmatprep.subr.mxu0 0.0
  %2387 = vmatpush1.msra.mxu0 0.0
  %2388 = vmatprep.subr.mxu0 0.0
  %2389 = vmatpush1.msra.mxu0 0.0
  %2390 = vmatprep.subr.mxu0 0.0
  %2391 = vmatpush1.msra.mxu0 0.0
  %2392 = vmatprep.subr.mxu0 0.0
  %2393 = vmatpush1.msra.mxu0 0.0
  %2394 = vmatprep.subr.mxu0 0.0
  %2395 = vmatpush1.msra.mxu0 0.0
  %2396 = vmatprep.subr.mxu0 0.0
  %2397 = vmatpush1.msra.mxu0 0.0
  %2398 = vmatprep.subr.mxu0 0.0
  %2399 = vmatpush1.msra.mxu0 0.0
  %2400 = vmatprep.subr.mxu0 0.0
  %2401 = vmatpush1.msra.mxu0 0.0
  %2402 = vmatprep.subr.mxu0 0.0
  %2403 = vmatpush1.msra.mxu0 0.0
  %2404 = vmatprep.subr.mxu0 0.0
  %2405 = vmatpush1.msra.mxu0 0.0
  %2406 = vmatprep.subr.mxu0 0.0
  %2407 = vmatpush1.msra.mxu0 0.0
  %2408 = vmatprep.subr.mxu0 0.0
  %2409 = vmatpush1.msra.mxu0 0.0
  %2410 = vmatprep.subr.mxu0 0.0
  %2411 = vmatpush1.msra.mxu0 0.0
  %2412 = vmatprep.subr.mxu0 0.0
  %2413 = vmatpush1.msra.mxu0 0.0
  %2414 = vmatprep.subr.mxu0 0.0
  %2415 = vmatpush1.msra.mxu0 0.0
  %2416 = vmatprep.subr.mxu0 0.0
  %2417 = vmatpush1.msra.mxu0 0.0
  %2418 = vmatprep.subr.mxu0 0.0
  %2419 = vmatpush1.msra.mxu0 0.0
  %2420 = vmatprep.subr.mxu0 0.0
  %2421 = vmatpush1.msra.mxu0 0.0
  %2422 = vmatprep.mubr.f32.mxu0 0.0
  %2423 = vmatmul.mubr.f32.gmra.mrb[0].mxu0 %v2356
  %v2424 = vpop.f32.mrb[0].mxu0
  %v2425 = vadd.f32 0.0, %v2424
  %v2426 = vpop.f32.mrb[0].mxu0
  %v2427 = vadd.f32 0.0, %v2426
  %2428 = vdwg.mxu0
  %v2429 = vadd.f32 %v2344, %v2425
  %v2430 = vadd.f32 %v2345, %v2427
  %2431 = vrot.lane.b32.xlu0 %v1836, 112
  %v2432 = vpop.permute.xlu0 %2431
  %2433 = vrot.lane.b32.xlu0 %v1837, 112
  %v2434 = vpop.permute.xlu0 %2433
  %v2435 = vsel %vm808, %v2432, %v2434
  %v2436 = vsel %vm808, %v2434, %v2432
  %v2437 = vmul.f32 %v2435, %v84
  %v2438 = vmul.f32 %v2436, %v88
  %v2439 = vld [vmem:[%s813] sm:$0xff]
  %v2441 = vsel %vm214, %v2439, 0
  %2443 = vmatprep.subr.mxu0 %v2438
  %2444 = vmatpush1.msra.mxu0 %v2437
  %2445 = vmatprep.subr.mxu0 0.0
  %2446 = vmatpush1.msra.mxu0 0.0
  %2447 = vmatprep.subr.mxu0 0.0
  %2448 = vmatpush1.msra.mxu0 0.0
  %2449 = vmatprep.subr.mxu0 0.0
  %2450 = vmatpush1.msra.mxu0 0.0
  %2451 = vmatprep.subr.mxu0 0.0
  %2452 = vmatpush1.msra.mxu0 0.0
  %2453 = vmatprep.subr.mxu0 0.0
  %2454 = vmatpush1.msra.mxu0 0.0
  %2455 = vmatprep.subr.mxu0 0.0
  %2456 = vmatpush1.msra.mxu0 0.0
  %2457 = vmatprep.subr.mxu0 0.0
  %2458 = vmatpush1.msra.mxu0 0.0
  %2459 = vmatprep.subr.mxu0 0.0
  %2460 = vmatpush1.msra.mxu0 0.0
  %2461 = vmatprep.subr.mxu0 0.0
  %2462 = vmatpush1.msra.mxu0 0.0
  %2463 = vmatprep.subr.mxu0 0.0
  %2464 = vmatpush1.msra.mxu0 0.0
  %2465 = vmatprep.subr.mxu0 0.0
  %2466 = vmatpush1.msra.mxu0 0.0
  %2467 = vmatprep.subr.mxu0 0.0
  %2468 = vmatpush1.msra.mxu0 0.0
  %2469 = vmatprep.subr.mxu0 0.0
  %2470 = vmatpush1.msra.mxu0 0.0
  %2471 = vmatprep.subr.mxu0 0.0
  %2472 = vmatpush1.msra.mxu0 0.0
  %2473 = vmatprep.subr.mxu0 0.0
  %2474 = vmatpush1.msra.mxu0 0.0
  %2475 = vmatprep.subr.mxu0 0.0
  %2476 = vmatpush1.msra.mxu0 0.0
  %2477 = vmatprep.subr.mxu0 0.0
  %2478 = vmatpush1.msra.mxu0 0.0
  %2479 = vmatprep.subr.mxu0 0.0
  %2480 = vmatpush1.msra.mxu0 0.0
  %2481 = vmatprep.subr.mxu0 0.0
  %2482 = vmatpush1.msra.mxu0 0.0
  %2483 = vmatprep.subr.mxu0 0.0
  %2484 = vmatpush1.msra.mxu0 0.0
  %2485 = vmatprep.subr.mxu0 0.0
  %2486 = vmatpush1.msra.mxu0 0.0
  %2487 = vmatprep.subr.mxu0 0.0
  %2488 = vmatpush1.msra.mxu0 0.0
  %2489 = vmatprep.subr.mxu0 0.0
  %2490 = vmatpush1.msra.mxu0 0.0
  %2491 = vmatprep.subr.mxu0 0.0
  %2492 = vmatpush1.msra.mxu0 0.0
  %2493 = vmatprep.subr.mxu0 0.0
  %2494 = vmatpush1.msra.mxu0 0.0
  %2495 = vmatprep.subr.mxu0 0.0
  %2496 = vmatpush1.msra.mxu0 0.0
  %2497 = vmatprep.subr.mxu0 0.0
  %2498 = vmatpush1.msra.mxu0 0.0
  %2499 = vmatprep.subr.mxu0 0.0
  %2500 = vmatpush1.msra.mxu0 0.0
  %2501 = vmatprep.subr.mxu0 0.0
  %2502 = vmatpush1.msra.mxu0 0.0
  %2503 = vmatprep.subr.mxu0 0.0
  %2504 = vmatpush1.msra.mxu0 0.0
  %2505 = vmatprep.subr.mxu0 0.0
  %2506 = vmatpush1.msra.mxu0 0.0
  %2507 = vmatprep.mubr.f32.mxu0 0.0
  %2508 = vmatmul.mubr.f32.gmra.mrb[0].mxu0 %v2441
  %v2509 = vpop.f32.mrb[0].mxu0
  %v2510 = vadd.f32 0.0, %v2509
  %v2511 = vpop.f32.mrb[0].mxu0
  %v2512 = vadd.f32 0.0, %v2511
  %2513 = vdwg.mxu0
  %v2514 = vadd.f32 %v2429, %v2510
  %v2515 = vadd.f32 %v2430, %v2512
  %2516 = vrot.lane.b32.xlu0 %v1836, 111
  %v2517 = vpop.permute.xlu0 %2516
  %2518 = vrot.lane.b32.xlu0 %v1837, 111
  %v2519 = vpop.permute.xlu0 %2518
  %v2520 = vsel %vm895, %v2517, %v2519
  %v2521 = vsel %vm895, %v2519, %v2517
  %v2522 = vmul.f32 %v2520, %v92
  %v2523 = vmul.f32 %v2521, %v96
  %v2524 = vld [vmem:[%s900] sm:$0xff]
  %v2526 = vsel %vm214, %v2524, 0
  %2528 = vmatprep.subr.mxu0 %v2523
  %2529 = vmatpush1.msra.mxu0 %v2522
  %2530 = vmatprep.subr.mxu0 0.0
  %2531 = vmatpush1.msra.mxu0 0.0
  %2532 = vmatprep.subr.mxu0 0.0
  %2533 = vmatpush1.msra.mxu0 0.0
  %2534 = vmatprep.subr.mxu0 0.0
  %2535 = vmatpush1.msra.mxu0 0.0
  %2536 = vmatprep.subr.mxu0 0.0
  %2537 = vmatpush1.msra.mxu0 0.0
  %2538 = vmatprep.subr.mxu0 0.0
  %2539 = vmatpush1.msra.mxu0 0.0
  %2540 = vmatprep.subr.mxu0 0.0
  %2541 = vmatpush1.msra.mxu0 0.0
  %2542 = vmatprep.subr.mxu0 0.0
  %2543 = vmatpush1.msra.mxu0 0.0
  %2544 = vmatprep.subr.mxu0 0.0
  %2545 = vmatpush1.msra.mxu0 0.0
  %2546 = vmatprep.subr.mxu0 0.0
  %2547 = vmatpush1.msra.mxu0 0.0
  %2548 = vmatprep.subr.mxu0 0.0
  %2549 = vmatpush1.msra.mxu0 0.0
  %2550 = vmatprep.subr.mxu0 0.0
  %2551 = vmatpush1.msra.mxu0 0.0
  %2552 = vmatprep.subr.mxu0 0.0
  %2553 = vmatpush1.msra.mxu0 0.0
  %2554 = vmatprep.subr.mxu0 0.0
  %2555 = vmatpush1.msra.mxu0 0.0
  %2556 = vmatprep.subr.mxu0 0.0
  %2557 = vmatpush1.msra.mxu0 0.0
  %2558 = vmatprep.subr.mxu0 0.0
  %2559 = vmatpush1.msra.mxu0 0.0
  %2560 = vmatprep.subr.mxu0 0.0
  %2561 = vmatpush1.msra.mxu0 0.0
  %2562 = vmatprep.subr.mxu0 0.0
  %2563 = vmatpush1.msra.mxu0 0.0
  %2564 = vmatprep.subr.mxu0 0.0
  %2565 = vmatpush1.msra.mxu0 0.0
  %2566 = vmatprep.subr.mxu0 0.0
  %2567 = vmatpush1.msra.mxu0 0.0
  %2568 = vmatprep.subr.mxu0 0.0
  %2569 = vmatpush1.msra.mxu0 0.0
  %2570 = vmatprep.subr.mxu0 0.0
  %2571 = vmatpush1.msra.mxu0 0.0
  %2572 = vmatprep.subr.mxu0 0.0
  %2573 = vmatpush1.msra.mxu0 0.0
  %2574 = vmatprep.subr.mxu0 0.0
  %2575 = vmatpush1.msra.mxu0 0.0
  %2576 = vmatprep.subr.mxu0 0.0
  %2577 = vmatpush1.msra.mxu0 0.0
  %2578 = vmatprep.subr.mxu0 0.0
  %2579 = vmatpush1.msra.mxu0 0.0
  %2580 = vmatprep.subr.mxu0 0.0
  %2581 = vmatpush1.msra.mxu0 0.0
  %2582 = vmatprep.subr.mxu0 0.0
  %2583 = vmatpush1.msra.mxu0 0.0
  %2584 = vmatprep.subr.mxu0 0.0
  %2585 = vmatpush1.msra.mxu0 0.0
  %2586 = vmatprep.subr.mxu0 0.0
  %2587 = vmatpush1.msra.mxu0 0.0
  %2588 = vmatprep.subr.mxu0 0.0
  %2589 = vmatpush1.msra.mxu0 0.0
  %2590 = vmatprep.subr.mxu0 0.0
  %2591 = vmatpush1.msra.mxu0 0.0
  %2592 = vmatprep.mubr.f32.mxu0 0.0
  %2593 = vmatmul.mubr.f32.gmra.mrb[0].mxu0 %v2526
  %v2594 = vpop.f32.mrb[0].mxu0
  %v2595 = vadd.f32 0.0, %v2594
  %v2596 = vpop.f32.mrb[0].mxu0
  %v2597 = vadd.f32 0.0, %v2596
  %2598 = vdwg.mxu0
  %v2599 = vadd.f32 %v2514, %v2595
  %v2600 = vadd.f32 %v2515, %v2597
  %v2601 = vmax.f32 %v2599, 0.0
  %v2602 = vmax.f32 %v2600, 0.0
  %v2603 = vld [vmem:[%s7] sm:$0xff]
  %2605 = vset.pattern.permute.xlu0 0
  %2606 = vperm.xlu0 %2605, %v2603
  %v2607 = vpop.permute.xlu0 %2606
  %2609 = vrot.lane.b32.xlu0 %v2601, 17
  %v2610 = vpop.permute.xlu0 %2609
  %2611 = vrot.lane.b32.xlu0 %v2602, 17
  %v2612 = vpop.permute.xlu0 %2611
  %v2613 = vsel %vm208, %v2610, %v2612
  %v2614 = vsel %vm208, %v2612, %v2610
  %v2615 = vmul.f32 %v2614, %v36
  %v2616 = vmul.f32 %v2613, %v40
  %v2617 = vld [vmem:[%s6] sm:$0xff]
  %v2619 = vsel %vm214, %v2617, 0
  %2621 = vmatprep.subr.mxu0 %v2616
  %2622 = vmatpush1.msra.mxu0 %v2615
  %2623 = vmatprep.subr.mxu0 0.0
  %2624 = vmatpush1.msra.mxu0 0.0
  %2625 = vmatprep.subr.mxu0 0.0
  %2626 = vmatpush1.msra.mxu0 0.0
  %2627 = vmatprep.subr.mxu0 0.0
  %2628 = vmatpush1.msra.mxu0 0.0
  %2629 = vmatprep.subr.mxu0 0.0
  %2630 = vmatpush1.msra.mxu0 0.0
  %2631 = vmatprep.subr.mxu0 0.0
  %2632 = vmatpush1.msra.mxu0 0.0
  %2633 = vmatprep.subr.mxu0 0.0
  %2634 = vmatpush1.msra.mxu0 0.0
  %2635 = vmatprep.subr.mxu0 0.0
  %2636 = vmatpush1.msra.mxu0 0.0
  %2637 = vmatprep.subr.mxu0 0.0
  %2638 = vmatpush1.msra.mxu0 0.0
  %2639 = vmatprep.subr.mxu0 0.0
  %2640 = vmatpush1.msra.mxu0 0.0
  %2641 = vmatprep.subr.mxu0 0.0
  %2642 = vmatpush1.msra.mxu0 0.0
  %2643 = vmatprep.subr.mxu0 0.0
  %2644 = vmatpush1.msra.mxu0 0.0
  %2645 = vmatprep.subr.mxu0 0.0
  %2646 = vmatpush1.msra.mxu0 0.0
  %2647 = vmatprep.subr.mxu0 0.0
  %2648 = vmatpush1.msra.mxu0 0.0
  %2649 = vmatprep.subr.mxu0 0.0
  %2650 = vmatpush1.msra.mxu0 0.0
  %2651 = vmatprep.subr.mxu0 0.0
  %2652 = vmatpush1.msra.mxu0 0.0
  %2653 = vmatprep.subr.mxu0 0.0
  %2654 = vmatpush1.msra.mxu0 0.0
  %2655 = vmatprep.subr.mxu0 0.0
  %2656 = vmatpush1.msra.mxu0 0.0
  %2657 = vmatprep.subr.mxu0 0.0
  %2658 = vmatpush1.msra.mxu0 0.0
  %2659 = vmatprep.subr.mxu0 0.0
  %2660 = vmatpush1.msra.mxu0 0.0
  %2661 = vmatprep.subr.mxu0 0.0
  %2662 = vmatpush1.msra.mxu0 0.0
  %2663 = vmatprep.subr.mxu0 0.0
  %2664 = vmatpush1.msra.mxu0 0.0
  %2665 = vmatprep.subr.mxu0 0.0
  %2666 = vmatpush1.msra.mxu0 0.0
  %2667 = vmatprep.subr.mxu0 0.0
  %2668 = vmatpush1.msra.mxu0 0.0
  %2669 = vmatprep.subr.mxu0 0.0
  %2670 = vmatpush1.msra.mxu0 0.0
  %2671 = vmatprep.subr.mxu0 0.0
  %2672 = vmatpush1.msra.mxu0 0.0
  %2673 = vmatprep.subr.mxu0 0.0
  %2674 = vmatpush1.msra.mxu0 0.0
  %2675 = vmatprep.subr.mxu0 0.0
  %2676 = vmatpush1.msra.mxu0 0.0
  %2677 = vmatprep.subr.mxu0 0.0
  %2678 = vmatpush1.msra.mxu0 0.0
  %2679 = vmatprep.subr.mxu0 0.0
  %2680 = vmatpush1.msra.mxu0 0.0
  %2681 = vmatprep.subr.mxu0 0.0
  %2682 = vmatpush1.msra.mxu0 0.0
  %2683 = vmatprep.subr.mxu0 0.0
  %2684 = vmatpush1.msra.mxu0 0.0
  %2685 = vmatprep.mubr.f32.mxu0 0.0
  %2686 = vmatmul.mubr.f32.gmra.mrb[0].mxu0 %v2619
  %v2687 = vpop.f32.mrb[0].mxu0
  %v2688 = vadd.f32 0.0, %v2687
  %v2689 = vpop.f32.mrb[0].mxu0
  %v2690 = vadd.f32 0.0, %v2689
  %2691 = vdwg.mxu0
  %v2692 = vadd.f32 %v2607, %v2688
  %v2693 = vadd.f32 %v2607, %v2690
  %2694 = vrot.lane.b32.xlu0 %v2601, 16
  %v2695 = vpop.permute.xlu0 %2694
  %2696 = vrot.lane.b32.xlu0 %v2602, 16
  %v2697 = vpop.permute.xlu0 %2696
  %v2698 = vsel %vm295, %v2695, %v2697
  %v2699 = vsel %vm295, %v2697, %v2695
  %v2700 = vmul.f32 %v2699, %v44
  %v2701 = vmul.f32 %v2698, %v48
  %v2702 = vld [vmem:[%s1079] sm:$0xff]
  %v2704 = vsel %vm214, %v2702, 0
  %2706 = vmatprep.subr.mxu0 %v2701
  %2707 = vmatpush1.msra.mxu0 %v2700
  %2708 = vmatprep.subr.mxu0 0.0
  %2709 = vmatpush1.msra.mxu0 0.0
  %2710 = vmatprep.subr.mxu0 0.0
  %2711 = vmatpush1.msra.mxu0 0.0
  %2712 = vmatprep.subr.mxu0 0.0
  %2713 = vmatpush1.msra.mxu0 0.0
  %2714 = vmatprep.subr.mxu0 0.0
  %2715 = vmatpush1.msra.mxu0 0.0
  %2716 = vmatprep.subr.mxu0 0.0
  %2717 = vmatpush1.msra.mxu0 0.0
  %2718 = vmatprep.subr.mxu0 0.0
  %2719 = vmatpush1.msra.mxu0 0.0
  %2720 = vmatprep.subr.mxu0 0.0
  %2721 = vmatpush1.msra.mxu0 0.0
  %2722 = vmatprep.subr.mxu0 0.0
  %2723 = vmatpush1.msra.mxu0 0.0
  %2724 = vmatprep.subr.mxu0 0.0
  %2725 = vmatpush1.msra.mxu0 0.0
  %2726 = vmatprep.subr.mxu0 0.0
  %2727 = vmatpush1.msra.mxu0 0.0
  %2728 = vmatprep.subr.mxu0 0.0
  %2729 = vmatpush1.msra.mxu0 0.0
  %2730 = vmatprep.subr.mxu0 0.0
  %2731 = vmatpush1.msra.mxu0 0.0
  %2732 = vmatprep.subr.mxu0 0.0
  %2733 = vmatpush1.msra.mxu0 0.0
  %2734 = vmatprep.subr.mxu0 0.0
  %2735 = vmatpush1.msra.mxu0 0.0
  %2736 = vmatprep.subr.mxu0 0.0
  %2737 = vmatpush1.msra.mxu0 0.0
  %2738 = vmatprep.subr.mxu0 0.0
  %2739 = vmatpush1.msra.mxu0 0.0
  %2740 = vmatprep.subr.mxu0 0.0
  %2741 = vmatpush1.msra.mxu0 0.0
  %2742 = vmatprep.subr.mxu0 0.0
  %2743 = vmatpush1.msra.mxu0 0.0
  %2744 = vmatprep.subr.mxu0 0.0
  %2745 = vmatpush1.msra.mxu0 0.0
  %2746 = vmatprep.subr.mxu0 0.0
  %2747 = vmatpush1.msra.mxu0 0.0
  %2748 = vmatprep.subr.mxu0 0.0
  %2749 = vmatpush1.msra.mxu0 0.0
  %2750 = vmatprep.subr.mxu0 0.0
  %2751 = vmatpush1.msra.mxu0 0.0
  %2752 = vmatprep.subr.mxu0 0.0
  %2753 = vmatpush1.msra.mxu0 0.0
  %2754 = vmatprep.subr.mxu0 0.0
  %2755 = vmatpush1.msra.mxu0 0.0
  %2756 = vmatprep.subr.mxu0 0.0
  %2757 = vmatpush1.msra.mxu0 0.0
  %2758 = vmatprep.subr.mxu0 0.0
  %2759 = vmatpush1.msra.mxu0 0.0
  %2760 = vmatprep.subr.mxu0 0.0
  %2761 = vmatpush1.msra.mxu0 0.0
  %2762 = vmatprep.subr.mxu0 0.0
  %2763 = vmatpush1.msra.mxu0 0.0
  %2764 = vmatprep.subr.mxu0 0.0
  %2765 = vmatpush1.msra.mxu0 0.0
  %2766 = vmatprep.subr.mxu0 0.0
  %2767 = vmatpush1.msra.mxu0 0.0
  %2768 = vmatprep.subr.mxu0 0.0
  %2769 = vmatpush1.msra.mxu0 0.0
  %2770 = vmatprep.mubr.f32.mxu0 0.0
  %2771 = vmatmul.mubr.f32.gmra.mrb[0].mxu0 %v2704
  %v2772 = vpop.f32.mrb[0].mxu0
  %v2773 = vadd.f32 0.0, %v2772
  %v2774 = vpop.f32.mrb[0].mxu0
  %v2775 = vadd.f32 0.0, %v2774
  %2776 = vdwg.mxu0
  %v2777 = vadd.f32 %v2692, %v2773
  %v2778 = vadd.f32 %v2693, %v2775
  %2779 = vrot.lane.b32.xlu0 %v2601, 15
  %v2780 = vpop.permute.xlu0 %2779
  %2781 = vrot.lane.b32.xlu0 %v2602, 15
  %v2782 = vpop.permute.xlu0 %2781
  %v2783 = vsel %vm382, %v2780, %v2782
  %v2784 = vsel %vm382, %v2782, %v2780
  %v2785 = vmul.f32 %v2784, %v52
  %v2786 = vmul.f32 %v2783, %v56
  %v2787 = vld [vmem:[%s1165] sm:$0xff]
  %v2789 = vsel %vm214, %v2787, 0
  %2791 = vmatprep.subr.mxu0 %v2786
  %2792 = vmatpush1.msra.mxu0 %v2785
  %2793 = vmatprep.subr.mxu0 0.0
  %2794 = vmatpush1.msra.mxu0 0.0
  %2795 = vmatprep.subr.mxu0 0.0
  %2796 = vmatpush1.msra.mxu0 0.0
  %2797 = vmatprep.subr.mxu0 0.0
  %2798 = vmatpush1.msra.mxu0 0.0
  %2799 = vmatprep.subr.mxu0 0.0
  %2800 = vmatpush1.msra.mxu0 0.0
  %2801 = vmatprep.subr.mxu0 0.0
  %2802 = vmatpush1.msra.mxu0 0.0
  %2803 = vmatprep.subr.mxu0 0.0
  %2804 = vmatpush1.msra.mxu0 0.0
  %2805 = vmatprep.subr.mxu0 0.0
  %2806 = vmatpush1.msra.mxu0 0.0
  %2807 = vmatprep.subr.mxu0 0.0
  %2808 = vmatpush1.msra.mxu0 0.0
  %2809 = vmatprep.subr.mxu0 0.0
  %2810 = vmatpush1.msra.mxu0 0.0
  %2811 = vmatprep.subr.mxu0 0.0
  %2812 = vmatpush1.msra.mxu0 0.0
  %2813 = vmatprep.subr.mxu0 0.0
  %2814 = vmatpush1.msra.mxu0 0.0
  %2815 = vmatprep.subr.mxu0 0.0
  %2816 = vmatpush1.msra.mxu0 0.0
  %2817 = vmatprep.subr.mxu0 0.0
  %2818 = vmatpush1.msra.mxu0 0.0
  %2819 = vmatprep.subr.mxu0 0.0
  %2820 = vmatpush1.msra.mxu0 0.0
  %2821 = vmatprep.subr.mxu0 0.0
  %2822 = vmatpush1.msra.mxu0 0.0
  %2823 = vmatprep.subr.mxu0 0.0
  %2824 = vmatpush1.msra.mxu0 0.0
  %2825 = vmatprep.subr.mxu0 0.0
  %2826 = vmatpush1.msra.mxu0 0.0
  %2827 = vmatprep.subr.mxu0 0.0
  %2828 = vmatpush1.msra.mxu0 0.0
  %2829 = vmatprep.subr.mxu0 0.0
  %2830 = vmatpush1.msra.mxu0 0.0
  %2831 = vmatprep.subr.mxu0 0.0
  %2832 = vmatpush1.msra.mxu0 0.0
  %2833 = vmatprep.subr.mxu0 0.0
  %2834 = vmatpush1.msra.mxu0 0.0
  %2835 = vmatprep.subr.mxu0 0.0
  %2836 = vmatpush1.msra.mxu0 0.0
  %2837 = vmatprep.subr.mxu0 0.0
  %2838 = vmatpush1.msra.mxu0 0.0
  %2839 = vmatprep.subr.mxu0 0.0
  %2840 = vmatpush1.msra.mxu0 0.0
  %2841 = vmatprep.subr.mxu0 0.0
  %2842 = vmatpush1.msra.mxu0 0.0
  %2843 = vmatprep.subr.mxu0 0.0
  %2844 = vmatpush1.msra.mxu0 0.0
  %2845 = vmatprep.subr.mxu0 0.0
  %2846 = vmatpush1.msra.mxu0 0.0
  %2847 = vmatprep.subr.mxu0 0.0
  %2848 = vmatpush1.msra.mxu0 0.0
  %2849 = vmatprep.subr.mxu0 0.0
  %2850 = vmatpush1.msra.mxu0 0.0
  %2851 = vmatprep.subr.mxu0 0.0
  %2852 = vmatpush1.msra.mxu0 0.0
  %2853 = vmatprep.subr.mxu0 0.0
  %2854 = vmatpush1.msra.mxu0 0.0
  %2855 = vmatprep.mubr.f32.mxu0 0.0
  %2856 = vmatmul.mubr.f32.gmra.mrb[0].mxu0 %v2789
  %v2857 = vpop.f32.mrb[0].mxu0
  %v2858 = vadd.f32 0.0, %v2857
  %v2859 = vpop.f32.mrb[0].mxu0
  %v2860 = vadd.f32 0.0, %v2859
  %2861 = vdwg.mxu0
  %v2862 = vadd.f32 %v2777, %v2858
  %v2863 = vadd.f32 %v2778, %v2860
  %2864 = vrot.lane.b32.xlu0 %v2601, 1
  %v2865 = vpop.permute.xlu0 %2864
  %2866 = vrot.lane.b32.xlu0 %v2602, 1
  %v2867 = vpop.permute.xlu0 %2866
  %v2868 = vsel %vm469, %v2865, %v2867
  %v2869 = vsel %vm469, %v2867, %v2865
  %v2870 = vmul.f32 %v2869, %v60
  %v2871 = vmul.f32 %v2868, %v64
  %v2872 = vld [vmem:[%s1251] sm:$0xff]
  %v2874 = vsel %vm214, %v2872, 0
  %2876 = vmatprep.subr.mxu0 %v2871
  %2877 = vmatpush1.msra.mxu0 %v2870
  %2878 = vmatprep.subr.mxu0 0.0
  %2879 = vmatpush1.msra.mxu0 0.0
  %2880 = vmatprep.subr.mxu0 0.0
  %2881 = vmatpush1.msra.mxu0 0.0
  %2882 = vmatprep.subr.mxu0 0.0
  %2883 = vmatpush1.msra.mxu0 0.0
  %2884 = vmatprep.subr.mxu0 0.0
  %2885 = vmatpush1.msra.mxu0 0.0
  %2886 = vmatprep.subr.mxu0 0.0
  %2887 = vmatpush1.msra.mxu0 0.0
  %2888 = vmatprep.subr.mxu0 0.0
  %2889 = vmatpush1.msra.mxu0 0.0
  %2890 = vmatprep.subr.mxu0 0.0
  %2891 = vmatpush1.msra.mxu0 0.0
  %2892 = vmatprep.subr.mxu0 0.0
  %2893 = vmatpush1.msra.mxu0 0.0
  %2894 = vmatprep.subr.mxu0 0.0
  %2895 = vmatpush1.msra.mxu0 0.0
  %2896 = vmatprep.subr.mxu0 0.0
  %2897 = vmatpush1.msra.mxu0 0.0
  %2898 = vmatprep.subr.mxu0 0.0
  %2899 = vmatpush1.msra.mxu0 0.0
  %2900 = vmatprep.subr.mxu0 0.0
  %2901 = vmatpush1.msra.mxu0 0.0
  %2902 = vmatprep.subr.mxu0 0.0
  %2903 = vmatpush1.msra.mxu0 0.0
  %2904 = vmatprep.subr.mxu0 0.0
  %2905 = vmatpush1.msra.mxu0 0.0
  %2906 = vmatprep.subr.mxu0 0.0
  %2907 = vmatpush1.msra.mxu0 0.0
  %2908 = vmatprep.subr.mxu0 0.0
  %2909 = vmatpush1.msra.mxu0 0.0
  %2910 = vmatprep.subr.mxu0 0.0
  %2911 = vmatpush1.msra.mxu0 0.0
  %2912 = vmatprep.subr.mxu0 0.0
  %2913 = vmatpush1.msra.mxu0 0.0
  %2914 = vmatprep.subr.mxu0 0.0
  %2915 = vmatpush1.msra.mxu0 0.0
  %2916 = vmatprep.subr.mxu0 0.0
  %2917 = vmatpush1.msra.mxu0 0.0
  %2918 = vmatprep.subr.mxu0 0.0
  %2919 = vmatpush1.msra.mxu0 0.0
  %2920 = vmatprep.subr.mxu0 0.0
  %2921 = vmatpush1.msra.mxu0 0.0
  %2922 = vmatprep.subr.mxu0 0.0
  %2923 = vmatpush1.msra.mxu0 0.0
  %2924 = vmatprep.subr.mxu0 0.0
  %2925 = vmatpush1.msra.mxu0 0.0
  %2926 = vmatprep.subr.mxu0 0.0
  %2927 = vmatpush1.msra.mxu0 0.0
  %2928 = vmatprep.subr.mxu0 0.0
  %2929 = vmatpush1.msra.mxu0 0.0
  %2930 = vmatprep.subr.mxu0 0.0
  %2931 = vmatpush1.msra.mxu0 0.0
  %2932 = vmatprep.subr.mxu0 0.0
  %2933 = vmatpush1.msra.mxu0 0.0
  %2934 = vmatprep.subr.mxu0 0.0
  %2935 = vmatpush1.msra.mxu0 0.0
  %2936 = vmatprep.subr.mxu0 0.0
  %2937 = vmatpush1.msra.mxu0 0.0
  %2938 = vmatprep.subr.mxu0 0.0
  %2939 = vmatpush1.msra.mxu0 0.0
  %2940 = vmatprep.mubr.f32.mxu0 0.0
  %2941 = vmatmul.mubr.f32.gmra.mrb[0].mxu0 %v2874
  %v2942 = vpop.f32.mrb[0].mxu0
  %v2943 = vadd.f32 0.0, %v2942
  %v2944 = vpop.f32.mrb[0].mxu0
  %v2945 = vadd.f32 0.0, %v2944
  %2946 = vdwg.mxu0
  %v2947 = vadd.f32 %v2862, %v2943
  %v2948 = vadd.f32 %v2863, %v2945
  %v2949 = vld [vmem:[%s1329] sm:$0xff]
  %v2951 = vsel %vm214, %v2949, 0
  %2953 = vmatprep.subr.mxu0 %v2602
  %2954 = vmatpush1.msra.mxu0 %v2601
  %2955 = vmatprep.subr.mxu0 0.0
  %2956 = vmatpush1.msra.mxu0 0.0
  %2957 = vmatprep.subr.mxu0 0.0
  %2958 = vmatpush1.msra.mxu0 0.0
  %2959 = vmatprep.subr.mxu0 0.0
  %2960 = vmatpush1.msra.mxu0 0.0
  %2961 = vmatprep.subr.mxu0 0.0
  %2962 = vmatpush1.msra.mxu0 0.0
  %2963 = vmatprep.subr.mxu0 0.0
  %2964 = vmatpush1.msra.mxu0 0.0
  %2965 = vmatprep.subr.mxu0 0.0
  %2966 = vmatpush1.msra.mxu0 0.0
  %2967 = vmatprep.subr.mxu0 0.0
  %2968 = vmatpush1.msra.mxu0 0.0
  %2969 = vmatprep.subr.mxu0 0.0
  %2970 = vmatpush1.msra.mxu0 0.0
  %2971 = vmatprep.subr.mxu0 0.0
  %2972 = vmatpush1.msra.mxu0 0.0
  %2973 = vmatprep.subr.mxu0 0.0
  %2974 = vmatpush1.msra.mxu0 0.0
  %2975 = vmatprep.subr.mxu0 0.0
  %2976 = vmatpush1.msra.mxu0 0.0
  %2977 = vmatprep.subr.mxu0 0.0
  %2978 = vmatpush1.msra.mxu0 0.0
  %2979 = vmatprep.subr.mxu0 0.0
  %2980 = vmatpush1.msra.mxu0 0.0
  %2981 = vmatprep.subr.mxu0 0.0
  %2982 = vmatpush1.msra.mxu0 0.0
  %2983 = vmatprep.subr.mxu0 0.0
  %2984 = vmatpush1.msra.mxu0 0.0
  %2985 = vmatprep.subr.mxu0 0.0
  %2986 = vmatpush1.msra.mxu0 0.0
  %2987 = vmatprep.subr.mxu0 0.0
  %2988 = vmatpush1.msra.mxu0 0.0
  %2989 = vmatprep.subr.mxu0 0.0
  %2990 = vmatpush1.msra.mxu0 0.0
  %2991 = vmatprep.subr.mxu0 0.0
  %2992 = vmatpush1.msra.mxu0 0.0
  %2993 = vmatprep.subr.mxu0 0.0
  %2994 = vmatpush1.msra.mxu0 0.0
  %2995 = vmatprep.subr.mxu0 0.0
  %2996 = vmatpush1.msra.mxu0 0.0
  %2997 = vmatprep.subr.mxu0 0.0
  %2998 = vmatpush1.msra.mxu0 0.0
  %2999 = vmatprep.subr.mxu0 0.0
  %3000 = vmatpush1.msra.mxu0 0.0
  %3001 = vmatprep.subr.mxu0 0.0
  %3002 = vmatpush1.msra.mxu0 0.0
  %3003 = vmatprep.subr.mxu0 0.0
  %3004 = vmatpush1.msra.mxu0 0.0
  %3005 = vmatprep.subr.mxu0 0.0
  %3006 = vmatpush1.msra.mxu0 0.0
  %3007 = vmatprep.subr.mxu0 0.0
  %3008 = vmatpush1.msra.mxu0 0.0
  %3009 = vmatprep.subr.mxu0 0.0
  %3010 = vmatpush1.msra.mxu0 0.0
  %3011 = vmatprep.subr.mxu0 0.0
  %3012 = vmatpush1.msra.mxu0 0.0
  %3013 = vmatprep.subr.mxu0 0.0
  %3014 = vmatpush1.msra.mxu0 0.0
  %3015 = vmatprep.subr.mxu0 0.0
  %3016 = vmatpush1.msra.mxu0 0.0
  %3017 = vmatprep.mubr.f32.mxu0 0.0
  %3018 = vmatmul.mubr.f32.gmra.mrb[0].mxu0 %v2951
  %v3019 = vpop.f32.mrb[0].mxu0
  %v3020 = vadd.f32 0.0, %v3019
  %v3021 = vpop.f32.mrb[0].mxu0
  %v3022 = vadd.f32 0.0, %v3021
  %3023 = vdwg.mxu0
  %v3024 = vadd.f32 %v2947, %v3020
  %v3025 = vadd.f32 %v2948, %v3022
  %3026 = vrot.lane.b32.xlu0 %v2601, 127
  %v3027 = vpop.permute.xlu0 %3026
  %3028 = vrot.lane.b32.xlu0 %v2602, 127
  %v3029 = vpop.permute.xlu0 %3028
  %v3030 = vsel %vm634, %v3027, %v3029
  %v3031 = vsel %vm634, %v3029, %v3027
  %v3032 = vmul.f32 %v3030, %v68
  %v3033 = vmul.f32 %v3031, %v72
  %v3034 = vld [vmem:[%s1415] sm:$0xff]
  %v3036 = vsel %vm214, %v3034, 0
  %3038 = vmatprep.subr.mxu0 %v3033
  %3039 = vmatpush1.msra.mxu0 %v3032
  %3040 = vmatprep.subr.mxu0 0.0
  %3041 = vmatpush1.msra.mxu0 0.0
  %3042 = vmatprep.subr.mxu0 0.0
  %3043 = vmatpush1.msra.mxu0 0.0
  %3044 = vmatprep.subr.mxu0 0.0
  %3045 = vmatpush1.msra.mxu0 0.0
  %3046 = vmatprep.subr.mxu0 0.0
  %3047 = vmatpush1.msra.mxu0 0.0
  %3048 = vmatprep.subr.mxu0 0.0
  %3049 = vmatpush1.msra.mxu0 0.0
  %3050 = vmatprep.subr.mxu0 0.0
  %3051 = vmatpush1.msra.mxu0 0.0
  %3052 = vmatprep.subr.mxu0 0.0
  %3053 = vmatpush1.msra.mxu0 0.0
  %3054 = vmatprep.subr.mxu0 0.0
  %3055 = vmatpush1.msra.mxu0 0.0
  %3056 = vmatprep.subr.mxu0 0.0
  %3057 = vmatpush1.msra.mxu0 0.0
  %3058 = vmatprep.subr.mxu0 0.0
  %3059 = vmatpush1.msra.mxu0 0.0
  %3060 = vmatprep.subr.mxu0 0.0
  %3061 = vmatpush1.msra.mxu0 0.0
  %3062 = vmatprep.subr.mxu0 0.0
  %3063 = vmatpush1.msra.mxu0 0.0
  %3064 = vmatprep.subr.mxu0 0.0
  %3065 = vmatpush1.msra.mxu0 0.0
  %3066 = vmatprep.subr.mxu0 0.0
  %3067 = vmatpush1.msra.mxu0 0.0
  %3068 = vmatprep.subr.mxu0 0.0
  %3069 = vmatpush1.msra.mxu0 0.0
  %3070 = vmatprep.subr.mxu0 0.0
  %3071 = vmatpush1.msra.mxu0 0.0
  %3072 = vmatprep.subr.mxu0 0.0
  %3073 = vmatpush1.msra.mxu0 0.0
  %3074 = vmatprep.subr.mxu0 0.0
  %3075 = vmatpush1.msra.mxu0 0.0
  %3076 = vmatprep.subr.mxu0 0.0
  %3077 = vmatpush1.msra.mxu0 0.0
  %3078 = vmatprep.subr.mxu0 0.0
  %3079 = vmatpush1.msra.mxu0 0.0
  %3080 = vmatprep.subr.mxu0 0.0
  %3081 = vmatpush1.msra.mxu0 0.0
  %3082 = vmatprep.subr.mxu0 0.0
  %3083 = vmatpush1.msra.mxu0 0.0
  %3084 = vmatprep.subr.mxu0 0.0
  %3085 = vmatpush1.msra.mxu0 0.0
  %3086 = vmatprep.subr.mxu0 0.0
  %3087 = vmatpush1.msra.mxu0 0.0
  %3088 = vmatprep.subr.mxu0 0.0
  %3089 = vmatpush1.msra.mxu0 0.0
  %3090 = vmatprep.subr.mxu0 0.0
  %3091 = vmatpush1.msra.mxu0 0.0
  %3092 = vmatprep.subr.mxu0 0.0
  %3093 = vmatpush1.msra.mxu0 0.0
  %3094 = vmatprep.subr.mxu0 0.0
  %3095 = vmatpush1.msra.mxu0 0.0
  %3096 = vmatprep.subr.mxu0 0.0
  %3097 = vmatpush1.msra.mxu0 0.0
  %3098 = vmatprep.subr.mxu0 0.0
  %3099 = vmatpush1.msra.mxu0 0.0
  %3100 = vmatprep.subr.mxu0 0.0
  %3101 = vmatpush1.msra.mxu0 0.0
  %3102 = vmatprep.mubr.f32.mxu0 0.0
  %3103 = vmatmul.mubr.f32.gmra.mrb[0].mxu0 %v3036
  %v3104 = vpop.f32.mrb[0].mxu0
  %v3105 = vadd.f32 0.0, %v3104
  %v3106 = vpop.f32.mrb[0].mxu0
  %v3107 = vadd.f32 0.0, %v3106
  %3108 = vdwg.mxu0
  %v3109 = vadd.f32 %v3024, %v3105
  %v3110 = vadd.f32 %v3025, %v3107
  %3111 = vrot.lane.b32.xlu0 %v2601, 113
  %v3112 = vpop.permute.xlu0 %3111
  %3113 = vrot.lane.b32.xlu0 %v2602, 113
  %v3114 = vpop.permute.xlu0 %3113
  %v3115 = vsel %vm721, %v3112, %v3114
  %v3116 = vsel %vm721, %v3114, %v3112
  %v3117 = vmul.f32 %v3115, %v76
  %v3118 = vmul.f32 %v3116, %v80
  %v3119 = vld [vmem:[%s1501] sm:$0xff]
  %v3121 = vsel %vm214, %v3119, 0
  %3123 = vmatprep.subr.mxu0 %v3118
  %3124 = vmatpush1.msra.mxu0 %v3117
  %3125 = vmatprep.subr.mxu0 0.0
  %3126 = vmatpush1.msra.mxu0 0.0
  %3127 = vmatprep.subr.mxu0 0.0
  %3128 = vmatpush1.msra.mxu0 0.0
  %3129 = vmatprep.subr.mxu0 0.0
  %3130 = vmatpush1.msra.mxu0 0.0
  %3131 = vmatprep.subr.mxu0 0.0
  %3132 = vmatpush1.msra.mxu0 0.0
  %3133 = vmatprep.subr.mxu0 0.0
  %3134 = vmatpush1.msra.mxu0 0.0
  %3135 = vmatprep.subr.mxu0 0.0
  %3136 = vmatpush1.msra.mxu0 0.0
  %3137 = vmatprep.subr.mxu0 0.0
  %3138 = vmatpush1.msra.mxu0 0.0
  %3139 = vmatprep.subr.mxu0 0.0
  %3140 = vmatpush1.msra.mxu0 0.0
  %3141 = vmatprep.subr.mxu0 0.0
  %3142 = vmatpush1.msra.mxu0 0.0
  %3143 = vmatprep.subr.mxu0 0.0
  %3144 = vmatpush1.msra.mxu0 0.0
  %3145 = vmatprep.subr.mxu0 0.0
  %3146 = vmatpush1.msra.mxu0 0.0
  %3147 = vmatprep.subr.mxu0 0.0
  %3148 = vmatpush1.msra.mxu0 0.0
  %3149 = vmatprep.subr.mxu0 0.0
  %3150 = vmatpush1.msra.mxu0 0.0
  %3151 = vmatprep.subr.mxu0 0.0
  %3152 = vmatpush1.msra.mxu0 0.0
  %3153 = vmatprep.subr.mxu0 0.0
  %3154 = vmatpush1.msra.mxu0 0.0
  %3155 = vmatprep.subr.mxu0 0.0
  %3156 = vmatpush1.msra.mxu0 0.0
  %3157 = vmatprep.subr.mxu0 0.0
  %3158 = vmatpush1.msra.mxu0 0.0
  %3159 = vmatprep.subr.mxu0 0.0
  %3160 = vmatpush1.msra.mxu0 0.0
  %3161 = vmatprep.subr.mxu0 0.0
  %3162 = vmatpush1.msra.mxu0 0.0
  %3163 = vmatprep.subr.mxu0 0.0
  %3164 = vmatpush1.msra.mxu0 0.0
  %3165 = vmatprep.subr.mxu0 0.0
  %3166 = vmatpush1.msra.mxu0 0.0
  %3167 = vmatprep.subr.mxu0 0.0
  %3168 = vmatpush1.msra.mxu0 0.0
  %3169 = vmatprep.subr.mxu0 0.0
  %3170 = vmatpush1.msra.mxu0 0.0
  %3171 = vmatprep.subr.mxu0 0.0
  %3172 = vmatpush1.msra.mxu0 0.0
  %3173 = vmatprep.subr.mxu0 0.0
  %3174 = vmatpush1.msra.mxu0 0.0
  %3175 = vmatprep.subr.mxu0 0.0
  %3176 = vmatpush1.msra.mxu0 0.0
  %3177 = vmatprep.subr.mxu0 0.0
  %3178 = vmatpush1.msra.mxu0 0.0
  %3179 = vmatprep.subr.mxu0 0.0
  %3180 = vmatpush1.msra.mxu0 0.0
  %3181 = vmatprep.subr.mxu0 0.0
  %3182 = vmatpush1.msra.mxu0 0.0
  %3183 = vmatprep.subr.mxu0 0.0
  %3184 = vmatpush1.msra.mxu0 0.0
  %3185 = vmatprep.subr.mxu0 0.0
  %3186 = vmatpush1.msra.mxu0 0.0
  %3187 = vmatprep.mubr.f32.mxu0 0.0
  %3188 = vmatmul.mubr.f32.gmra.mrb[0].mxu0 %v3121
  %v3189 = vpop.f32.mrb[0].mxu0
  %v3190 = vadd.f32 0.0, %v3189
  %v3191 = vpop.f32.mrb[0].mxu0
  %v3192 = vadd.f32 0.0, %v3191
  %3193 = vdwg.mxu0
  %v3194 = vadd.f32 %v3109, %v3190
  %v3195 = vadd.f32 %v3110, %v3192
  %3196 = vrot.lane.b32.xlu0 %v2601, 112
  %v3197 = vpop.permute.xlu0 %3196
  %3198 = vrot.lane.b32.xlu0 %v2602, 112
  %v3199 = vpop.permute.xlu0 %3198
  %v3200 = vsel %vm808, %v3197, %v3199
  %v3201 = vsel %vm808, %v3199, %v3197
  %v3202 = vmul.f32 %v3200, %v84
  %v3203 = vmul.f32 %v3201, %v88
  %v3204 = vld [vmem:[%s1587] sm:$0xff]
  %v3206 = vsel %vm214, %v3204, 0
  %3208 = vmatprep.subr.mxu0 %v3203
  %3209 = vmatpush1.msra.mxu0 %v3202
  %3210 = vmatprep.subr.mxu0 0.0
  %3211 = vmatpush1.msra.mxu0 0.0
  %3212 = vmatprep.subr.mxu0 0.0
  %3213 = vmatpush1.msra.mxu0 0.0
  %3214 = vmatprep.subr.mxu0 0.0
  %3215 = vmatpush1.msra.mxu0 0.0
  %3216 = vmatprep.subr.mxu0 0.0
  %3217 = vmatpush1.msra.mxu0 0.0
  %3218 = vmatprep.subr.mxu0 0.0
  %3219 = vmatpush1.msra.mxu0 0.0
  %3220 = vmatprep.subr.mxu0 0.0
  %3221 = vmatpush1.msra.mxu0 0.0
  %3222 = vmatprep.subr.mxu0 0.0
  %3223 = vmatpush1.msra.mxu0 0.0
  %3224 = vmatprep.subr.mxu0 0.0
  %3225 = vmatpush1.msra.mxu0 0.0
  %3226 = vmatprep.subr.mxu0 0.0
  %3227 = vmatpush1.msra.mxu0 0.0
  %3228 = vmatprep.subr.mxu0 0.0
  %3229 = vmatpush1.msra.mxu0 0.0
  %3230 = vmatprep.subr.mxu0 0.0
  %3231 = vmatpush1.msra.mxu0 0.0
  %3232 = vmatprep.subr.mxu0 0.0
  %3233 = vmatpush1.msra.mxu0 0.0
  %3234 = vmatprep.subr.mxu0 0.0
  %3235 = vmatpush1.msra.mxu0 0.0
  %3236 = vmatprep.subr.mxu0 0.0
  %3237 = vmatpush1.msra.mxu0 0.0
  %3238 = vmatprep.subr.mxu0 0.0
  %3239 = vmatpush1.msra.mxu0 0.0
  %3240 = vmatprep.subr.mxu0 0.0
  %3241 = vmatpush1.msra.mxu0 0.0
  %3242 = vmatprep.subr.mxu0 0.0
  %3243 = vmatpush1.msra.mxu0 0.0
  %3244 = vmatprep.subr.mxu0 0.0
  %3245 = vmatpush1.msra.mxu0 0.0
  %3246 = vmatprep.subr.mxu0 0.0
  %3247 = vmatpush1.msra.mxu0 0.0
  %3248 = vmatprep.subr.mxu0 0.0
  %3249 = vmatpush1.msra.mxu0 0.0
  %3250 = vmatprep.subr.mxu0 0.0
  %3251 = vmatpush1.msra.mxu0 0.0
  %3252 = vmatprep.subr.mxu0 0.0
  %3253 = vmatpush1.msra.mxu0 0.0
  %3254 = vmatprep.subr.mxu0 0.0
  %3255 = vmatpush1.msra.mxu0 0.0
  %3256 = vmatprep.subr.mxu0 0.0
  %3257 = vmatpush1.msra.mxu0 0.0
  %3258 = vmatprep.subr.mxu0 0.0
  %3259 = vmatpush1.msra.mxu0 0.0
  %3260 = vmatprep.subr.mxu0 0.0
  %3261 = vmatpush1.msra.mxu0 0.0
  %3262 = vmatprep.subr.mxu0 0.0
  %3263 = vmatpush1.msra.mxu0 0.0
  %3264 = vmatprep.subr.mxu0 0.0
  %3265 = vmatpush1.msra.mxu0 0.0
  %3266 = vmatprep.subr.mxu0 0.0
  %3267 = vmatpush1.msra.mxu0 0.0
  %3268 = vmatprep.subr.mxu0 0.0
  %3269 = vmatpush1.msra.mxu0 0.0
  %3270 = vmatprep.subr.mxu0 0.0
  %3271 = vmatpush1.msra.mxu0 0.0
  %3272 = vmatprep.mubr.f32.mxu0 0.0
  %3273 = vmatmul.mubr.f32.gmra.mrb[0].mxu0 %v3206
  %v3274 = vpop.f32.mrb[0].mxu0
  %v3275 = vadd.f32 0.0, %v3274
  %v3276 = vpop.f32.mrb[0].mxu0
  %v3277 = vadd.f32 0.0, %v3276
  %3278 = vdwg.mxu0
  %v3279 = vadd.f32 %v3194, %v3275
  %v3280 = vadd.f32 %v3195, %v3277
  %3281 = vrot.lane.b32.xlu0 %v2601, 111
  %v3282 = vpop.permute.xlu0 %3281
  %3283 = vrot.lane.b32.xlu0 %v2602, 111
  %v3284 = vpop.permute.xlu0 %3283
  %v3285 = vsel %vm895, %v3282, %v3284
  %v3286 = vsel %vm895, %v3284, %v3282
  %v3287 = vmul.f32 %v3285, %v92
  %v3288 = vmul.f32 %v3286, %v96
  %v3289 = vld [vmem:[%s1673] sm:$0xff]
  %v3291 = vsel %vm214, %v3289, 0
  %3293 = vmatprep.subr.mxu0 %v3288
  %3294 = vmatpush1.msra.mxu0 %v3287
  %3295 = vmatprep.subr.mxu0 0.0
  %3296 = vmatpush1.msra.mxu0 0.0
  %3297 = vmatprep.subr.mxu0 0.0
  %3298 = vmatpush1.msra.mxu0 0.0
  %3299 = vmatprep.subr.mxu0 0.0
  %3300 = vmatpush1.msra.mxu0 0.0
  %3301 = vmatprep.subr.mxu0 0.0
  %3302 = vmatpush1.msra.mxu0 0.0
  %3303 = vmatprep.subr.mxu0 0.0
  %3304 = vmatpush1.msra.mxu0 0.0
  %3305 = vmatprep.subr.mxu0 0.0
  %3306 = vmatpush1.msra.mxu0 0.0
  %3307 = vmatprep.subr.mxu0 0.0
  %3308 = vmatpush1.msra.mxu0 0.0
  %3309 = vmatprep.subr.mxu0 0.0
  %3310 = vmatpush1.msra.mxu0 0.0
  %3311 = vmatprep.subr.mxu0 0.0
  %3312 = vmatpush1.msra.mxu0 0.0
  %3313 = vmatprep.subr.mxu0 0.0
  %3314 = vmatpush1.msra.mxu0 0.0
  %3315 = vmatprep.subr.mxu0 0.0
  %3316 = vmatpush1.msra.mxu0 0.0
  %3317 = vmatprep.subr.mxu0 0.0
  %3318 = vmatpush1.msra.mxu0 0.0
  %3319 = vmatprep.subr.mxu0 0.0
  %3320 = vmatpush1.msra.mxu0 0.0
  %3321 = vmatprep.subr.mxu0 0.0
  %3322 = vmatpush1.msra.mxu0 0.0
  %3323 = vmatprep.subr.mxu0 0.0
  %3324 = vmatpush1.msra.mxu0 0.0
  %3325 = vmatprep.subr.mxu0 0.0
  %3326 = vmatpush1.msra.mxu0 0.0
  %3327 = vmatprep.subr.mxu0 0.0
  %3328 = vmatpush1.msra.mxu0 0.0
  %3329 = vmatprep.subr.mxu0 0.0
  %3330 = vmatpush1.msra.mxu0 0.0
  %3331 = vmatprep.subr.mxu0 0.0
  %3332 = vmatpush1.msra.mxu0 0.0
  %3333 = vmatprep.subr.mxu0 0.0
  %3334 = vmatpush1.msra.mxu0 0.0
  %3335 = vmatprep.subr.mxu0 0.0
  %3336 = vmatpush1.msra.mxu0 0.0
  %3337 = vmatprep.subr.mxu0 0.0
  %3338 = vmatpush1.msra.mxu0 0.0
  %3339 = vmatprep.subr.mxu0 0.0
  %3340 = vmatpush1.msra.mxu0 0.0
  %3341 = vmatprep.subr.mxu0 0.0
  %3342 = vmatpush1.msra.mxu0 0.0
  %3343 = vmatprep.subr.mxu0 0.0
  %3344 = vmatpush1.msra.mxu0 0.0
  %3345 = vmatprep.subr.mxu0 0.0
  %3346 = vmatpush1.msra.mxu0 0.0
  %3347 = vmatprep.subr.mxu0 0.0
  %3348 = vmatpush1.msra.mxu0 0.0
  %3349 = vmatprep.subr.mxu0 0.0
  %3350 = vmatpush1.msra.mxu0 0.0
  %3351 = vmatprep.subr.mxu0 0.0
  %3352 = vmatpush1.msra.mxu0 0.0
  %3353 = vmatprep.subr.mxu0 0.0
  %3354 = vmatpush1.msra.mxu0 0.0
  %3355 = vmatprep.subr.mxu0 0.0
  %3356 = vmatpush1.msra.mxu0 0.0
  %3357 = vmatprep.mubr.f32.mxu0 0.0
  %3358 = vmatmul.mubr.f32.gmra.mrb[0].mxu0 %v3291
  %v3359 = vpop.f32.mrb[0].mxu0
  %v3360 = vadd.f32 0.0, %v3359
  %v3361 = vpop.f32.mrb[0].mxu0
  %v3362 = vadd.f32 0.0, %v3361
  %3363 = vdwg.mxu0
  %v3364 = vadd.f32 %v3279, %v3360
  %v3365 = vadd.f32 %v3280, %v3362
  %v3366 = vmax.f32 %v3364, 0.0
  %v3367 = vmax.f32 %v3365, 0.0
  %s3368 = scalar_lea.vmem %s8, 16
  %3369 = vst [vmem:[%s3368] sm:$0xff] %v3366
  %3370 = vst [vmem:[%s3368 + $0x8] sm:$0xff] %v3367
  // Predicated region
  $region34: #{up_forward.1} parent=0 // pred_check
    _
  $region35: #{up_forward.1} parent=0 // pred_check_branch
    %3372 = sbr.rel (0) target = $region37
  $region36: #{up_forward.1} parent=0 // pred_region
    _
  $region37: #{up_forward.1} parent=0 // pred_fallthru
    _
  // Predicated region
  $region38: #{up_forward.1} parent=0 // pred_check
    _
  $region39: #{up_forward.1} parent=0 // pred_check_branch
    %3374 = sbr.rel (0) target = $region41
  $region40: #{up_forward.1} parent=0 // pred_region
    _
  $region41: #{up_forward.1} parent=0 // pred_fallthru
    _

</llo_original>
